<compile_context>
chip_gen: v5e
topology: v5e:2x2
jax: 0.10.0
libtpu: 0.0.40
codegen_flags: <defaults>
</compile_context>

<pallas_src>
import functools

import jax
import jax.numpy as jnp
from jax import lax
from jax.experimental import pallas as pl
from jax.experimental.pallas import tpu as pltpu


def _round_up(x, m):
    return (x + m - 1) // m * m


_VMEM = pl.BlockSpec(memory_space=pltpu.MemorySpace.VMEM)


# ----------------------------------------------------------------------------
# Fused bidirectional LSTM layer kernel (both directions in one body)
# ----------------------------------------------------------------------------
def _bidir_lstm_layer_kernel(*refs, hid_p, n_inputs):
    """Refs (in order):
      inputs : x_0..x_{n-1}      (T, Bp, D_i) bf16   layer input stream(s)
               len_ref           (Bp, Hp)     int32  per-row valid length
               wih_0..wih_{n-1}  (2, D_i, 4Hp) bf16  dir-stacked input weights
               whh_ref           (2, Hp, 4Hp) bf16   dir-stacked hidden weights
               b_ref             (2, 1, 4Hp)  f32    b_ih + b_hh (i,f,g,o)
               h0_ref, c0_ref    (2, Bp, Hp)  f32
      outputs: outf_ref, outb_ref (T, Bp, Hp) bf16
      scratch: xzf_ref, xzb_ref   (T, Bp, 4Hp) bf16  hoisted projections
    """
    n_in = n_inputs
    x_refs = refs[:n_in]
    len_ref = refs[n_in]
    wih_refs = refs[n_in + 1: 2 * n_in + 1]
    whh_ref, b_ref, h0_ref, c0_ref = refs[2 * n_in + 1: 2 * n_in + 5]
    outf_ref, outb_ref = refs[2 * n_in + 5: 2 * n_in + 7]
    xzf_ref, xzb_ref = refs[2 * n_in + 7: 2 * n_in + 9]

    T, Bp, _ = x_refs[0].shape
    Hp = hid_p

    # --- Hoisted input projection: big MXU matmuls for all timesteps, once. ---
    acc_f = None
    acc_b = None
    for xr, wr in zip(x_refs, wih_refs):
        x2d = xr[...].reshape(T * Bp, -1)                       # bf16
        pf = jnp.dot(x2d, wr[0], preferred_element_type=jnp.float32)
        pb = jnp.dot(x2d, wr[1], preferred_element_type=jnp.float32)
        acc_f = pf if acc_f is None else acc_f + pf
        acc_b = pb if acc_b is None else acc_b + pb
    xzf_ref[...] = acc_f.reshape(T, Bp, 4 * Hp).astype(xzf_ref.dtype)
    xzb_ref[...] = acc_b.reshape(T, Bp, 4 * Hp).astype(xzb_ref.dtype)

    # --- Residents for the recurrence. ---
    lengths = len_ref[...]                 # (Bp, Hp) int32, loaded once
    whh_f = whh_ref[0]                     # (Hp, 4Hp) bf16
    whh_b = whh_ref[1]
    b_f = b_ref[0]                         # (1, 4Hp) f32
    b_b = b_ref[1]

    def cell(z, c):
        # 128-lane aligned gate slices (gate order i, f, g, o).
        i_g = jax.nn.sigmoid(z[:, 0 * Hp:1 * Hp])
        f_g = jax.nn.sigmoid(z[:, 1 * Hp:2 * Hp])
        g_g = jnp.tanh(z[:, 2 * Hp:3 * Hp])
        o_g = jax.nn.sigmoid(z[:, 3 * Hp:4 * Hp])
        c_new = f_g * c + i_g * g_g
        h_new = o_g * jnp.tanh(c_new)
        return h_new, c_new

    # --- Serial recurrence: both directions interleaved per step so the two
    #     independent (Bp,Hp)@(Hp,4Hp) MXU pushes pipeline. ---
    def step(s, carry):
        h_f, c_f, h_b, c_b = carry          # f32 (Bp, Hp)
        t_f = s                              # affine forward index
        t_b = T - 1 - s                      # affine backward index

        z_f = (xzf_ref[t_f].astype(jnp.float32) + b_f +
               jnp.dot(h_f.astype(whh_f.dtype), whh_f,
                       preferred_element_type=jnp.float32))
        z_b = (xzb_ref[t_b].astype(jnp.float32) + b_b +
               jnp.dot(h_b.astype(whh_b.dtype), whh_b,
                       preferred_element_type=jnp.float32))

        hf_new, cf_new = cell(z_f, c_f)
        hb_new, cb_new = cell(z_b, c_b)

        valid_f = lengths > t_f              # (Bp, Hp) bool
        valid_b = lengths > t_b

        outf_ref[t_f] = jnp.where(valid_f, hf_new, 0.0).astype(outf_ref.dtype)
        outb_ref[t_b] = jnp.where(valid_b, hb_new, 0.0).astype(outb_ref.dtype)

        # Freeze state past each row's length (pack_padded_sequence semantics).
        h_f = jnp.where(valid_f, hf_new, h_f)
        c_f = jnp.where(valid_f, cf_new, c_f)
        h_b = jnp.where(valid_b, hb_new, h_b)
        c_b = jnp.where(valid_b, cb_new, c_b)
        return (h_f, c_f, h_b, c_b)

    lax.fori_loop(0, T, step,
                  (h0_ref[0], c0_ref[0], h0_ref[1], c0_ref[1]),
                  unroll=min(T, 8))


def run_bidir_layer(x_list, len_bcast, wih_list, whh, b, h0l, c0l):
    """x_list: 1 or 2 arrays of (T, Bp, D_i) bf16 -> (out_f, out_b), each
    (T, Bp, Hp) bf16 (zeros past each row's length)."""
    T, Bp, _ = x_list[0].shape
    Hp = h0l.shape[-1]
    n_in = len(x_list)
    kernel = functools.partial(_bidir_lstm_layer_kernel,
                               hid_p=Hp, n_inputs=n_in)
    return pl.pallas_call(
        kernel,
        out_shape=[jax.ShapeDtypeStruct((T, Bp, Hp), jnp.bfloat16),
                   jax.ShapeDtypeStruct((T, Bp, Hp), jnp.bfloat16)],
        in_specs=[_VMEM] * (2 * n_in + 5),
        out_specs=[_VMEM, _VMEM],
        scratch_shapes=[pltpu.VMEM((T, Bp, 4 * Hp), jnp.bfloat16),
                        pltpu.VMEM((T, Bp, 4 * Hp), jnp.bfloat16)],
        compiler_params=pltpu.CompilerParams(
            vmem_limit_bytes=48 * 1024 * 1024),   # fits v7x's 64 MiB with headroom
    )(*x_list, len_bcast, *wih_list, whh, b, h0l, c0l)


# ----------------------------------------------------------------------------
# Final Linear as a time-grid K-reduction over the time-major LSTM outputs
# (lin_w is reordered to (T, Hp, Cp) per direction at init, so no transpose /
#  concat / reshape glue is needed between pallas_calls).
# ----------------------------------------------------------------------------
def _linear_accum_kernel(xf_ref, xb_ref, wf_ref, wb_ref, b_ref, o_ref, acc_ref):
    t = pl.program_id(0)

    @pl.when(t == 0)
    def _():
        acc_ref[...] = jnp.zeros_like(acc_ref)

    acc_ref[...] += jnp.dot(xf_ref[...], wf_ref[...],
                            preferred_element_type=jnp.float32)
    acc_ref[...] += jnp.dot(xb_ref[...], wb_ref[...],
                            preferred_element_type=jnp.float32)

    @pl.when(t == pl.num_programs(0) - 1)
    def _():
        o_ref[...] = acc_ref[...] + b_ref[...]


def run_linear_timesum(xf, xb, wf, wb, b):
    T, Bp, Hp = xf.shape
    Cp = wf.shape[-1]
    grid_spec = pltpu.PrefetchScalarGridSpec(
        num_scalar_prefetch=0,
        grid=(T,),
        in_specs=[
            pl.BlockSpec((None, Bp, Hp), lambda t: (t, 0, 0)),   # out_f[t]
            pl.BlockSpec((None, Bp, Hp), lambda t: (t, 0, 0)),   # out_b[t]
            pl.BlockSpec((None, Hp, Cp), lambda t: (t, 0, 0)),   # W_f[t]
            pl.BlockSpec((None, Hp, Cp), lambda t: (t, 0, 0)),   # W_b[t]
            pl.BlockSpec((1, Cp), lambda t: (0, 0)),             # bias
        ],
        out_specs=pl.BlockSpec((Bp, Cp), lambda t: (0, 0)),      # resident acc
        scratch_shapes=[pltpu.VMEM((Bp, Cp), jnp.float32)],
    )
    return pl.pallas_call(
        _linear_accum_kernel,
        out_shape=jax.ShapeDtypeStruct((Bp, Cp), jnp.float32),
        grid_spec=grid_spec,
        compiler_params=pltpu.CompilerParams(
            dimension_semantics=("arbitrary",)),
    )(xf, xb, wf, wb, b)


# ----------------------------------------------------------------------------
# Full model forward (glue in plain JAX, hot loops in Pallas)
# ----------------------------------------------------------------------------
def lstm_model_forward(params, x_tokens, x_sequence_length, h0, c0):
    """x_tokens: (B, T) int32 ; x_sequence_length: (B,) int32 (sorted desc,
    max == max_sequence).  Returns logits (B, n_category)."""
    B, T = x_tokens.shape
    H = params["hid"]
    Hp = params["hid_p"]
    C = params["n_category"]
    Bp = _round_up(max(B, 8), 8)

    # Embedding lookup (gather) -- glue; padding row of the table is zero.
    emb = params["embed"][x_tokens]                        # (B, T, Ep) f32
    x = jnp.transpose(emb, (1, 0, 2))                      # (T, B, Ep)
    x = jnp.pad(x, ((0, 0), (0, Bp - B), (0, 0))).astype(jnp.bfloat16)

    lengths = jnp.pad(x_sequence_length.astype(jnp.int32), (0, Bp - B))
    len_bcast = jnp.broadcast_to(lengths[:, None], (Bp, Hp)).astype(jnp.int32)

    x_list = [x]
    for l, lp in enumerate(params["layers"]):
        h0l = jnp.pad(h0[2 * l:2 * l + 2],
                      ((0, 0), (0, Bp - B), (0, Hp - H))).astype(jnp.float32)
        c0l = jnp.pad(c0[2 * l:2 * l + 2],
                      ((0, 0), (0, Bp - B), (0, Hp - H))).astype(jnp.float32)
        out_f, out_b = run_bidir_layer(x_list, len_bcast, lp["wih"],
                                       lp["whh"], lp["b"], h0l, c0l)
        x_list = [out_f, out_b]                            # next layer's inputs

    # Final Linear == sum_t out_f[t] @ Wf[t] + out_b[t] @ Wb[t] + b
    # (exactly PyTorch's pad_packed -> view(B,-1) -> Linear, weights reordered)
    out = run_linear_timesum(x_list[0], x_list[1],
                             params["lin_wf"], params["lin_wb"],
                             params["lin_b"])              # (Bp, Cp) f32
    return out[:B, :C]


# ----------------------------------------------------------------------------
# Deterministic parameter construction (synthetic init, no checkpoint load)
# ----------------------------------------------------------------------------
def make_params(key, vocab_size, embed_size, hid_size, n_layers, max_sequence,
                n_category, padding_index):
    keys = jax.random.split(key, 3 + n_layers)

    H = hid_size
    Hp = _round_up(hid_size, 128)
    Ep = _round_up(embed_size, 128)
    Cp = _round_up(n_category, 128)

    embed = 0.1 * jax.random.normal(keys[0], (vocab_size, embed_size),
                                    jnp.float32)
    embed = embed.at[padding_index].set(0.0)               # padding_idx row
    embed = jnp.pad(embed, ((0, 0), (0, Ep - embed_size)))  # lane-pad columns

    def pad_gate_cols(w):
        """(rows, 4*H) -> (rows, 4*Hp): each gate's columns padded to Hp."""
        rows = w.shape[0]
        w4 = w.reshape(rows, 4, H)
        w4 = jnp.pad(w4, ((0, 0), (0, 0), (0, Hp - H)))
        return w4.reshape(rows, 4 * Hp)

    layers = []
    for l in range(n_layers):
        in_dim = embed_size if l == 0 else 2 * H
        k = jax.random.split(keys[3 + l], 6)
        s = 0.1

        wih_f = s * jax.random.normal(k[0], (in_dim, 4 * H), jnp.float32)
        whh_f = s * jax.random.normal(k[1], (H, 4 * H), jnp.float32)
        b_f = s * jax.random.normal(k[2], (1, 4 * H), jnp.float32)
        wih_b = s * jax.random.normal(k[3], (in_dim, 4 * H), jnp.float32)
        whh_b = s * jax.random.normal(k[4], (H, 4 * H), jnp.float32)
        b_b = s * jax.random.normal(k[5], (1, 4 * H), jnp.float32)

        if l == 0:
            def pad_in0(w):
                w = pad_gate_cols(w)                        # (E, 4Hp)
                return jnp.pad(w, ((0, Ep - in_dim), (0, 0)))  # (Ep, 4Hp)
            wih_list = [jnp.stack([pad_in0(wih_f),
                                   pad_in0(wih_b)]).astype(jnp.bfloat16)]
        else:
            # Layer input is [fwd | bwd]; split W_ih rows into the two streams
            # so concat(xf, xb) @ W == xf @ W_top + xb @ W_bot (no concat).
            def pad_split(w):
                w = pad_gate_cols(w)                        # (2H, 4Hp)
                top = jnp.pad(w[:H], ((0, Hp - H), (0, 0)))  # (Hp, 4Hp)
                bot = jnp.pad(w[H:], ((0, Hp - H), (0, 0)))  # (Hp, 4Hp)
                return top, bot
            top_f, bot_f = pad_split(wih_f)
            top_b, bot_b = pad_split(wih_b)
            wih_list = [jnp.stack([top_f, top_b]).astype(jnp.bfloat16),
                        jnp.stack([bot_f, bot_b]).astype(jnp.bfloat16)]

        whh = jnp.stack([
            jnp.pad(pad_gate_cols(whh_f), ((0, Hp - H), (0, 0))),
            jnp.pad(pad_gate_cols(whh_b), ((0, Hp - H), (0, 0)))],
        ).astype(jnp.bfloat16)                              # (2, Hp, 4Hp)
        b = jnp.stack([pad_gate_cols(b_f),
                       pad_gate_cols(b_b)]).astype(jnp.float32)  # (2, 1, 4Hp)

        layers.append(dict(wih=wih_list, whh=whh, b=b))

    # Final Linear: reorder (T*2H, C) into per-direction (T, Hp, Cp) pieces
    # matching the time-major LSTM outputs (flatten order: t-major, fwd|bwd).
    input_dim = 2 * H * max_sequence
    lin_w = 0.1 * jax.random.normal(keys[1], (input_dim, n_category),
                                    jnp.float32)
    lin_b = 0.1 * jax.random.normal(keys[2], (1, n_category), jnp.float32)
    lw = lin_w.reshape(max_sequence, 2, H, n_category)
    lin_wf = jnp.pad(lw[:, 0],
                     ((0, 0), (0, Hp - H), (0, Cp - n_category))
                     ).astype(jnp.bfloat16)                 # (T, Hp, Cp)
    lin_wb = jnp.pad(lw[:, 1],
                     ((0, 0), (0, Hp - H), (0, Cp - n_category))
                     ).astype(jnp.bfloat16)                 # (T, Hp, Cp)
    lin_b = jnp.pad(lin_b, ((0, 0), (0, Cp - n_category))).astype(jnp.float32)

    return dict(embed=embed, layers=layers, lin_wf=lin_wf, lin_wb=lin_wb,
                lin_b=lin_b, hid=H, hid_p=Hp, n_category=n_category)


# ----------------------------------------------------------------------------
if __name__ == "__main__":
    # Small shapes consistent with the module's forward
    vocab_size = 50
    embed_size = 32
    hid_size = 32
    n_layers = 2
    max_sequence = 8
    n_category = 5
    batch = 2
    padding_index = 0  # token2idx['<PAD>']

    root = jax.random.PRNGKey(0)
    k_par, k_tok, k_h, k_c = jax.random.split(root, 4)

    params = make_params(k_par, vocab_size, embed_size, hid_size, n_layers,
                         max_sequence, n_category, padding_index)

    # Token ids, lengths sorted descending (pack_padded_sequence default),
    # longest sequence == max_sequence so the flattened width matches lin.
    x_sequence_length = jnp.array([max_sequence, 5], dtype=jnp.int32)
    x_tokens = jax.random.randint(k_tok, (batch, max_sequence), 1, vocab_size,
                                  dtype=jnp.int32)
    t_idx = jnp.arange(max_sequence)[None, :]
    x_tokens = jnp.where(t_idx < x_sequence_length[:, None], x_tokens,
                         padding_index).astype(jnp.int32)

    # init_hidden: randn * 0.1, shape (2*n_layers, B, H) for bidirectional
    h0 = 0.1 * jax.random.normal(k_h, (2 * n_layers, batch, hid_size),
                                 jnp.float32)
    c0 = 0.1 * jax.random.normal(k_c, (2 * n_layers, batch, hid_size),
                                 jnp.float32)

    logits = lstm_model_forward(params, x_tokens, x_sequence_length, h0, c0)
    logits = jax.block_until_ready(logits)

    assert logits.shape == (batch, n_category)
    assert jnp.all(jnp.isfinite(logits))
    print("KERNEL_OK")
</pallas_src>

<mosaic_0001>
module attributes {stable_mosaic.version = 11 : i64} {
  func.func @_bidir_lstm_layer_kernel(%arg0: memref<8x8x128xbf16, #tpu.memory_space<vmem>>, %arg1: memref<8x128xi32, #tpu.memory_space<vmem>>, %arg2: memref<2x128x512xbf16, #tpu.memory_space<vmem>>, %arg3: memref<2x128x512xbf16, #tpu.memory_space<vmem>>, %arg4: memref<2x1x512xf32, #tpu.memory_space<vmem>>, %arg5: memref<2x8x128xf32, #tpu.memory_space<vmem>>, %arg6: memref<2x8x128xf32, #tpu.memory_space<vmem>>, %arg7: memref<8x8x128xbf16, #tpu.memory_space<vmem>>, %arg8: memref<8x8x128xbf16, #tpu.memory_space<vmem>>, %arg9: memref<8x8x512xbf16, #tpu.memory_space<vmem>>, %arg10: memref<8x8x512xbf16, #tpu.memory_space<vmem>>) attributes {dimension_semantics = [], scalar_prefetch = 0 : i64, scratch_operands = 2 : i64, tpu.core_type = #tpu.core_type<tc>} {
    %c0 = arith.constant 0 : index
    %c0_0 = arith.constant 0 : index
    %c0_1 = arith.constant 0 : index
    %0 = vector.load %arg0[%c0, %c0_0, %c0_1] : memref<8x8x128xbf16, #tpu.memory_space<vmem>>, vector<8x8x128xbf16>
    %1 = vector.shape_cast %0 : vector<8x8x128xbf16> to vector<64x128xbf16>
    %c0_2 = arith.constant 0 : index
    %c0_3 = arith.constant 0 : index
    %c0_4 = arith.constant 0 : index
    %2 = vector.load %arg2[%c0_2, %c0_3, %c0_4] : memref<2x128x512xbf16, #tpu.memory_space<vmem>>, vector<1x128x512xbf16>
    %3 = vector.shape_cast %2 : vector<1x128x512xbf16> to vector<128x512xbf16>
    %cst = arith.constant dense<0.000000e+00> : vector<64x512xf32>
    %4 = tpu.matmul %1, %3, %cst {dimension_numbers = #tpu.dot_dimension_numbers<[1], [0], [0], [1], [0, 0, 1, 1], [], []>} : vector<64x128xbf16>, vector<128x512xbf16>, vector<64x512xf32> -> vector<64x512xf32>
    %c1 = arith.constant 1 : index
    %c0_5 = arith.constant 0 : index
    %c0_6 = arith.constant 0 : index
    %5 = vector.load %arg2[%c1, %c0_5, %c0_6] : memref<2x128x512xbf16, #tpu.memory_space<vmem>>, vector<1x128x512xbf16>
    %6 = vector.shape_cast %5 : vector<1x128x512xbf16> to vector<128x512xbf16>
    %cst_7 = arith.constant dense<0.000000e+00> : vector<64x512xf32>
    %7 = tpu.matmul %1, %6, %cst_7 {dimension_numbers = #tpu.dot_dimension_numbers<[1], [0], [0], [1], [0, 0, 1, 1], [], []>} : vector<64x128xbf16>, vector<128x512xbf16>, vector<64x512xf32> -> vector<64x512xf32>
    %8 = vector.shape_cast %4 : vector<64x512xf32> to vector<8x8x512xf32>
    %9 = arith.truncf %8 : vector<8x8x512xf32> to vector<8x8x512xbf16>
    %c0_8 = arith.constant 0 : index
    %c0_9 = arith.constant 0 : index
    %c0_10 = arith.constant 0 : index
    %10 = vector.load %arg9[%c0_8, %c0_9, %c0_10] : memref<8x8x512xbf16, #tpu.memory_space<vmem>>, vector<8x8x512xbf16>
    tpu.vector_store %arg9[%c0_8, %c0_9, %c0_10], %9 {strides = array<i32>} : memref<8x8x512xbf16, #tpu.memory_space<vmem>>, vector<8x8x512xbf16>,
    %11 = vector.shape_cast %7 : vector<64x512xf32> to vector<8x8x512xf32>
    %12 = arith.truncf %11 : vector<8x8x512xf32> to vector<8x8x512xbf16>
    %c0_11 = arith.constant 0 : index
    %c0_12 = arith.constant 0 : index
    %c0_13 = arith.constant 0 : index
    %13 = vector.load %arg10[%c0_11, %c0_12, %c0_13] : memref<8x8x512xbf16, #tpu.memory_space<vmem>>, vector<8x8x512xbf16>
    tpu.vector_store %arg10[%c0_11, %c0_12, %c0_13], %12 {strides = array<i32>} : memref<8x8x512xbf16, #tpu.memory_space<vmem>>, vector<8x8x512xbf16>,
    %c0_14 = arith.constant 0 : index
    %c0_15 = arith.constant 0 : index
    %14 = vector.load %arg1[%c0_14, %c0_15] : memref<8x128xi32, #tpu.memory_space<vmem>>, vector<8x128xi32>
    %c0_16 = arith.constant 0 : index
    %c0_17 = arith.constant 0 : index
    %c0_18 = arith.constant 0 : index
    %15 = vector.load %arg3[%c0_16, %c0_17, %c0_18] : memref<2x128x512xbf16, #tpu.memory_space<vmem>>, vector<1x128x512xbf16>
    %16 = vector.shape_cast %15 : vector<1x128x512xbf16> to vector<128x512xbf16>
    %c1_19 = arith.constant 1 : index
    %c0_20 = arith.constant 0 : index
    %c0_21 = arith.constant 0 : index
    %17 = vector.load %arg3[%c1_19, %c0_20, %c0_21] : memref<2x128x512xbf16, #tpu.memory_space<vmem>>, vector<1x128x512xbf16>
    %18 = vector.shape_cast %17 : vector<1x128x512xbf16> to vector<128x512xbf16>
    %c0_22 = arith.constant 0 : index
    %c0_23 = arith.constant 0 : index
    %c0_24 = arith.constant 0 : index
    %19 = vector.load %arg4[%c0_22, %c0_23, %c0_24] : memref<2x1x512xf32, #tpu.memory_space<vmem>>, vector<1x1x512xf32>
    %20 = vector.shape_cast %19 : vector<1x1x512xf32> to vector<1x512xf32>
    %c1_25 = arith.constant 1 : index
    %c0_26 = arith.constant 0 : index
    %c0_27 = arith.constant 0 : index
    %21 = vector.load %arg4[%c1_25, %c0_26, %c0_27] : memref<2x1x512xf32, #tpu.memory_space<vmem>>, vector<1x1x512xf32>
    %22 = vector.shape_cast %21 : vector<1x1x512xf32> to vector<1x512xf32>
    %c0_28 = arith.constant 0 : index
    %c0_29 = arith.constant 0 : index
    %c0_30 = arith.constant 0 : index
    %23 = vector.load %arg5[%c0_28, %c0_29, %c0_30] : memref<2x8x128xf32, #tpu.memory_space<vmem>>, vector<1x8x128xf32>
    %24 = vector.shape_cast %23 : vector<1x8x128xf32> to vector<8x128xf32>
    %c0_31 = arith.constant 0 : index
    %c0_32 = arith.constant 0 : index
    %c0_33 = arith.constant 0 : index
    %25 = vector.load %arg6[%c0_31, %c0_32, %c0_33] : memref<2x8x128xf32, #tpu.memory_space<vmem>>, vector<1x8x128xf32>
    %26 = vector.shape_cast %25 : vector<1x8x128xf32> to vector<8x128xf32>
    %c1_34 = arith.constant 1 : index
    %c0_35 = arith.constant 0 : index
    %c0_36 = arith.constant 0 : index
    %27 = vector.load %arg5[%c1_34, %c0_35, %c0_36] : memref<2x8x128xf32, #tpu.memory_space<vmem>>, vector<1x8x128xf32>
    %28 = vector.shape_cast %27 : vector<1x8x128xf32> to vector<8x128xf32>
    %c1_37 = arith.constant 1 : index
    %c0_38 = arith.constant 0 : index
    %c0_39 = arith.constant 0 : index
    %29 = vector.load %arg6[%c1_37, %c0_38, %c0_39] : memref<2x8x128xf32, #tpu.memory_space<vmem>>, vector<1x8x128xf32>
    %30 = vector.shape_cast %29 : vector<1x8x128xf32> to vector<8x128xf32>
    %c0_i32 = arith.constant 0 : i32
    %c7_i32 = arith.constant 7 : i32
    %31 = arith.subi %c7_i32, %c0_i32 : i32
    %32 = arith.index_cast %c0_i32 : i32 to index
    %c0_40 = arith.constant 0 : index
    %c0_41 = arith.constant 0 : index
    %33 = vector.load %arg9[%32, %c0_40, %c0_41] : memref<8x8x512xbf16, #tpu.memory_space<vmem>>, vector<1x8x512xbf16>
    %34 = vector.shape_cast %33 : vector<1x8x512xbf16> to vector<8x512xbf16>
    %35 = arith.extf %34 : vector<8x512xbf16> to vector<8x512xf32>
    %36 = vector.broadcast %20 : vector<1x512xf32> to vector<8x512xf32>
    %37 = arith.addf %35, %36 : vector<8x512xf32>
    %38 = arith.truncf %24 : vector<8x128xf32> to vector<8x128xbf16>
    %cst_42 = arith.constant dense<0.000000e+00> : vector<8x512xf32>
    %39 = tpu.matmul %38, %16, %cst_42 {dimension_numbers = #tpu.dot_dimension_numbers<[1], [0], [0], [1], [0, 0, 1, 1], [], []>} : vector<8x128xbf16>, vector<128x512xbf16>, vector<8x512xf32> -> vector<8x512xf32>
    %40 = arith.addf %37, %39 : vector<8x512xf32>
    %41 = arith.index_cast %31 : i32 to index
    %c0_43 = arith.constant 0 : index
    %c0_44 = arith.constant 0 : index
    %42 = vector.load %arg10[%41, %c0_43, %c0_44] : memref<8x8x512xbf16, #tpu.memory_space<vmem>>, vector<1x8x512xbf16>
    %43 = vector.shape_cast %42 : vector<1x8x512xbf16> to vector<8x512xbf16>
    %44 = arith.extf %43 : vector<8x512xbf16> to vector<8x512xf32>
    %45 = vector.broadcast %22 : vector<1x512xf32> to vector<8x512xf32>
    %46 = arith.addf %44, %45 : vector<8x512xf32>
    %47 = arith.truncf %28 : vector<8x128xf32> to vector<8x128xbf16>
    %cst_45 = arith.constant dense<0.000000e+00> : vector<8x512xf32>
    %48 = tpu.matmul %47, %18, %cst_45 {dimension_numbers = #tpu.dot_dimension_numbers<[1], [0], [0], [1], [0, 0, 1, 1], [], []>} : vector<8x128xbf16>, vector<128x512xbf16>, vector<8x512xf32> -> vector<8x512xf32>
    %49 = arith.addf %46, %48 : vector<8x512xf32>
    %50 = vector.extract_strided_slice %40 {offsets = [0, 0], sizes = [8, 128], strides = [1, 1]} : vector<8x512xf32> to vector<8x128xf32>
    %51 = arith.negf %50 : vector<8x128xf32>
    %52 = math.exp %51 : vector<8x128xf32>
    %cst_46 = arith.constant 1.000000e+00 : f32
    %53 = vector.broadcast %cst_46 : f32 to vector<8x128xf32>
    %54 = arith.addf %53, %52 : vector<8x128xf32>
    %55 = arith.divf %53, %54 : vector<8x128xf32>
    %56 = vector.extract_strided_slice %40 {offsets = [0, 128], sizes = [8, 128], strides = [1, 1]} : vector<8x512xf32> to vector<8x128xf32>
    %57 = arith.negf %56 : vector<8x128xf32>
    %58 = math.exp %57 : vector<8x128xf32>
    %cst_47 = arith.constant 1.000000e+00 : f32
    %59 = vector.broadcast %cst_47 : f32 to vector<8x128xf32>
    %60 = arith.addf %59, %58 : vector<8x128xf32>
    %61 = arith.divf %59, %60 : vector<8x128xf32>
    %62 = vector.extract_strided_slice %40 {offsets = [0, 256], sizes = [8, 128], strides = [1, 1]} : vector<8x512xf32> to vector<8x128xf32>
    %63 = math.tanh %62 : vector<8x128xf32>
    %64 = vector.extract_strided_slice %40 {offsets = [0, 384], sizes = [8, 128], strides = [1, 1]} : vector<8x512xf32> to vector<8x128xf32>
    %65 = arith.negf %64 : vector<8x128xf32>
    %66 = math.exp %65 : vector<8x128xf32>
    %cst_48 = arith.constant 1.000000e+00 : f32
    %67 = vector.broadcast %cst_48 : f32 to vector<8x128xf32>
    %68 = arith.addf %67, %66 : vector<8x128xf32>
    %69 = arith.divf %67, %68 : vector<8x128xf32>
    %70 = arith.mulf %61, %26 : vector<8x128xf32>
    %71 = arith.mulf %55, %63 : vector<8x128xf32>
    %72 = arith.addf %70, %71 : vector<8x128xf32>
    %73 = math.tanh %72 : vector<8x128xf32>
    %74 = arith.mulf %69, %73 : vector<8x128xf32>
    %75 = vector.extract_strided_slice %49 {offsets = [0, 0], sizes = [8, 128], strides = [1, 1]} : vector<8x512xf32> to vector<8x128xf32>
    %76 = arith.negf %75 : vector<8x128xf32>
    %77 = math.exp %76 : vector<8x128xf32>
    %cst_49 = arith.constant 1.000000e+00 : f32
    %78 = vector.broadcast %cst_49 : f32 to vector<8x128xf32>
    %79 = arith.addf %78, %77 : vector<8x128xf32>
    %80 = arith.divf %78, %79 : vector<8x128xf32>
    %81 = vector.extract_strided_slice %49 {offsets = [0, 128], sizes = [8, 128], strides = [1, 1]} : vector<8x512xf32> to vector<8x128xf32>
    %82 = arith.negf %81 : vector<8x128xf32>
    %83 = math.exp %82 : vector<8x128xf32>
    %cst_50 = arith.constant 1.000000e+00 : f32
    %84 = vector.broadcast %cst_50 : f32 to vector<8x128xf32>
    %85 = arith.addf %84, %83 : vector<8x128xf32>
    %86 = arith.divf %84, %85 : vector<8x128xf32>
    %87 = vector.extract_strided_slice %49 {offsets = [0, 256], sizes = [8, 128], strides = [1, 1]} : vector<8x512xf32> to vector<8x128xf32>
    %88 = math.tanh %87 : vector<8x128xf32>
    %89 = vector.extract_strided_slice %49 {offsets = [0, 384], sizes = [8, 128], strides = [1, 1]} : vector<8x512xf32> to vector<8x128xf32>
    %90 = arith.negf %89 : vector<8x128xf32>
    %91 = math.exp %90 : vector<8x128xf32>
    %cst_51 = arith.constant 1.000000e+00 : f32
    %92 = vector.broadcast %cst_51 : f32 to vector<8x128xf32>
    %93 = arith.addf %92, %91 : vector<8x128xf32>
    %94 = arith.divf %92, %93 : vector<8x128xf32>
    %95 = arith.mulf %86, %30 : vector<8x128xf32>
    %96 = arith.mulf %80, %88 : vector<8x128xf32>
    %97 = arith.addf %95, %96 : vector<8x128xf32>
    %98 = math.tanh %97 : vector<8x128xf32>
    %99 = arith.mulf %94, %98 : vector<8x128xf32>
    %100 = vector.broadcast %c0_i32 : i32 to vector<8x128xi32>
    %101 = arith.cmpi sgt, %14, %100 : vector<8x128xi32>
    %102 = vector.broadcast %31 : i32 to vector<8x128xi32>
    %103 = arith.cmpi sgt, %14, %102 : vector<8x128xi32>
    %cst_52 = arith.constant 0.000000e+00 : f32
    %104 = vector.broadcast %cst_52 : f32 to vector<8x128xf32>
    %105 = arith.select %101, %74, %104 : vector<8x128xi1>, vector<8x128xf32>
    %106 = arith.truncf %105 : vector<8x128xf32> to vector<8x128xbf16>
    %107 = arith.index_cast %c0_i32 : i32 to index
    %c0_53 = arith.constant 0 : index
    %c0_54 = arith.constant 0 : index
    %108 = vector.load %arg7[%107, %c0_53, %c0_54] : memref<8x8x128xbf16, #tpu.memory_space<vmem>>, vector<1x8x128xbf16>
    %109 = vector.shape_cast %108 : vector<1x8x128xbf16> to vector<8x128xbf16>
    %110 = vector.shape_cast %106 : vector<8x128xbf16> to vector<1x8x128xbf16>
    tpu.vector_store %arg7[%107, %c0_53, %c0_54], %110 {strides = array<i32>} : memref<8x8x128xbf16, #tpu.memory_space<vmem>>, vector<1x8x128xbf16>,
    %cst_55 = arith.constant 0.000000e+00 : f32
    %111 = vector.broadcast %cst_55 : f32 to vector<8x128xf32>
    %112 = arith.select %103, %99, %111 : vector<8x128xi1>, vector<8x128xf32>
    %113 = arith.truncf %112 : vector<8x128xf32> to vector<8x128xbf16>
    %114 = arith.index_cast %31 : i32 to index
    %c0_56 = arith.constant 0 : index
    %c0_57 = arith.constant 0 : index
    %115 = vector.load %arg8[%114, %c0_56, %c0_57] : memref<8x8x128xbf16, #tpu.memory_space<vmem>>, vector<1x8x128xbf16>
    %116 = vector.shape_cast %115 : vector<1x8x128xbf16> to vector<8x128xbf16>
    %117 = vector.shape_cast %113 : vector<8x128xbf16> to vector<1x8x128xbf16>
    tpu.vector_store %arg8[%114, %c0_56, %c0_57], %117 {strides = array<i32>} : memref<8x8x128xbf16, #tpu.memory_space<vmem>>, vector<1x8x128xbf16>,
    %118 = arith.select %101, %74, %24 : vector<8x128xi1>, vector<8x128xf32>
    %119 = arith.select %101, %72, %26 : vector<8x128xi1>, vector<8x128xf32>
    %120 = arith.select %103, %99, %28 : vector<8x128xi1>, vector<8x128xf32>
    %121 = arith.select %103, %97, %30 : vector<8x128xi1>, vector<8x128xf32>
    %c1_i32 = arith.constant 1 : i32
    %c7_i32_58 = arith.constant 7 : i32
    %122 = arith.subi %c7_i32_58, %c1_i32 : i32
    %123 = arith.index_cast %c1_i32 : i32 to index
    %c0_59 = arith.constant 0 : index
    %c0_60 = arith.constant 0 : index
    %124 = vector.load %arg9[%123, %c0_59, %c0_60] : memref<8x8x512xbf16, #tpu.memory_space<vmem>>, vector<1x8x512xbf16>
    %125 = vector.shape_cast %124 : vector<1x8x512xbf16> to vector<8x512xbf16>
    %126 = arith.extf %125 : vector<8x512xbf16> to vector<8x512xf32>
    %127 = vector.broadcast %20 : vector<1x512xf32> to vector<8x512xf32>
    %128 = arith.addf %126, %127 : vector<8x512xf32>
    %129 = arith.truncf %118 : vector<8x128xf32> to vector<8x128xbf16>
    %cst_61 = arith.constant dense<0.000000e+00> : vector<8x512xf32>
    %130 = tpu.matmul %129, %16, %cst_61 {dimension_numbers = #tpu.dot_dimension_numbers<[1], [0], [0], [1], [0, 0, 1, 1], [], []>} : vector<8x128xbf16>, vector<128x512xbf16>, vector<8x512xf32> -> vector<8x512xf32>
    %131 = arith.addf %128, %130 : vector<8x512xf32>
    %132 = arith.index_cast %122 : i32 to index
    %c0_62 = arith.constant 0 : index
    %c0_63 = arith.constant 0 : index
    %133 = vector.load %arg10[%132, %c0_62, %c0_63] : memref<8x8x512xbf16, #tpu.memory_space<vmem>>, vector<1x8x512xbf16>
    %134 = vector.shape_cast %133 : vector<1x8x512xbf16> to vector<8x512xbf16>
    %135 = arith.extf %134 : vector<8x512xbf16> to vector<8x512xf32>
    %136 = vector.broadcast %22 : vector<1x512xf32> to vector<8x512xf32>
    %137 = arith.addf %135, %136 : vector<8x512xf32>
    %138 = arith.truncf %120 : vector<8x128xf32> to vector<8x128xbf16>
    %cst_64 = arith.constant dense<0.000000e+00> : vector<8x512xf32>
    %139 = tpu.matmul %138, %18, %cst_64 {dimension_numbers = #tpu.dot_dimension_numbers<[1], [0], [0], [1], [0, 0, 1, 1], [], []>} : vector<8x128xbf16>, vector<128x512xbf16>, vector<8x512xf32> -> vector<8x512xf32>
    %140 = arith.addf %137, %139 : vector<8x512xf32>
    %141 = vector.extract_strided_slice %131 {offsets = [0, 0], sizes = [8, 128], strides = [1, 1]} : vector<8x512xf32> to vector<8x128xf32>
    %142 = arith.negf %141 : vector<8x128xf32>
    %143 = math.exp %142 : vector<8x128xf32>
    %cst_65 = arith.constant 1.000000e+00 : f32
    %144 = vector.broadcast %cst_65 : f32 to vector<8x128xf32>
    %145 = arith.addf %144, %143 : vector<8x128xf32>
    %146 = arith.divf %144, %145 : vector<8x128xf32>
    %147 = vector.extract_strided_slice %131 {offsets = [0, 128], sizes = [8, 128], strides = [1, 1]} : vector<8x512xf32> to vector<8x128xf32>
    %148 = arith.negf %147 : vector<8x128xf32>
    %149 = math.exp %148 : vector<8x128xf32>
    %cst_66 = arith.constant 1.000000e+00 : f32
    %150 = vector.broadcast %cst_66 : f32 to vector<8x128xf32>
    %151 = arith.addf %150, %149 : vector<8x128xf32>
    %152 = arith.divf %150, %151 : vector<8x128xf32>
    %153 = vector.extract_strided_slice %131 {offsets = [0, 256], sizes = [8, 128], strides = [1, 1]} : vector<8x512xf32> to vector<8x128xf32>
    %154 = math.tanh %153 : vector<8x128xf32>
    %155 = vector.extract_strided_slice %131 {offsets = [0, 384], sizes = [8, 128], strides = [1, 1]} : vector<8x512xf32> to vector<8x128xf32>
    %156 = arith.negf %155 : vector<8x128xf32>
    %157 = math.exp %156 : vector<8x128xf32>
    %cst_67 = arith.constant 1.000000e+00 : f32
    %158 = vector.broadcast %cst_67 : f32 to vector<8x128xf32>
    %159 = arith.addf %158, %157 : vector<8x128xf32>
    %160 = arith.divf %158, %159 : vector<8x128xf32>
    %161 = arith.mulf %152, %119 : vector<8x128xf32>
    %162 = arith.mulf %146, %154 : vector<8x128xf32>
    %163 = arith.addf %161, %162 : vector<8x128xf32>
    %164 = math.tanh %163 : vector<8x128xf32>
    %165 = arith.mulf %160, %164 : vector<8x128xf32>
    %166 = vector.extract_strided_slice %140 {offsets = [0, 0], sizes = [8, 128], strides = [1, 1]} : vector<8x512xf32> to vector<8x128xf32>
    %167 = arith.negf %166 : vector<8x128xf32>
    %168 = math.exp %167 : vector<8x128xf32>
    %cst_68 = arith.constant 1.000000e+00 : f32
    %169 = vector.broadcast %cst_68 : f32 to vector<8x128xf32>
    %170 = arith.addf %169, %168 : vector<8x128xf32>
    %171 = arith.divf %169, %170 : vector<8x128xf32>
    %172 = vector.extract_strided_slice %140 {offsets = [0, 128], sizes = [8, 128], strides = [1, 1]} : vector<8x512xf32> to vector<8x128xf32>
    %173 = arith.negf %172 : vector<8x128xf32>
    %174 = math.exp %173 : vector<8x128xf32>
    %cst_69 = arith.constant 1.000000e+00 : f32
    %175 = vector.broadcast %cst_69 : f32 to vector<8x128xf32>
    %176 = arith.addf %175, %174 : vector<8x128xf32>
    %177 = arith.divf %175, %176 : vector<8x128xf32>
    %178 = vector.extract_strided_slice %140 {offsets = [0, 256], sizes = [8, 128], strides = [1, 1]} : vector<8x512xf32> to vector<8x128xf32>
    %179 = math.tanh %178 : vector<8x128xf32>
    %180 = vector.extract_strided_slice %140 {offsets = [0, 384], sizes = [8, 128], strides = [1, 1]} : vector<8x512xf32> to vector<8x128xf32>
    %181 = arith.negf %180 : vector<8x128xf32>
    %182 = math.exp %181 : vector<8x128xf32>
    %cst_70 = arith.constant 1.000000e+00 : f32
    %183 = vector.broadcast %cst_70 : f32 to vector<8x128xf32>
    %184 = arith.addf %183, %182 : vector<8x128xf32>
    %185 = arith.divf %183, %184 : vector<8x128xf32>
    %186 = arith.mulf %177, %121 : vector<8x128xf32>
    %187 = arith.mulf %171, %179 : vector<8x128xf32>
    %188 = arith.addf %186, %187 : vector<8x128xf32>
    %189 = math.tanh %188 : vector<8x128xf32>
    %190 = arith.mulf %185, %189 : vector<8x128xf32>
    %191 = vector.broadcast %c1_i32 : i32 to vector<8x128xi32>
    %192 = arith.cmpi sgt, %14, %191 : vector<8x128xi32>
    %193 = vector.broadcast %122 : i32 to vector<8x128xi32>
    %194 = arith.cmpi sgt, %14, %193 : vector<8x128xi32>
    %cst_71 = arith.constant 0.000000e+00 : f32
    %195 = vector.broadcast %cst_71 : f32 to vector<8x128xf32>
    %196 = arith.select %192, %165, %195 : vector<8x128xi1>, vector<8x128xf32>
    %197 = arith.truncf %196 : vector<8x128xf32> to vector<8x128xbf16>
    %198 = arith.index_cast %c1_i32 : i32 to index
    %c0_72 = arith.constant 0 : index
    %c0_73 = arith.constant 0 : index
    %199 = vector.load %arg7[%198, %c0_72, %c0_73] : memref<8x8x128xbf16, #tpu.memory_space<vmem>>, vector<1x8x128xbf16>
    %200 = vector.shape_cast %199 : vector<1x8x128xbf16> to vector<8x128xbf16>
    %201 = vector.shape_cast %197 : vector<8x128xbf16> to vector<1x8x128xbf16>
    tpu.vector_store %arg7[%198, %c0_72, %c0_73], %201 {strides = array<i32>} : memref<8x8x128xbf16, #tpu.memory_space<vmem>>, vector<1x8x128xbf16>,
    %cst_74 = arith.constant 0.000000e+00 : f32
    %202 = vector.broadcast %cst_74 : f32 to vector<8x128xf32>
    %203 = arith.select %194, %190, %202 : vector<8x128xi1>, vector<8x128xf32>
    %204 = arith.truncf %203 : vector<8x128xf32> to vector<8x128xbf16>
    %205 = arith.index_cast %122 : i32 to index
    %c0_75 = arith.constant 0 : index
    %c0_76 = arith.constant 0 : index
    %206 = vector.load %arg8[%205, %c0_75, %c0_76] : memref<8x8x128xbf16, #tpu.memory_space<vmem>>, vector<1x8x128xbf16>
    %207 = vector.shape_cast %206 : vector<1x8x128xbf16> to vector<8x128xbf16>
    %208 = vector.shape_cast %204 : vector<8x128xbf16> to vector<1x8x128xbf16>
    tpu.vector_store %arg8[%205, %c0_75, %c0_76], %208 {strides = array<i32>} : memref<8x8x128xbf16, #tpu.memory_space<vmem>>, vector<1x8x128xbf16>,
    %209 = arith.select %192, %165, %118 : vector<8x128xi1>, vector<8x128xf32>
    %210 = arith.select %192, %163, %119 : vector<8x128xi1>, vector<8x128xf32>
    %211 = arith.select %194, %190, %120 : vector<8x128xi1>, vector<8x128xf32>
    %212 = arith.select %194, %188, %121 : vector<8x128xi1>, vector<8x128xf32>
    %c2_i32 = arith.constant 2 : i32
    %c7_i32_77 = arith.constant 7 : i32
    %213 = arith.subi %c7_i32_77, %c2_i32 : i32
    %214 = arith.index_cast %c2_i32 : i32 to index
    %c0_78 = arith.constant 0 : index
    %c0_79 = arith.constant 0 : index
    %215 = vector.load %arg9[%214, %c0_78, %c0_79] : memref<8x8x512xbf16, #tpu.memory_space<vmem>>, vector<1x8x512xbf16>
    %216 = vector.shape_cast %215 : vector<1x8x512xbf16> to vector<8x512xbf16>
    %217 = arith.extf %216 : vector<8x512xbf16> to vector<8x512xf32>
    %218 = vector.broadcast %20 : vector<1x512xf32> to vector<8x512xf32>
    %219 = arith.addf %217, %218 : vector<8x512xf32>
    %220 = arith.truncf %209 : vector<8x128xf32> to vector<8x128xbf16>
    %cst_80 = arith.constant dense<0.000000e+00> : vector<8x512xf32>
    %221 = tpu.matmul %220, %16, %cst_80 {dimension_numbers = #tpu.dot_dimension_numbers<[1], [0], [0], [1], [0, 0, 1, 1], [], []>} : vector<8x128xbf16>, vector<128x512xbf16>, vector<8x512xf32> -> vector<8x512xf32>
    %222 = arith.addf %219, %221 : vector<8x512xf32>
    %223 = arith.index_cast %213 : i32 to index
    %c0_81 = arith.constant 0 : index
    %c0_82 = arith.constant 0 : index
    %224 = vector.load %arg10[%223, %c0_81, %c0_82] : memref<8x8x512xbf16, #tpu.memory_space<vmem>>, vector<1x8x512xbf16>
    %225 = vector.shape_cast %224 : vector<1x8x512xbf16> to vector<8x512xbf16>
    %226 = arith.extf %225 : vector<8x512xbf16> to vector<8x512xf32>
    %227 = vector.broadcast %22 : vector<1x512xf32> to vector<8x512xf32>
    %228 = arith.addf %226, %227 : vector<8x512xf32>
    %229 = arith.truncf %211 : vector<8x128xf32> to vector<8x128xbf16>
    %cst_83 = arith.constant dense<0.000000e+00> : vector<8x512xf32>
    %230 = tpu.matmul %229, %18, %cst_83 {dimension_numbers = #tpu.dot_dimension_numbers<[1], [0], [0], [1], [0, 0, 1, 1], [], []>} : vector<8x128xbf16>, vector<128x512xbf16>, vector<8x512xf32> -> vector<8x512xf32>
    %231 = arith.addf %228, %230 : vector<8x512xf32>
    %232 = vector.extract_strided_slice %222 {offsets = [0, 0], sizes = [8, 128], strides = [1, 1]} : vector<8x512xf32> to vector<8x128xf32>
    %233 = arith.negf %232 : vector<8x128xf32>
    %234 = math.exp %233 : vector<8x128xf32>
    %cst_84 = arith.constant 1.000000e+00 : f32
    %235 = vector.broadcast %cst_84 : f32 to vector<8x128xf32>
    %236 = arith.addf %235, %234 : vector<8x128xf32>
    %237 = arith.divf %235, %236 : vector<8x128xf32>
    %238 = vector.extract_strided_slice %222 {offsets = [0, 128], sizes = [8, 128], strides = [1, 1]} : vector<8x512xf32> to vector<8x128xf32>
    %239 = arith.negf %238 : vector<8x128xf32>
    %240 = math.exp %239 : vector<8x128xf32>
    %cst_85 = arith.constant 1.000000e+00 : f32
    %241 = vector.broadcast %cst_85 : f32 to vector<8x128xf32>
    %242 = arith.addf %241, %240 : vector<8x128xf32>
    %243 = arith.divf %241, %242 : vector<8x128xf32>
    %244 = vector.extract_strided_slice %222 {offsets = [0, 256], sizes = [8, 128], strides = [1, 1]} : vector<8x512xf32> to vector<8x128xf32>
    %245 = math.tanh %244 : vector<8x128xf32>
    %246 = vector.extract_strided_slice %222 {offsets = [0, 384], sizes = [8, 128], strides = [1, 1]} : vector<8x512xf32> to vector<8x128xf32>
    %247 = arith.negf %246 : vector<8x128xf32>
    %248 = math.exp %247 : vector<8x128xf32>
    %cst_86 = arith.constant 1.000000e+00 : f32
    %249 = vector.broadcast %cst_86 : f32 to vector<8x128xf32>
    %250 = arith.addf %249, %248 : vector<8x128xf32>
    %251 = arith.divf %249, %250 : vector<8x128xf32>
    %252 = arith.mulf %243, %210 : vector<8x128xf32>
    %253 = arith.mulf %237, %245 : vector<8x128xf32>
    %254 = arith.addf %252, %253 : vector<8x128xf32>
    %255 = math.tanh %254 : vector<8x128xf32>
    %256 = arith.mulf %251, %255 : vector<8x128xf32>
    %257 = vector.extract_strided_slice %231 {offsets = [0, 0], sizes = [8, 128], strides = [1, 1]} : vector<8x512xf32> to vector<8x128xf32>
    %258 = arith.negf %257 : vector<8x128xf32>
    %259 = math.exp %258 : vector<8x128xf32>
    %cst_87 = arith.constant 1.000000e+00 : f32
    %260 = vector.broadcast %cst_87 : f32 to vector<8x128xf32>
    %261 = arith.addf %260, %259 : vector<8x128xf32>
    %262 = arith.divf %260, %261 : vector<8x128xf32>
    %263 = vector.extract_strided_slice %231 {offsets = [0, 128], sizes = [8, 128], strides = [1, 1]} : vector<8x512xf32> to vector<8x128xf32>
    %264 = arith.negf %263 : vector<8x128xf32>
    %265 = math.exp %264 : vector<8x128xf32>
    %cst_88 = arith.constant 1.000000e+00 : f32
    %266 = vector.broadcast %cst_88 : f32 to vector<8x128xf32>
    %267 = arith.addf %266, %265 : vector<8x128xf32>
    %268 = arith.divf %266, %267 : vector<8x128xf32>
    %269 = vector.extract_strided_slice %231 {offsets = [0, 256], sizes = [8, 128], strides = [1, 1]} : vector<8x512xf32> to vector<8x128xf32>
    %270 = math.tanh %269 : vector<8x128xf32>
    %271 = vector.extract_strided_slice %231 {offsets = [0, 384], sizes = [8, 128], strides = [1, 1]} : vector<8x512xf32> to vector<8x128xf32>
    %272 = arith.negf %271 : vector<8x128xf32>
    %273 = math.exp %272 : vector<8x128xf32>
    %cst_89 = arith.constant 1.000000e+00 : f32
    %274 = vector.broadcast %cst_89 : f32 to vector<8x128xf32>
    %275 = arith.addf %274, %273 : vector<8x128xf32>
    %276 = arith.divf %274, %275 : vector<8x128xf32>
    %277 = arith.mulf %268, %212 : vector<8x128xf32>
    %278 = arith.mulf %262, %270 : vector<8x128xf32>
    %279 = arith.addf %277, %278 : vector<8x128xf32>
    %280 = math.tanh %279 : vector<8x128xf32>
    %281 = arith.mulf %276, %280 : vector<8x128xf32>
    %282 = vector.broadcast %c2_i32 : i32 to vector<8x128xi32>
    %283 = arith.cmpi sgt, %14, %282 : vector<8x128xi32>
    %284 = vector.broadcast %213 : i32 to vector<8x128xi32>
    %285 = arith.cmpi sgt, %14, %284 : vector<8x128xi32>
    %cst_90 = arith.constant 0.000000e+00 : f32
    %286 = vector.broadcast %cst_90 : f32 to vector<8x128xf32>
    %287 = arith.select %283, %256, %286 : vector<8x128xi1>, vector<8x128xf32>
    %288 = arith.truncf %287 : vector<8x128xf32> to vector<8x128xbf16>
    %289 = arith.index_cast %c2_i32 : i32 to index
    %c0_91 = arith.constant 0 : index
    %c0_92 = arith.constant 0 : index
    %290 = vector.load %arg7[%289, %c0_91, %c0_92] : memref<8x8x128xbf16, #tpu.memory_space<vmem>>, vector<1x8x128xbf16>
    %291 = vector.shape_cast %290 : vector<1x8x128xbf16> to vector<8x128xbf16>
    %292 = vector.shape_cast %288 : vector<8x128xbf16> to vector<1x8x128xbf16>
    tpu.vector_store %arg7[%289, %c0_91, %c0_92], %292 {strides = array<i32>} : memref<8x8x128xbf16, #tpu.memory_space<vmem>>, vector<1x8x128xbf16>,
    %cst_93 = arith.constant 0.000000e+00 : f32
    %293 = vector.broadcast %cst_93 : f32 to vector<8x128xf32>
    %294 = arith.select %285, %281, %293 : vector<8x128xi1>, vector<8x128xf32>
    %295 = arith.truncf %294 : vector<8x128xf32> to vector<8x128xbf16>
    %296 = arith.index_cast %213 : i32 to index
    %c0_94 = arith.constant 0 : index
    %c0_95 = arith.constant 0 : index
    %297 = vector.load %arg8[%296, %c0_94, %c0_95] : memref<8x8x128xbf16, #tpu.memory_space<vmem>>, vector<1x8x128xbf16>
    %298 = vector.shape_cast %297 : vector<1x8x128xbf16> to vector<8x128xbf16>
    %299 = vector.shape_cast %295 : vector<8x128xbf16> to vector<1x8x128xbf16>
    tpu.vector_store %arg8[%296, %c0_94, %c0_95], %299 {strides = array<i32>} : memref<8x8x128xbf16, #tpu.memory_space<vmem>>, vector<1x8x128xbf16>,
    %300 = arith.select %283, %256, %209 : vector<8x128xi1>, vector<8x128xf32>
    %301 = arith.select %283, %254, %210 : vector<8x128xi1>, vector<8x128xf32>
    %302 = arith.select %285, %281, %211 : vector<8x128xi1>, vector<8x128xf32>
    %303 = arith.select %285, %279, %212 : vector<8x128xi1>, vector<8x128xf32>
    %c3_i32 = arith.constant 3 : i32
    %c7_i32_96 = arith.constant 7 : i32
    %304 = arith.subi %c7_i32_96, %c3_i32 : i32
    %305 = arith.index_cast %c3_i32 : i32 to index
    %c0_97 = arith.constant 0 : index
    %c0_98 = arith.constant 0 : index
    %306 = vector.load %arg9[%305, %c0_97, %c0_98] : memref<8x8x512xbf16, #tpu.memory_space<vmem>>, vector<1x8x512xbf16>
    %307 = vector.shape_cast %306 : vector<1x8x512xbf16> to vector<8x512xbf16>
    %308 = arith.extf %307 : vector<8x512xbf16> to vector<8x512xf32>
    %309 = vector.broadcast %20 : vector<1x512xf32> to vector<8x512xf32>
    %310 = arith.addf %308, %309 : vector<8x512xf32>
    %311 = arith.truncf %300 : vector<8x128xf32> to vector<8x128xbf16>
    %cst_99 = arith.constant dense<0.000000e+00> : vector<8x512xf32>
    %312 = tpu.matmul %311, %16, %cst_99 {dimension_numbers = #tpu.dot_dimension_numbers<[1], [0], [0], [1], [0, 0, 1, 1], [], []>} : vector<8x128xbf16>, vector<128x512xbf16>, vector<8x512xf32> -> vector<8x512xf32>
    %313 = arith.addf %310, %312 : vector<8x512xf32>
    %314 = arith.index_cast %304 : i32 to index
    %c0_100 = arith.constant 0 : index
    %c0_101 = arith.constant 0 : index
    %315 = vector.load %arg10[%314, %c0_100, %c0_101] : memref<8x8x512xbf16, #tpu.memory_space<vmem>>, vector<1x8x512xbf16>
    %316 = vector.shape_cast %315 : vector<1x8x512xbf16> to vector<8x512xbf16>
    %317 = arith.extf %316 : vector<8x512xbf16> to vector<8x512xf32>
    %318 = vector.broadcast %22 : vector<1x512xf32> to vector<8x512xf32>
    %319 = arith.addf %317, %318 : vector<8x512xf32>
    %320 = arith.truncf %302 : vector<8x128xf32> to vector<8x128xbf16>
    %cst_102 = arith.constant dense<0.000000e+00> : vector<8x512xf32>
    %321 = tpu.matmul %320, %18, %cst_102 {dimension_numbers = #tpu.dot_dimension_numbers<[1], [0], [0], [1], [0, 0, 1, 1], [], []>} : vector<8x128xbf16>, vector<128x512xbf16>, vector<8x512xf32> -> vector<8x512xf32>
    %322 = arith.addf %319, %321 : vector<8x512xf32>
    %323 = vector.extract_strided_slice %313 {offsets = [0, 0], sizes = [8, 128], strides = [1, 1]} : vector<8x512xf32> to vector<8x128xf32>
    %324 = arith.negf %323 : vector<8x128xf32>
    %325 = math.exp %324 : vector<8x128xf32>
    %cst_103 = arith.constant 1.000000e+00 : f32
    %326 = vector.broadcast %cst_103 : f32 to vector<8x128xf32>
    %327 = arith.addf %326, %325 : vector<8x128xf32>
    %328 = arith.divf %326, %327 : vector<8x128xf32>
    %329 = vector.extract_strided_slice %313 {offsets = [0, 128], sizes = [8, 128], strides = [1, 1]} : vector<8x512xf32> to vector<8x128xf32>
    %330 = arith.negf %329 : vector<8x128xf32>
    %331 = math.exp %330 : vector<8x128xf32>
    %cst_104 = arith.constant 1.000000e+00 : f32
    %332 = vector.broadcast %cst_104 : f32 to vector<8x128xf32>
    %333 = arith.addf %332, %331 : vector<8x128xf32>
    %334 = arith.divf %332, %333 : vector<8x128xf32>
    %335 = vector.extract_strided_slice %313 {offsets = [0, 256], sizes = [8, 128], strides = [1, 1]} : vector<8x512xf32> to vector<8x128xf32>
    %336 = math.tanh %335 : vector<8x128xf32>
    %337 = vector.extract_strided_slice %313 {offsets = [0, 384], sizes = [8, 128], strides = [1, 1]} : vector<8x512xf32> to vector<8x128xf32>
    %338 = arith.negf %337 : vector<8x128xf32>
    %339 = math.exp %338 : vector<8x128xf32>
    %cst_105 = arith.constant 1.000000e+00 : f32
    %340 = vector.broadcast %cst_105 : f32 to vector<8x128xf32>
    %341 = arith.addf %340, %339 : vector<8x128xf32>
    %342 = arith.divf %340, %341 : vector<8x128xf32>
    %343 = arith.mulf %334, %301 : vector<8x128xf32>
    %344 = arith.mulf %328, %336 : vector<8x128xf32>
    %345 = arith.addf %343, %344 : vector<8x128xf32>
    %346 = math.tanh %345 : vector<8x128xf32>
    %347 = arith.mulf %342, %346 : vector<8x128xf32>
    %348 = vector.extract_strided_slice %322 {offsets = [0, 0], sizes = [8, 128], strides = [1, 1]} : vector<8x512xf32> to vector<8x128xf32>
    %349 = arith.negf %348 : vector<8x128xf32>
    %350 = math.exp %349 : vector<8x128xf32>
    %cst_106 = arith.constant 1.000000e+00 : f32
    %351 = vector.broadcast %cst_106 : f32 to vector<8x128xf32>
    %352 = arith.addf %351, %350 : vector<8x128xf32>
    %353 = arith.divf %351, %352 : vector<8x128xf32>
    %354 = vector.extract_strided_slice %322 {offsets = [0, 128], sizes = [8, 128], strides = [1, 1]} : vector<8x512xf32> to vector<8x128xf32>
    %355 = arith.negf %354 : vector<8x128xf32>
    %356 = math.exp %355 : vector<8x128xf32>
    %cst_107 = arith.constant 1.000000e+00 : f32
    %357 = vector.broadcast %cst_107 : f32 to vector<8x128xf32>
    %358 = arith.addf %357, %356 : vector<8x128xf32>
    %359 = arith.divf %357, %358 : vector<8x128xf32>
    %360 = vector.extract_strided_slice %322 {offsets = [0, 256], sizes = [8, 128], strides = [1, 1]} : vector<8x512xf32> to vector<8x128xf32>
    %361 = math.tanh %360 : vector<8x128xf32>
    %362 = vector.extract_strided_slice %322 {offsets = [0, 384], sizes = [8, 128], strides = [1, 1]} : vector<8x512xf32> to vector<8x128xf32>
    %363 = arith.negf %362 : vector<8x128xf32>
    %364 = math.exp %363 : vector<8x128xf32>
    %cst_108 = arith.constant 1.000000e+00 : f32
    %365 = vector.broadcast %cst_108 : f32 to vector<8x128xf32>
    %366 = arith.addf %365, %364 : vector<8x128xf32>
    %367 = arith.divf %365, %366 : vector<8x128xf32>
    %368 = arith.mulf %359, %303 : vector<8x128xf32>
    %369 = arith.mulf %353, %361 : vector<8x128xf32>
    %370 = arith.addf %368, %369 : vector<8x128xf32>
    %371 = math.tanh %370 : vector<8x128xf32>
    %372 = arith.mulf %367, %371 : vector<8x128xf32>
    %373 = vector.broadcast %c3_i32 : i32 to vector<8x128xi32>
    %374 = arith.cmpi sgt, %14, %373 : vector<8x128xi32>
    %375 = vector.broadcast %304 : i32 to vector<8x128xi32>
    %376 = arith.cmpi sgt, %14, %375 : vector<8x128xi32>
    %cst_109 = arith.constant 0.000000e+00 : f32
    %377 = vector.broadcast %cst_109 : f32 to vector<8x128xf32>
    %378 = arith.select %374, %347, %377 : vector<8x128xi1>, vector<8x128xf32>
    %379 = arith.truncf %378 : vector<8x128xf32> to vector<8x128xbf16>
    %380 = arith.index_cast %c3_i32 : i32 to index
    %c0_110 = arith.constant 0 : index
    %c0_111 = arith.constant 0 : index
    %381 = vector.load %arg7[%380, %c0_110, %c0_111] : memref<8x8x128xbf16, #tpu.memory_space<vmem>>, vector<1x8x128xbf16>
    %382 = vector.shape_cast %381 : vector<1x8x128xbf16> to vector<8x128xbf16>
    %383 = vector.shape_cast %379 : vector<8x128xbf16> to vector<1x8x128xbf16>
    tpu.vector_store %arg7[%380, %c0_110, %c0_111], %383 {strides = array<i32>} : memref<8x8x128xbf16, #tpu.memory_space<vmem>>, vector<1x8x128xbf16>,
    %cst_112 = arith.constant 0.000000e+00 : f32
    %384 = vector.broadcast %cst_112 : f32 to vector<8x128xf32>
    %385 = arith.select %376, %372, %384 : vector<8x128xi1>, vector<8x128xf32>
    %386 = arith.truncf %385 : vector<8x128xf32> to vector<8x128xbf16>
    %387 = arith.index_cast %304 : i32 to index
    %c0_113 = arith.constant 0 : index
    %c0_114 = arith.constant 0 : index
    %388 = vector.load %arg8[%387, %c0_113, %c0_114] : memref<8x8x128xbf16, #tpu.memory_space<vmem>>, vector<1x8x128xbf16>
    %389 = vector.shape_cast %388 : vector<1x8x128xbf16> to vector<8x128xbf16>
    %390 = vector.shape_cast %386 : vector<8x128xbf16> to vector<1x8x128xbf16>
    tpu.vector_store %arg8[%387, %c0_113, %c0_114], %390 {strides = array<i32>} : memref<8x8x128xbf16, #tpu.memory_space<vmem>>, vector<1x8x128xbf16>,
    %391 = arith.select %374, %347, %300 : vector<8x128xi1>, vector<8x128xf32>
    %392 = arith.select %374, %345, %301 : vector<8x128xi1>, vector<8x128xf32>
    %393 = arith.select %376, %372, %302 : vector<8x128xi1>, vector<8x128xf32>
    %394 = arith.select %376, %370, %303 : vector<8x128xi1>, vector<8x128xf32>
    %c4_i32 = arith.constant 4 : i32
    %c7_i32_115 = arith.constant 7 : i32
    %395 = arith.subi %c7_i32_115, %c4_i32 : i32
    %396 = arith.index_cast %c4_i32 : i32 to index
    %c0_116 = arith.constant 0 : index
    %c0_117 = arith.constant 0 : index
    %397 = vector.load %arg9[%396, %c0_116, %c0_117] : memref<8x8x512xbf16, #tpu.memory_space<vmem>>, vector<1x8x512xbf16>
    %398 = vector.shape_cast %397 : vector<1x8x512xbf16> to vector<8x512xbf16>
    %399 = arith.extf %398 : vector<8x512xbf16> to vector<8x512xf32>
    %400 = vector.broadcast %20 : vector<1x512xf32> to vector<8x512xf32>
    %401 = arith.addf %399, %400 : vector<8x512xf32>
    %402 = arith.truncf %391 : vector<8x128xf32> to vector<8x128xbf16>
    %cst_118 = arith.constant dense<0.000000e+00> : vector<8x512xf32>
    %403 = tpu.matmul %402, %16, %cst_118 {dimension_numbers = #tpu.dot_dimension_numbers<[1], [0], [0], [1], [0, 0, 1, 1], [], []>} : vector<8x128xbf16>, vector<128x512xbf16>, vector<8x512xf32> -> vector<8x512xf32>
    %404 = arith.addf %401, %403 : vector<8x512xf32>
    %405 = arith.index_cast %395 : i32 to index
    %c0_119 = arith.constant 0 : index
    %c0_120 = arith.constant 0 : index
    %406 = vector.load %arg10[%405, %c0_119, %c0_120] : memref<8x8x512xbf16, #tpu.memory_space<vmem>>, vector<1x8x512xbf16>
    %407 = vector.shape_cast %406 : vector<1x8x512xbf16> to vector<8x512xbf16>
    %408 = arith.extf %407 : vector<8x512xbf16> to vector<8x512xf32>
    %409 = vector.broadcast %22 : vector<1x512xf32> to vector<8x512xf32>
    %410 = arith.addf %408, %409 : vector<8x512xf32>
    %411 = arith.truncf %393 : vector<8x128xf32> to vector<8x128xbf16>
    %cst_121 = arith.constant dense<0.000000e+00> : vector<8x512xf32>
    %412 = tpu.matmul %411, %18, %cst_121 {dimension_numbers = #tpu.dot_dimension_numbers<[1], [0], [0], [1], [0, 0, 1, 1], [], []>} : vector<8x128xbf16>, vector<128x512xbf16>, vector<8x512xf32> -> vector<8x512xf32>
    %413 = arith.addf %410, %412 : vector<8x512xf32>
    %414 = vector.extract_strided_slice %404 {offsets = [0, 0], sizes = [8, 128], strides = [1, 1]} : vector<8x512xf32> to vector<8x128xf32>
    %415 = arith.negf %414 : vector<8x128xf32>
    %416 = math.exp %415 : vector<8x128xf32>
    %cst_122 = arith.constant 1.000000e+00 : f32
    %417 = vector.broadcast %cst_122 : f32 to vector<8x128xf32>
    %418 = arith.addf %417, %416 : vector<8x128xf32>
    %419 = arith.divf %417, %418 : vector<8x128xf32>
    %420 = vector.extract_strided_slice %404 {offsets = [0, 128], sizes = [8, 128], strides = [1, 1]} : vector<8x512xf32> to vector<8x128xf32>
    %421 = arith.negf %420 : vector<8x128xf32>
    %422 = math.exp %421 : vector<8x128xf32>
    %cst_123 = arith.constant 1.000000e+00 : f32
    %423 = vector.broadcast %cst_123 : f32 to vector<8x128xf32>
    %424 = arith.addf %423, %422 : vector<8x128xf32>
    %425 = arith.divf %423, %424 : vector<8x128xf32>
    %426 = vector.extract_strided_slice %404 {offsets = [0, 256], sizes = [8, 128], strides = [1, 1]} : vector<8x512xf32> to vector<8x128xf32>
    %427 = math.tanh %426 : vector<8x128xf32>
    %428 = vector.extract_strided_slice %404 {offsets = [0, 384], sizes = [8, 128], strides = [1, 1]} : vector<8x512xf32> to vector<8x128xf32>
    %429 = arith.negf %428 : vector<8x128xf32>
    %430 = math.exp %429 : vector<8x128xf32>
    %cst_124 = arith.constant 1.000000e+00 : f32
    %431 = vector.broadcast %cst_124 : f32 to vector<8x128xf32>
    %432 = arith.addf %431, %430 : vector<8x128xf32>
    %433 = arith.divf %431, %432 : vector<8x128xf32>
    %434 = arith.mulf %425, %392 : vector<8x128xf32>
    %435 = arith.mulf %419, %427 : vector<8x128xf32>
    %436 = arith.addf %434, %435 : vector<8x128xf32>
    %437 = math.tanh %436 : vector<8x128xf32>
    %438 = arith.mulf %433, %437 : vector<8x128xf32>
    %439 = vector.extract_strided_slice %413 {offsets = [0, 0], sizes = [8, 128], strides = [1, 1]} : vector<8x512xf32> to vector<8x128xf32>
    %440 = arith.negf %439 : vector<8x128xf32>
    %441 = math.exp %440 : vector<8x128xf32>
    %cst_125 = arith.constant 1.000000e+00 : f32
    %442 = vector.broadcast %cst_125 : f32 to vector<8x128xf32>
    %443 = arith.addf %442, %441 : vector<8x128xf32>
    %444 = arith.divf %442, %443 : vector<8x128xf32>
    %445 = vector.extract_strided_slice %413 {offsets = [0, 128], sizes = [8, 128], strides = [1, 1]} : vector<8x512xf32> to vector<8x128xf32>
    %446 = arith.negf %445 : vector<8x128xf32>
    %447 = math.exp %446 : vector<8x128xf32>
    %cst_126 = arith.constant 1.000000e+00 : f32
    %448 = vector.broadcast %cst_126 : f32 to vector<8x128xf32>
    %449 = arith.addf %448, %447 : vector<8x128xf32>
    %450 = arith.divf %448, %449 : vector<8x128xf32>
    %451 = vector.extract_strided_slice %413 {offsets = [0, 256], sizes = [8, 128], strides = [1, 1]} : vector<8x512xf32> to vector<8x128xf32>
    %452 = math.tanh %451 : vector<8x128xf32>
    %453 = vector.extract_strided_slice %413 {offsets = [0, 384], sizes = [8, 128], strides = [1, 1]} : vector<8x512xf32> to vector<8x128xf32>
    %454 = arith.negf %453 : vector<8x128xf32>
    %455 = math.exp %454 : vector<8x128xf32>
    %cst_127 = arith.constant 1.000000e+00 : f32
    %456 = vector.broadcast %cst_127 : f32 to vector<8x128xf32>
    %457 = arith.addf %456, %455 : vector<8x128xf32>
    %458 = arith.divf %456, %457 : vector<8x128xf32>
    %459 = arith.mulf %450, %394 : vector<8x128xf32>
    %460 = arith.mulf %444, %452 : vector<8x128xf32>
    %461 = arith.addf %459, %460 : vector<8x128xf32>
    %462 = math.tanh %461 : vector<8x128xf32>
    %463 = arith.mulf %458, %462 : vector<8x128xf32>
    %464 = vector.broadcast %c4_i32 : i32 to vector<8x128xi32>
    %465 = arith.cmpi sgt, %14, %464 : vector<8x128xi32>
    %466 = vector.broadcast %395 : i32 to vector<8x128xi32>
    %467 = arith.cmpi sgt, %14, %466 : vector<8x128xi32>
    %cst_128 = arith.constant 0.000000e+00 : f32
    %468 = vector.broadcast %cst_128 : f32 to vector<8x128xf32>
    %469 = arith.select %465, %438, %468 : vector<8x128xi1>, vector<8x128xf32>
    %470 = arith.truncf %469 : vector<8x128xf32> to vector<8x128xbf16>
    %471 = arith.index_cast %c4_i32 : i32 to index
    %c0_129 = arith.constant 0 : index
    %c0_130 = arith.constant 0 : index
    %472 = vector.load %arg7[%471, %c0_129, %c0_130] : memref<8x8x128xbf16, #tpu.memory_space<vmem>>, vector<1x8x128xbf16>
    %473 = vector.shape_cast %472 : vector<1x8x128xbf16> to vector<8x128xbf16>
    %474 = vector.shape_cast %470 : vector<8x128xbf16> to vector<1x8x128xbf16>
    tpu.vector_store %arg7[%471, %c0_129, %c0_130], %474 {strides = array<i32>} : memref<8x8x128xbf16, #tpu.memory_space<vmem>>, vector<1x8x128xbf16>,
    %cst_131 = arith.constant 0.000000e+00 : f32
    %475 = vector.broadcast %cst_131 : f32 to vector<8x128xf32>
    %476 = arith.select %467, %463, %475 : vector<8x128xi1>, vector<8x128xf32>
    %477 = arith.truncf %476 : vector<8x128xf32> to vector<8x128xbf16>
    %478 = arith.index_cast %395 : i32 to index
    %c0_132 = arith.constant 0 : index
    %c0_133 = arith.constant 0 : index
    %479 = vector.load %arg8[%478, %c0_132, %c0_133] : memref<8x8x128xbf16, #tpu.memory_space<vmem>>, vector<1x8x128xbf16>
    %480 = vector.shape_cast %479 : vector<1x8x128xbf16> to vector<8x128xbf16>
    %481 = vector.shape_cast %477 : vector<8x128xbf16> to vector<1x8x128xbf16>
    tpu.vector_store %arg8[%478, %c0_132, %c0_133], %481 {strides = array<i32>} : memref<8x8x128xbf16, #tpu.memory_space<vmem>>, vector<1x8x128xbf16>,
    %482 = arith.select %465, %438, %391 : vector<8x128xi1>, vector<8x128xf32>
    %483 = arith.select %465, %436, %392 : vector<8x128xi1>, vector<8x128xf32>
    %484 = arith.select %467, %463, %393 : vector<8x128xi1>, vector<8x128xf32>
    %485 = arith.select %467, %461, %394 : vector<8x128xi1>, vector<8x128xf32>
    %c5_i32 = arith.constant 5 : i32
    %c7_i32_134 = arith.constant 7 : i32
    %486 = arith.subi %c7_i32_134, %c5_i32 : i32
    %487 = arith.index_cast %c5_i32 : i32 to index
    %c0_135 = arith.constant 0 : index
    %c0_136 = arith.constant 0 : index
    %488 = vector.load %arg9[%487, %c0_135, %c0_136] : memref<8x8x512xbf16, #tpu.memory_space<vmem>>, vector<1x8x512xbf16>
    %489 = vector.shape_cast %488 : vector<1x8x512xbf16> to vector<8x512xbf16>
    %490 = arith.extf %489 : vector<8x512xbf16> to vector<8x512xf32>
    %491 = vector.broadcast %20 : vector<1x512xf32> to vector<8x512xf32>
    %492 = arith.addf %490, %491 : vector<8x512xf32>
    %493 = arith.truncf %482 : vector<8x128xf32> to vector<8x128xbf16>
    %cst_137 = arith.constant dense<0.000000e+00> : vector<8x512xf32>
    %494 = tpu.matmul %493, %16, %cst_137 {dimension_numbers = #tpu.dot_dimension_numbers<[1], [0], [0], [1], [0, 0, 1, 1], [], []>} : vector<8x128xbf16>, vector<128x512xbf16>, vector<8x512xf32> -> vector<8x512xf32>
    %495 = arith.addf %492, %494 : vector<8x512xf32>
    %496 = arith.index_cast %486 : i32 to index
    %c0_138 = arith.constant 0 : index
    %c0_139 = arith.constant 0 : index
    %497 = vector.load %arg10[%496, %c0_138, %c0_139] : memref<8x8x512xbf16, #tpu.memory_space<vmem>>, vector<1x8x512xbf16>
    %498 = vector.shape_cast %497 : vector<1x8x512xbf16> to vector<8x512xbf16>
    %499 = arith.extf %498 : vector<8x512xbf16> to vector<8x512xf32>
    %500 = vector.broadcast %22 : vector<1x512xf32> to vector<8x512xf32>
    %501 = arith.addf %499, %500 : vector<8x512xf32>
    %502 = arith.truncf %484 : vector<8x128xf32> to vector<8x128xbf16>
    %cst_140 = arith.constant dense<0.000000e+00> : vector<8x512xf32>
    %503 = tpu.matmul %502, %18, %cst_140 {dimension_numbers = #tpu.dot_dimension_numbers<[1], [0], [0], [1], [0, 0, 1, 1], [], []>} : vector<8x128xbf16>, vector<128x512xbf16>, vector<8x512xf32> -> vector<8x512xf32>
    %504 = arith.addf %501, %503 : vector<8x512xf32>
    %505 = vector.extract_strided_slice %495 {offsets = [0, 0], sizes = [8, 128], strides = [1, 1]} : vector<8x512xf32> to vector<8x128xf32>
    %506 = arith.negf %505 : vector<8x128xf32>
    %507 = math.exp %506 : vector<8x128xf32>
    %cst_141 = arith.constant 1.000000e+00 : f32
    %508 = vector.broadcast %cst_141 : f32 to vector<8x128xf32>
    %509 = arith.addf %508, %507 : vector<8x128xf32>
    %510 = arith.divf %508, %509 : vector<8x128xf32>
    %511 = vector.extract_strided_slice %495 {offsets = [0, 128], sizes = [8, 128], strides = [1, 1]} : vector<8x512xf32> to vector<8x128xf32>
    %512 = arith.negf %511 : vector<8x128xf32>
    %513 = math.exp %512 : vector<8x128xf32>
    %cst_142 = arith.constant 1.000000e+00 : f32
    %514 = vector.broadcast %cst_142 : f32 to vector<8x128xf32>
    %515 = arith.addf %514, %513 : vector<8x128xf32>
    %516 = arith.divf %514, %515 : vector<8x128xf32>
    %517 = vector.extract_strided_slice %495 {offsets = [0, 256], sizes = [8, 128], strides = [1, 1]} : vector<8x512xf32> to vector<8x128xf32>
    %518 = math.tanh %517 : vector<8x128xf32>
    %519 = vector.extract_strided_slice %495 {offsets = [0, 384], sizes = [8, 128], strides = [1, 1]} : vector<8x512xf32> to vector<8x128xf32>
    %520 = arith.negf %519 : vector<8x128xf32>
    %521 = math.exp %520 : vector<8x128xf32>
    %cst_143 = arith.constant 1.000000e+00 : f32
    %522 = vector.broadcast %cst_143 : f32 to vector<8x128xf32>
    %523 = arith.addf %522, %521 : vector<8x128xf32>
    %524 = arith.divf %522, %523 : vector<8x128xf32>
    %525 = arith.mulf %516, %483 : vector<8x128xf32>
    %526 = arith.mulf %510, %518 : vector<8x128xf32>
    %527 = arith.addf %525, %526 : vector<8x128xf32>
    %528 = math.tanh %527 : vector<8x128xf32>
    %529 = arith.mulf %524, %528 : vector<8x128xf32>
    %530 = vector.extract_strided_slice %504 {offsets = [0, 0], sizes = [8, 128], strides = [1, 1]} : vector<8x512xf32> to vector<8x128xf32>
    %531 = arith.negf %530 : vector<8x128xf32>
    %532 = math.exp %531 : vector<8x128xf32>
    %cst_144 = arith.constant 1.000000e+00 : f32
    %533 = vector.broadcast %cst_144 : f32 to vector<8x128xf32>
    %534 = arith.addf %533, %532 : vector<8x128xf32>
    %535 = arith.divf %533, %534 : vector<8x128xf32>
    %536 = vector.extract_strided_slice %504 {offsets = [0, 128], sizes = [8, 128], strides = [1, 1]} : vector<8x512xf32> to vector<8x128xf32>
    %537 = arith.negf %536 : vector<8x128xf32>
    %538 = math.exp %537 : vector<8x128xf32>
    %cst_145 = arith.constant 1.000000e+00 : f32
    %539 = vector.broadcast %cst_145 : f32 to vector<8x128xf32>
    %540 = arith.addf %539, %538 : vector<8x128xf32>
    %541 = arith.divf %539, %540 : vector<8x128xf32>
    %542 = vector.extract_strided_slice %504 {offsets = [0, 256], sizes = [8, 128], strides = [1, 1]} : vector<8x512xf32> to vector<8x128xf32>
    %543 = math.tanh %542 : vector<8x128xf32>
    %544 = vector.extract_strided_slice %504 {offsets = [0, 384], sizes = [8, 128], strides = [1, 1]} : vector<8x512xf32> to vector<8x128xf32>
    %545 = arith.negf %544 : vector<8x128xf32>
    %546 = math.exp %545 : vector<8x128xf32>
    %cst_146 = arith.constant 1.000000e+00 : f32
    %547 = vector.broadcast %cst_146 : f32 to vector<8x128xf32>
    %548 = arith.addf %547, %546 : vector<8x128xf32>
    %549 = arith.divf %547, %548 : vector<8x128xf32>
    %550 = arith.mulf %541, %485 : vector<8x128xf32>
    %551 = arith.mulf %535, %543 : vector<8x128xf32>
    %552 = arith.addf %550, %551 : vector<8x128xf32>
    %553 = math.tanh %552 : vector<8x128xf32>
    %554 = arith.mulf %549, %553 : vector<8x128xf32>
    %555 = vector.broadcast %c5_i32 : i32 to vector<8x128xi32>
    %556 = arith.cmpi sgt, %14, %555 : vector<8x128xi32>
    %557 = vector.broadcast %486 : i32 to vector<8x128xi32>
    %558 = arith.cmpi sgt, %14, %557 : vector<8x128xi32>
    %cst_147 = arith.constant 0.000000e+00 : f32
    %559 = vector.broadcast %cst_147 : f32 to vector<8x128xf32>
    %560 = arith.select %556, %529, %559 : vector<8x128xi1>, vector<8x128xf32>
    %561 = arith.truncf %560 : vector<8x128xf32> to vector<8x128xbf16>
    %562 = arith.index_cast %c5_i32 : i32 to index
    %c0_148 = arith.constant 0 : index
    %c0_149 = arith.constant 0 : index
    %563 = vector.load %arg7[%562, %c0_148, %c0_149] : memref<8x8x128xbf16, #tpu.memory_space<vmem>>, vector<1x8x128xbf16>
    %564 = vector.shape_cast %563 : vector<1x8x128xbf16> to vector<8x128xbf16>
    %565 = vector.shape_cast %561 : vector<8x128xbf16> to vector<1x8x128xbf16>
    tpu.vector_store %arg7[%562, %c0_148, %c0_149], %565 {strides = array<i32>} : memref<8x8x128xbf16, #tpu.memory_space<vmem>>, vector<1x8x128xbf16>,
    %cst_150 = arith.constant 0.000000e+00 : f32
    %566 = vector.broadcast %cst_150 : f32 to vector<8x128xf32>
    %567 = arith.select %558, %554, %566 : vector<8x128xi1>, vector<8x128xf32>
    %568 = arith.truncf %567 : vector<8x128xf32> to vector<8x128xbf16>
    %569 = arith.index_cast %486 : i32 to index
    %c0_151 = arith.constant 0 : index
    %c0_152 = arith.constant 0 : index
    %570 = vector.load %arg8[%569, %c0_151, %c0_152] : memref<8x8x128xbf16, #tpu.memory_space<vmem>>, vector<1x8x128xbf16>
    %571 = vector.shape_cast %570 : vector<1x8x128xbf16> to vector<8x128xbf16>
    %572 = vector.shape_cast %568 : vector<8x128xbf16> to vector<1x8x128xbf16>
    tpu.vector_store %arg8[%569, %c0_151, %c0_152], %572 {strides = array<i32>} : memref<8x8x128xbf16, #tpu.memory_space<vmem>>, vector<1x8x128xbf16>,
    %573 = arith.select %556, %529, %482 : vector<8x128xi1>, vector<8x128xf32>
    %574 = arith.select %556, %527, %483 : vector<8x128xi1>, vector<8x128xf32>
    %575 = arith.select %558, %554, %484 : vector<8x128xi1>, vector<8x128xf32>
    %576 = arith.select %558, %552, %485 : vector<8x128xi1>, vector<8x128xf32>
    %c6_i32 = arith.constant 6 : i32
    %c7_i32_153 = arith.constant 7 : i32
    %577 = arith.subi %c7_i32_153, %c6_i32 : i32
    %578 = arith.index_cast %c6_i32 : i32 to index
    %c0_154 = arith.constant 0 : index
    %c0_155 = arith.constant 0 : index
    %579 = vector.load %arg9[%578, %c0_154, %c0_155] : memref<8x8x512xbf16, #tpu.memory_space<vmem>>, vector<1x8x512xbf16>
    %580 = vector.shape_cast %579 : vector<1x8x512xbf16> to vector<8x512xbf16>
    %581 = arith.extf %580 : vector<8x512xbf16> to vector<8x512xf32>
    %582 = vector.broadcast %20 : vector<1x512xf32> to vector<8x512xf32>
    %583 = arith.addf %581, %582 : vector<8x512xf32>
    %584 = arith.truncf %573 : vector<8x128xf32> to vector<8x128xbf16>
    %cst_156 = arith.constant dense<0.000000e+00> : vector<8x512xf32>
    %585 = tpu.matmul %584, %16, %cst_156 {dimension_numbers = #tpu.dot_dimension_numbers<[1], [0], [0], [1], [0, 0, 1, 1], [], []>} : vector<8x128xbf16>, vector<128x512xbf16>, vector<8x512xf32> -> vector<8x512xf32>
    %586 = arith.addf %583, %585 : vector<8x512xf32>
    %587 = arith.index_cast %577 : i32 to index
    %c0_157 = arith.constant 0 : index
    %c0_158 = arith.constant 0 : index
    %588 = vector.load %arg10[%587, %c0_157, %c0_158] : memref<8x8x512xbf16, #tpu.memory_space<vmem>>, vector<1x8x512xbf16>
    %589 = vector.shape_cast %588 : vector<1x8x512xbf16> to vector<8x512xbf16>
    %590 = arith.extf %589 : vector<8x512xbf16> to vector<8x512xf32>
    %591 = vector.broadcast %22 : vector<1x512xf32> to vector<8x512xf32>
    %592 = arith.addf %590, %591 : vector<8x512xf32>
    %593 = arith.truncf %575 : vector<8x128xf32> to vector<8x128xbf16>
    %cst_159 = arith.constant dense<0.000000e+00> : vector<8x512xf32>
    %594 = tpu.matmul %593, %18, %cst_159 {dimension_numbers = #tpu.dot_dimension_numbers<[1], [0], [0], [1], [0, 0, 1, 1], [], []>} : vector<8x128xbf16>, vector<128x512xbf16>, vector<8x512xf32> -> vector<8x512xf32>
    %595 = arith.addf %592, %594 : vector<8x512xf32>
    %596 = vector.extract_strided_slice %586 {offsets = [0, 0], sizes = [8, 128], strides = [1, 1]} : vector<8x512xf32> to vector<8x128xf32>
    %597 = arith.negf %596 : vector<8x128xf32>
    %598 = math.exp %597 : vector<8x128xf32>
    %cst_160 = arith.constant 1.000000e+00 : f32
    %599 = vector.broadcast %cst_160 : f32 to vector<8x128xf32>
    %600 = arith.addf %599, %598 : vector<8x128xf32>
    %601 = arith.divf %599, %600 : vector<8x128xf32>
    %602 = vector.extract_strided_slice %586 {offsets = [0, 128], sizes = [8, 128], strides = [1, 1]} : vector<8x512xf32> to vector<8x128xf32>
    %603 = arith.negf %602 : vector<8x128xf32>
    %604 = math.exp %603 : vector<8x128xf32>
    %cst_161 = arith.constant 1.000000e+00 : f32
    %605 = vector.broadcast %cst_161 : f32 to vector<8x128xf32>
    %606 = arith.addf %605, %604 : vector<8x128xf32>
    %607 = arith.divf %605, %606 : vector<8x128xf32>
    %608 = vector.extract_strided_slice %586 {offsets = [0, 256], sizes = [8, 128], strides = [1, 1]} : vector<8x512xf32> to vector<8x128xf32>
    %609 = math.tanh %608 : vector<8x128xf32>
    %610 = vector.extract_strided_slice %586 {offsets = [0, 384], sizes = [8, 128], strides = [1, 1]} : vector<8x512xf32> to vector<8x128xf32>
    %611 = arith.negf %610 : vector<8x128xf32>
    %612 = math.exp %611 : vector<8x128xf32>
    %cst_162 = arith.constant 1.000000e+00 : f32
    %613 = vector.broadcast %cst_162 : f32 to vector<8x128xf32>
    %614 = arith.addf %613, %612 : vector<8x128xf32>
    %615 = arith.divf %613, %614 : vector<8x128xf32>
    %616 = arith.mulf %607, %574 : vector<8x128xf32>
    %617 = arith.mulf %601, %609 : vector<8x128xf32>
    %618 = arith.addf %616, %617 : vector<8x128xf32>
    %619 = math.tanh %618 : vector<8x128xf32>
    %620 = arith.mulf %615, %619 : vector<8x128xf32>
    %621 = vector.extract_strided_slice %595 {offsets = [0, 0], sizes = [8, 128], strides = [1, 1]} : vector<8x512xf32> to vector<8x128xf32>
    %622 = arith.negf %621 : vector<8x128xf32>
    %623 = math.exp %622 : vector<8x128xf32>
    %cst_163 = arith.constant 1.000000e+00 : f32
    %624 = vector.broadcast %cst_163 : f32 to vector<8x128xf32>
    %625 = arith.addf %624, %623 : vector<8x128xf32>
    %626 = arith.divf %624, %625 : vector<8x128xf32>
    %627 = vector.extract_strided_slice %595 {offsets = [0, 128], sizes = [8, 128], strides = [1, 1]} : vector<8x512xf32> to vector<8x128xf32>
    %628 = arith.negf %627 : vector<8x128xf32>
    %629 = math.exp %628 : vector<8x128xf32>
    %cst_164 = arith.constant 1.000000e+00 : f32
    %630 = vector.broadcast %cst_164 : f32 to vector<8x128xf32>
    %631 = arith.addf %630, %629 : vector<8x128xf32>
    %632 = arith.divf %630, %631 : vector<8x128xf32>
    %633 = vector.extract_strided_slice %595 {offsets = [0, 256], sizes = [8, 128], strides = [1, 1]} : vector<8x512xf32> to vector<8x128xf32>
    %634 = math.tanh %633 : vector<8x128xf32>
    %635 = vector.extract_strided_slice %595 {offsets = [0, 384], sizes = [8, 128], strides = [1, 1]} : vector<8x512xf32> to vector<8x128xf32>
    %636 = arith.negf %635 : vector<8x128xf32>
    %637 = math.exp %636 : vector<8x128xf32>
    %cst_165 = arith.constant 1.000000e+00 : f32
    %638 = vector.broadcast %cst_165 : f32 to vector<8x128xf32>
    %639 = arith.addf %638, %637 : vector<8x128xf32>
    %640 = arith.divf %638, %639 : vector<8x128xf32>
    %641 = arith.mulf %632, %576 : vector<8x128xf32>
    %642 = arith.mulf %626, %634 : vector<8x128xf32>
    %643 = arith.addf %641, %642 : vector<8x128xf32>
    %644 = math.tanh %643 : vector<8x128xf32>
    %645 = arith.mulf %640, %644 : vector<8x128xf32>
    %646 = vector.broadcast %c6_i32 : i32 to vector<8x128xi32>
    %647 = arith.cmpi sgt, %14, %646 : vector<8x128xi32>
    %648 = vector.broadcast %577 : i32 to vector<8x128xi32>
    %649 = arith.cmpi sgt, %14, %648 : vector<8x128xi32>
    %cst_166 = arith.constant 0.000000e+00 : f32
    %650 = vector.broadcast %cst_166 : f32 to vector<8x128xf32>
    %651 = arith.select %647, %620, %650 : vector<8x128xi1>, vector<8x128xf32>
    %652 = arith.truncf %651 : vector<8x128xf32> to vector<8x128xbf16>
    %653 = arith.index_cast %c6_i32 : i32 to index
    %c0_167 = arith.constant 0 : index
    %c0_168 = arith.constant 0 : index
    %654 = vector.load %arg7[%653, %c0_167, %c0_168] : memref<8x8x128xbf16, #tpu.memory_space<vmem>>, vector<1x8x128xbf16>
    %655 = vector.shape_cast %654 : vector<1x8x128xbf16> to vector<8x128xbf16>
    %656 = vector.shape_cast %652 : vector<8x128xbf16> to vector<1x8x128xbf16>
    tpu.vector_store %arg7[%653, %c0_167, %c0_168], %656 {strides = array<i32>} : memref<8x8x128xbf16, #tpu.memory_space<vmem>>, vector<1x8x128xbf16>,
    %cst_169 = arith.constant 0.000000e+00 : f32
    %657 = vector.broadcast %cst_169 : f32 to vector<8x128xf32>
    %658 = arith.select %649, %645, %657 : vector<8x128xi1>, vector<8x128xf32>
    %659 = arith.truncf %658 : vector<8x128xf32> to vector<8x128xbf16>
    %660 = arith.index_cast %577 : i32 to index
    %c0_170 = arith.constant 0 : index
    %c0_171 = arith.constant 0 : index
    %661 = vector.load %arg8[%660, %c0_170, %c0_171] : memref<8x8x128xbf16, #tpu.memory_space<vmem>>, vector<1x8x128xbf16>
    %662 = vector.shape_cast %661 : vector<1x8x128xbf16> to vector<8x128xbf16>
    %663 = vector.shape_cast %659 : vector<8x128xbf16> to vector<1x8x128xbf16>
    tpu.vector_store %arg8[%660, %c0_170, %c0_171], %663 {strides = array<i32>} : memref<8x8x128xbf16, #tpu.memory_space<vmem>>, vector<1x8x128xbf16>,
    %664 = arith.select %647, %620, %573 : vector<8x128xi1>, vector<8x128xf32>
    %665 = arith.select %647, %618, %574 : vector<8x128xi1>, vector<8x128xf32>
    %666 = arith.select %649, %645, %575 : vector<8x128xi1>, vector<8x128xf32>
    %667 = arith.select %649, %643, %576 : vector<8x128xi1>, vector<8x128xf32>
    %c7_i32_172 = arith.constant 7 : i32
    %c7_i32_173 = arith.constant 7 : i32
    %668 = arith.subi %c7_i32_173, %c7_i32_172 : i32
    %669 = arith.index_cast %c7_i32_172 : i32 to index
    %c0_174 = arith.constant 0 : index
    %c0_175 = arith.constant 0 : index
    %670 = vector.load %arg9[%669, %c0_174, %c0_175] : memref<8x8x512xbf16, #tpu.memory_space<vmem>>, vector<1x8x512xbf16>
    %671 = vector.shape_cast %670 : vector<1x8x512xbf16> to vector<8x512xbf16>
    %672 = arith.extf %671 : vector<8x512xbf16> to vector<8x512xf32>
    %673 = vector.broadcast %20 : vector<1x512xf32> to vector<8x512xf32>
    %674 = arith.addf %672, %673 : vector<8x512xf32>
    %675 = arith.truncf %664 : vector<8x128xf32> to vector<8x128xbf16>
    %cst_176 = arith.constant dense<0.000000e+00> : vector<8x512xf32>
    %676 = tpu.matmul %675, %16, %cst_176 {dimension_numbers = #tpu.dot_dimension_numbers<[1], [0], [0], [1], [0, 0, 1, 1], [], []>} : vector<8x128xbf16>, vector<128x512xbf16>, vector<8x512xf32> -> vector<8x512xf32>
    %677 = arith.addf %674, %676 : vector<8x512xf32>
    %678 = arith.index_cast %668 : i32 to index
    %c0_177 = arith.constant 0 : index
    %c0_178 = arith.constant 0 : index
    %679 = vector.load %arg10[%678, %c0_177, %c0_178] : memref<8x8x512xbf16, #tpu.memory_space<vmem>>, vector<1x8x512xbf16>
    %680 = vector.shape_cast %679 : vector<1x8x512xbf16> to vector<8x512xbf16>
    %681 = arith.extf %680 : vector<8x512xbf16> to vector<8x512xf32>
    %682 = vector.broadcast %22 : vector<1x512xf32> to vector<8x512xf32>
    %683 = arith.addf %681, %682 : vector<8x512xf32>
    %684 = arith.truncf %666 : vector<8x128xf32> to vector<8x128xbf16>
    %cst_179 = arith.constant dense<0.000000e+00> : vector<8x512xf32>
    %685 = tpu.matmul %684, %18, %cst_179 {dimension_numbers = #tpu.dot_dimension_numbers<[1], [0], [0], [1], [0, 0, 1, 1], [], []>} : vector<8x128xbf16>, vector<128x512xbf16>, vector<8x512xf32> -> vector<8x512xf32>
    %686 = arith.addf %683, %685 : vector<8x512xf32>
    %687 = vector.extract_strided_slice %677 {offsets = [0, 0], sizes = [8, 128], strides = [1, 1]} : vector<8x512xf32> to vector<8x128xf32>
    %688 = arith.negf %687 : vector<8x128xf32>
    %689 = math.exp %688 : vector<8x128xf32>
    %cst_180 = arith.constant 1.000000e+00 : f32
    %690 = vector.broadcast %cst_180 : f32 to vector<8x128xf32>
    %691 = arith.addf %690, %689 : vector<8x128xf32>
    %692 = arith.divf %690, %691 : vector<8x128xf32>
    %693 = vector.extract_strided_slice %677 {offsets = [0, 128], sizes = [8, 128], strides = [1, 1]} : vector<8x512xf32> to vector<8x128xf32>
    %694 = arith.negf %693 : vector<8x128xf32>
    %695 = math.exp %694 : vector<8x128xf32>
    %cst_181 = arith.constant 1.000000e+00 : f32
    %696 = vector.broadcast %cst_181 : f32 to vector<8x128xf32>
    %697 = arith.addf %696, %695 : vector<8x128xf32>
    %698 = arith.divf %696, %697 : vector<8x128xf32>
    %699 = vector.extract_strided_slice %677 {offsets = [0, 256], sizes = [8, 128], strides = [1, 1]} : vector<8x512xf32> to vector<8x128xf32>
    %700 = math.tanh %699 : vector<8x128xf32>
    %701 = vector.extract_strided_slice %677 {offsets = [0, 384], sizes = [8, 128], strides = [1, 1]} : vector<8x512xf32> to vector<8x128xf32>
    %702 = arith.negf %701 : vector<8x128xf32>
    %703 = math.exp %702 : vector<8x128xf32>
    %cst_182 = arith.constant 1.000000e+00 : f32
    %704 = vector.broadcast %cst_182 : f32 to vector<8x128xf32>
    %705 = arith.addf %704, %703 : vector<8x128xf32>
    %706 = arith.divf %704, %705 : vector<8x128xf32>
    %707 = arith.mulf %698, %665 : vector<8x128xf32>
    %708 = arith.mulf %692, %700 : vector<8x128xf32>
    %709 = arith.addf %707, %708 : vector<8x128xf32>
    %710 = math.tanh %709 : vector<8x128xf32>
    %711 = arith.mulf %706, %710 : vector<8x128xf32>
    %712 = vector.extract_strided_slice %686 {offsets = [0, 0], sizes = [8, 128], strides = [1, 1]} : vector<8x512xf32> to vector<8x128xf32>
    %713 = arith.negf %712 : vector<8x128xf32>
    %714 = math.exp %713 : vector<8x128xf32>
    %cst_183 = arith.constant 1.000000e+00 : f32
    %715 = vector.broadcast %cst_183 : f32 to vector<8x128xf32>
    %716 = arith.addf %715, %714 : vector<8x128xf32>
    %717 = arith.divf %715, %716 : vector<8x128xf32>
    %718 = vector.extract_strided_slice %686 {offsets = [0, 128], sizes = [8, 128], strides = [1, 1]} : vector<8x512xf32> to vector<8x128xf32>
    %719 = arith.negf %718 : vector<8x128xf32>
    %720 = math.exp %719 : vector<8x128xf32>
    %cst_184 = arith.constant 1.000000e+00 : f32
    %721 = vector.broadcast %cst_184 : f32 to vector<8x128xf32>
    %722 = arith.addf %721, %720 : vector<8x128xf32>
    %723 = arith.divf %721, %722 : vector<8x128xf32>
    %724 = vector.extract_strided_slice %686 {offsets = [0, 256], sizes = [8, 128], strides = [1, 1]} : vector<8x512xf32> to vector<8x128xf32>
    %725 = math.tanh %724 : vector<8x128xf32>
    %726 = vector.extract_strided_slice %686 {offsets = [0, 384], sizes = [8, 128], strides = [1, 1]} : vector<8x512xf32> to vector<8x128xf32>
    %727 = arith.negf %726 : vector<8x128xf32>
    %728 = math.exp %727 : vector<8x128xf32>
    %cst_185 = arith.constant 1.000000e+00 : f32
    %729 = vector.broadcast %cst_185 : f32 to vector<8x128xf32>
    %730 = arith.addf %729, %728 : vector<8x128xf32>
    %731 = arith.divf %729, %730 : vector<8x128xf32>
    %732 = arith.mulf %723, %667 : vector<8x128xf32>
    %733 = arith.mulf %717, %725 : vector<8x128xf32>
    %734 = arith.addf %732, %733 : vector<8x128xf32>
    %735 = math.tanh %734 : vector<8x128xf32>
    %736 = arith.mulf %731, %735 : vector<8x128xf32>
    %737 = vector.broadcast %c7_i32_172 : i32 to vector<8x128xi32>
    %738 = arith.cmpi sgt, %14, %737 : vector<8x128xi32>
    %739 = vector.broadcast %668 : i32 to vector<8x128xi32>
    %740 = arith.cmpi sgt, %14, %739 : vector<8x128xi32>
    %cst_186 = arith.constant 0.000000e+00 : f32
    %741 = vector.broadcast %cst_186 : f32 to vector<8x128xf32>
    %742 = arith.select %738, %711, %741 : vector<8x128xi1>, vector<8x128xf32>
    %743 = arith.truncf %742 : vector<8x128xf32> to vector<8x128xbf16>
    %744 = arith.index_cast %c7_i32_172 : i32 to index
    %c0_187 = arith.constant 0 : index
    %c0_188 = arith.constant 0 : index
    %745 = vector.load %arg7[%744, %c0_187, %c0_188] : memref<8x8x128xbf16, #tpu.memory_space<vmem>>, vector<1x8x128xbf16>
    %746 = vector.shape_cast %745 : vector<1x8x128xbf16> to vector<8x128xbf16>
    %747 = vector.shape_cast %743 : vector<8x128xbf16> to vector<1x8x128xbf16>
    tpu.vector_store %arg7[%744, %c0_187, %c0_188], %747 {strides = array<i32>} : memref<8x8x128xbf16, #tpu.memory_space<vmem>>, vector<1x8x128xbf16>,
    %cst_189 = arith.constant 0.000000e+00 : f32
    %748 = vector.broadcast %cst_189 : f32 to vector<8x128xf32>
    %749 = arith.select %740, %736, %748 : vector<8x128xi1>, vector<8x128xf32>
    %750 = arith.truncf %749 : vector<8x128xf32> to vector<8x128xbf16>
    %751 = arith.index_cast %668 : i32 to index
    %c0_190 = arith.constant 0 : index
    %c0_191 = arith.constant 0 : index
    %752 = vector.load %arg8[%751, %c0_190, %c0_191] : memref<8x8x128xbf16, #tpu.memory_space<vmem>>, vector<1x8x128xbf16>
    %753 = vector.shape_cast %752 : vector<1x8x128xbf16> to vector<8x128xbf16>
    %754 = vector.shape_cast %750 : vector<8x128xbf16> to vector<1x8x128xbf16>
    tpu.vector_store %arg8[%751, %c0_190, %c0_191], %754 {strides = array<i32>} : memref<8x8x128xbf16, #tpu.memory_space<vmem>>, vector<1x8x128xbf16>,
    %755 = arith.select %738, %711, %664 : vector<8x128xi1>, vector<8x128xf32>
    %756 = arith.select %738, %709, %665 : vector<8x128xi1>, vector<8x128xf32>
    %757 = arith.select %740, %736, %666 : vector<8x128xi1>, vector<8x128xf32>
    %758 = arith.select %740, %734, %667 : vector<8x128xi1>, vector<8x128xf32>
    %c8_i32 = arith.constant 8 : i32
    return
  }
}

</mosaic_0001>

<llo_original>
// kernel: tpu_custom_call.1
$region0: #{tpu_custom_call.1}
  #allocation0 [shape = 'u32[]', space=smem, size = 0x4, offset = 0x4, fixed_abs, tag = 'smem constant byte address 0x4 - core index']
  #allocation1 [shape = 'u32[72,128]{1,0:T(1,128)}', space=vmem, size = 0x9000, scoped, tag = 'internal scratch']
  #allocation2 [shape = 'bf16[8,8,512]{2,1,0:T(8,128)(2,1)}', space=vmem, size = 0x10000, scoped, tag = 'scratch operand']
  #allocation3 [shape = 'bf16[8,8,512]{2,1,0:T(8,128)(2,1)}', space=vmem, size = 0x10000, scoped, tag = 'scratch operand']
  %s0 = inlined_call_operand.hbm [shape: bf16[8,8,128], index: 0, kind: input, shape index: {}]
  %s1 = inlined_call_operand.hbm [shape: s32[8,128], index: 1, kind: input, shape index: {}]
  %s2 = inlined_call_operand.hbm [shape: bf16[2,128,512], index: 2, kind: input, shape index: {}]
  %s3 = inlined_call_operand.hbm [shape: bf16[2,128,512], index: 3, kind: input, shape index: {}]
  %s4 = inlined_call_operand.hbm [shape: f32[2,1,512], index: 4, kind: input, shape index: {}]
  %s5 = inlined_call_operand.hbm [shape: f32[2,8,128], index: 5, kind: input, shape index: {}]
  %s6 = inlined_call_operand.hbm [shape: f32[2,8,128], index: 6, kind: input, shape index: {}]
  %s7 = inlined_call_operand.hbm [shape: bf16[8,8,128], index: 7, kind: output, shape index: {0}]
  %s8 = inlined_call_operand.hbm [shape: bf16[8,8,128], index: 8, kind: output, shape index: {1}]
  %9 = xla_tuple %s7, %s8
  %s10 = sld [smem:[#allocation0]]
  $region74: #{tpu_custom_call.1} parent=0
    _
  %s12 = ssub.s32 1, %s10
  %s13 = scalar_select 0, %s12, %s10
  $region1: #{tpu_custom_call.1} parent=0
    #allocation4 [shape = 'u8[16384]{0}', space=vmem, size = 0x4000, scoped, tag = 'input window, operand 0, single buffered']
    #allocation5 [shape = 's32[1]{0}', space=sflag, size = 0x4, scoped, tag = 'scoped memory for tpu_custom_call.1']
    #allocation6 [shape = 's32[1]{0}', space=sflag, size = 0x4, scoped, tag = 'scoped memory for tpu_custom_call.1']
    #allocation7 [shape = 'u8[4096]{0}', space=vmem, size = 0x1000, scoped, tag = 'input window, operand 1, single buffered']
    #allocation8 [shape = 's32[1]{0}', space=sflag, size = 0x4, scoped, tag = 'scoped memory for tpu_custom_call.1']
    #allocation9 [shape = 'u8[262144]{0}', space=vmem, size = 0x40000, scoped, tag = 'input window, operand 2, single buffered']
    #allocation10 [shape = 'u8[262144]{0}', space=vmem, size = 0x40000, scoped, tag = 'input window, operand 3, single buffered']
    #allocation11 [shape = 's32[1]{0}', space=sflag, size = 0x4, scoped, tag = 'scoped memory for tpu_custom_call.1']
    #allocation12 [shape = 'u8[4096]{0}', space=vmem, size = 0x1000, scoped, tag = 'input window, operand 4, single buffered']
    #allocation13 [shape = 'u8[8192]{0}', space=vmem, size = 0x2000, scoped, tag = 'input window, operand 5, single buffered']
    #allocation14 [shape = 's32[1]{0}', space=sflag, size = 0x4, scoped, tag = 'scoped memory for tpu_custom_call.1']
    #allocation15 [shape = 'u8[8192]{0}', space=vmem, size = 0x2000, scoped, tag = 'input window, operand 6, single buffered']
    #allocation16 [shape = 'u8[16384]{0}', space=vmem, size = 0x4000, scoped, tag = 'output window, operand 0, single buffered']
    #allocation17 [shape = 'u8[16384]{0}', space=vmem, size = 0x4000, scoped, tag = 'output window, operand 1, single buffered']
    #allocation18 [shape = 's32[1]{0}', space=sflag, size = 0x4, scoped, tag = 'scoped memory for tpu_custom_call.1']
    %14 = vsyncpa [#allocation5], 0
    %15 = vsyncpa [#allocation8], 0
    %16 = vsyncpa [#allocation11], 0
    %17 = vsyncpa [#allocation14], 0
    %18 = vsyncpa [#allocation6], 0
    %19 = vsyncpa [#allocation18], 0
    // Predicated region
    $region2: #{tpu_custom_call.1} parent=1 // pred_check
      _
    $region3: #{tpu_custom_call.1} parent=1 // pred_check_branch
      %21 = sbr.rel (0) target = $region5
    $region4: #{tpu_custom_call.1} parent=1 // pred_region
      %23 = vsyncadd [#allocation5], 0
      %s24 = sshll.u32 %s0, 4
      %s25 = int_to_ptr.hbm [resolvable:$true] %s24
      %s26 = sshll.u32 [#allocation4], 4
      %s27 = int_to_ptr.vmem [resolvable:$true] %s26
      %32 = dma.hbm_to_vmem [thread:$0]  %s25, 512, %s27, [#allocation5], 64, 64, 4
    $region5: #{tpu_custom_call.1} parent=1 // pred_fallthru
      _
    // Predicated region
    $region6: #{tpu_custom_call.1} parent=1 // pred_check
      _
    $region7: #{tpu_custom_call.1} parent=1 // pred_check_branch
      %34 = sbr.rel (0) target = $region9
    $region8: #{tpu_custom_call.1} parent=1 // pred_region
      %36 = vsyncadd [#allocation8], 0
      %s38 = sshll.u32 %s1, 4
      %s39 = int_to_ptr.hbm [resolvable:$true] %s38
      %s40 = sshll.u32 [#allocation7], 4
      %s41 = int_to_ptr.vmem [resolvable:$true] %s40
      %43 = dma.hbm_to_vmem [thread:$0]  %s39, 128, %s41, [#allocation8]
    $region9: #{tpu_custom_call.1} parent=1 // pred_fallthru
      _
    // Predicated region
    $region10: #{tpu_custom_call.1} parent=1 // pred_check
      _
    $region11: #{tpu_custom_call.1} parent=1 // pred_check_branch
      %45 = sbr.rel (0) target = $region13
    $region12: #{tpu_custom_call.1} parent=1 // pred_region
      %47 = vsyncadd [#allocation8], 0
      %s48 = sshll.u32 %s2, 4
      %s49 = int_to_ptr.hbm [resolvable:$true] %s48
      %s50 = sshll.u32 [#allocation9], 4
      %s51 = int_to_ptr.vmem [resolvable:$true] %s50
      %56 = dma.hbm_to_vmem [thread:$0]  %s49, 8192, %s51, [#allocation8], 256, 256, 16
    $region13: #{tpu_custom_call.1} parent=1 // pred_fallthru
      _
    // Predicated region
    $region14: #{tpu_custom_call.1} parent=1 // pred_check
      _
    $region15: #{tpu_custom_call.1} parent=1 // pred_check_branch
      %58 = sbr.rel (0) target = $region17
    $region16: #{tpu_custom_call.1} parent=1 // pred_region
      %60 = vsyncadd [#allocation11], 0
      %s61 = sshll.u32 %s3, 4
      %s62 = int_to_ptr.hbm [resolvable:$true] %s61
      %s63 = sshll.u32 [#allocation10], 4
      %s64 = int_to_ptr.vmem [resolvable:$true] %s63
      %69 = dma.hbm_to_vmem [thread:$0]  %s62, 8192, %s64, [#allocation11], 256, 256, 16
    $region17: #{tpu_custom_call.1} parent=1 // pred_fallthru
      _
    // Predicated region
    $region18: #{tpu_custom_call.1} parent=1 // pred_check
      _
    $region19: #{tpu_custom_call.1} parent=1 // pred_check_branch
      %71 = sbr.rel (0) target = $region21
    $region20: #{tpu_custom_call.1} parent=1 // pred_region
      %73 = vsyncadd [#allocation11], 0
      %s74 = sshll.u32 %s4, 4
      %s75 = int_to_ptr.hbm [resolvable:$true] %s74
      %s76 = sshll.u32 [#allocation12], 4
      %s77 = int_to_ptr.vmem [resolvable:$true] %s76
      %82 = dma.hbm_to_vmem [thread:$0]  %s75, 128, %s77, [#allocation11], 64, 64, 4
    $region21: #{tpu_custom_call.1} parent=1 // pred_fallthru
      _
    // Predicated region
    $region22: #{tpu_custom_call.1} parent=1 // pred_check
      _
    $region23: #{tpu_custom_call.1} parent=1 // pred_check_branch
      %84 = sbr.rel (0) target = $region25
    $region24: #{tpu_custom_call.1} parent=1 // pred_region
      %86 = vsyncadd [#allocation14], 0
      %s87 = sshll.u32 %s5, 4
      %s88 = int_to_ptr.hbm [resolvable:$true] %s87
      %s89 = sshll.u32 [#allocation13], 4
      %s90 = int_to_ptr.vmem [resolvable:$true] %s89
      %95 = dma.hbm_to_vmem [thread:$0]  %s88, 256, %s90, [#allocation14], 128, 128, 8
    $region25: #{tpu_custom_call.1} parent=1 // pred_fallthru
      _
    // Predicated region
    $region26: #{tpu_custom_call.1} parent=1 // pred_check
      _
    $region27: #{tpu_custom_call.1} parent=1 // pred_check_branch
      %97 = sbr.rel (0) target = $region29
    $region28: #{tpu_custom_call.1} parent=1 // pred_region
      %99 = vsyncadd [#allocation14], 0
      %s100 = sshll.u32 %s6, 4
      %s101 = int_to_ptr.hbm [resolvable:$true] %s100
      %s102 = sshll.u32 [#allocation15], 4
      %s103 = int_to_ptr.vmem [resolvable:$true] %s102
      %108 = dma.hbm_to_vmem [thread:$0]  %s101, 256, %s103, [#allocation14], 128, 128, 8
    $region29: #{tpu_custom_call.1} parent=1 // pred_fallthru
      _
    // Predicated region
    $region30: #{tpu_custom_call.1} parent=1 // pred_check
      _
    $region31: #{tpu_custom_call.1} parent=1 // pred_check_branch
      %110 = sbr.rel (0) target = $region33
    $region32: #{tpu_custom_call.1} parent=1 // pred_region
      %112 = dma.done [#allocation5], 512
    $region33: #{tpu_custom_call.1} parent=1 // pred_fallthru
      _
    // Predicated region
    $region34: #{tpu_custom_call.1} parent=1 // pred_check
      _
    $region35: #{tpu_custom_call.1} parent=1 // pred_check_branch
      %114 = sbr.rel (0) target = $region37
    $region36: #{tpu_custom_call.1} parent=1 // pred_region
      %116 = dma.done [#allocation8], 128
    $region37: #{tpu_custom_call.1} parent=1 // pred_fallthru
      _
    // Predicated region
    $region38: #{tpu_custom_call.1} parent=1 // pred_check
      _
    $region39: #{tpu_custom_call.1} parent=1 // pred_check_branch
      %118 = sbr.rel (0) target = $region41
    $region40: #{tpu_custom_call.1} parent=1 // pred_region
      %120 = dma.done [#allocation8], 8192
    $region41: #{tpu_custom_call.1} parent=1 // pred_fallthru
      _
    // Predicated region
    $region42: #{tpu_custom_call.1} parent=1 // pred_check
      _
    $region43: #{tpu_custom_call.1} parent=1 // pred_check_branch
      %122 = sbr.rel (0) target = $region45
    $region44: #{tpu_custom_call.1} parent=1 // pred_region
      %124 = dma.done [#allocation11], 8192
    $region45: #{tpu_custom_call.1} parent=1 // pred_fallthru
      _
    // Predicated region
    $region46: #{tpu_custom_call.1} parent=1 // pred_check
      _
    $region47: #{tpu_custom_call.1} parent=1 // pred_check_branch
      %126 = sbr.rel (0) target = $region49
    $region48: #{tpu_custom_call.1} parent=1 // pred_region
      %128 = dma.done [#allocation11], 128
    $region49: #{tpu_custom_call.1} parent=1 // pred_fallthru
      _
    // Predicated region
    $region50: #{tpu_custom_call.1} parent=1 // pred_check
      _
    $region51: #{tpu_custom_call.1} parent=1 // pred_check_branch
      %130 = sbr.rel (0) target = $region53
    $region52: #{tpu_custom_call.1} parent=1 // pred_region
      %132 = dma.done [#allocation14], 256
    $region53: #{tpu_custom_call.1} parent=1 // pred_fallthru
      _
    // Predicated region
    $region54: #{tpu_custom_call.1} parent=1 // pred_check
      _
    $region55: #{tpu_custom_call.1} parent=1 // pred_check_branch
      %134 = sbr.rel (0) target = $region57
    $region56: #{tpu_custom_call.1} parent=1 // pred_region
      %136 = dma.done [#allocation14], 256
    $region57: #{tpu_custom_call.1} parent=1 // pred_fallthru
      _
    %v137 = vld [vmem:[#allocation4] sm:$0xf]
    %v138 = vld [vmem:[#allocation4 + $0x4] sm:$0xf]
    %v139 = vld [vmem:[#allocation4 + $0x8] sm:$0xf]
    %v140 = vld [vmem:[#allocation4 + $0xc] sm:$0xf]
    %v141 = vld [vmem:[#allocation4 + $0x10] sm:$0xf]
    %v142 = vld [vmem:[#allocation4 + $0x14] sm:$0xf]
    %v143 = vld [vmem:[#allocation4 + $0x18] sm:$0xf]
    %v144 = vld [vmem:[#allocation4 + $0x1c] sm:$0xf]
    %v145 = vld [vmem:[#allocation9] sm:$0xff]
    %v146 = vld [vmem:[#allocation9 + $0x8] sm:$0xff]
    %v147 = vld [vmem:[#allocation9 + $0x10] sm:$0xff]
    %v148 = vld [vmem:[#allocation9 + $0x18] sm:$0xff]
    %v149 = vld [vmem:[#allocation9 + $0x20] sm:$0xff]
    %v150 = vld [vmem:[#allocation9 + $0x28] sm:$0xff]
    %v151 = vld [vmem:[#allocation9 + $0x30] sm:$0xff]
    %v152 = vld [vmem:[#allocation9 + $0x38] sm:$0xff]
    %v153 = vld [vmem:[#allocation9 + $0x40] sm:$0xff]
    %v154 = vld [vmem:[#allocation9 + $0x48] sm:$0xff]
    %v155 = vld [vmem:[#allocation9 + $0x50] sm:$0xff]
    %v156 = vld [vmem:[#allocation9 + $0x58] sm:$0xff]
    %v157 = vld [vmem:[#allocation9 + $0x60] sm:$0xff]
    %v158 = vld [vmem:[#allocation9 + $0x68] sm:$0xff]
    %v159 = vld [vmem:[#allocation9 + $0x70] sm:$0xff]
    %v160 = vld [vmem:[#allocation9 + $0x78] sm:$0xff]
    %v161 = vld [vmem:[#allocation9 + $0x80] sm:$0xff]
    %v162 = vld [vmem:[#allocation9 + $0x88] sm:$0xff]
    %v163 = vld [vmem:[#allocation9 + $0x90] sm:$0xff]
    %v164 = vld [vmem:[#allocation9 + $0x98] sm:$0xff]
    %v165 = vld [vmem:[#allocation9 + $0xa0] sm:$0xff]
    %v166 = vld [vmem:[#allocation9 + $0xa8] sm:$0xff]
    %v167 = vld [vmem:[#allocation9 + $0xb0] sm:$0xff]
    %v168 = vld [vmem:[#allocation9 + $0xb8] sm:$0xff]
    %v169 = vld [vmem:[#allocation9 + $0xc0] sm:$0xff]
    %v170 = vld [vmem:[#allocation9 + $0xc8] sm:$0xff]
    %v171 = vld [vmem:[#allocation9 + $0xd0] sm:$0xff]
    %v172 = vld [vmem:[#allocation9 + $0xd8] sm:$0xff]
    %v173 = vld [vmem:[#allocation9 + $0xe0] sm:$0xff]
    %v174 = vld [vmem:[#allocation9 + $0xe8] sm:$0xff]
    %v175 = vld [vmem:[#allocation9 + $0xf0] sm:$0xff]
    %v176 = vld [vmem:[#allocation9 + $0xf8] sm:$0xff]
    %v185 = vunpack.c.l.b16 %v137
    %v186 = vunpack.c.l.b16 %v138
    %v187 = vunpack.c.l.b16 %v139
    %v188 = vunpack.c.l.b16 %v140
    %v189 = vunpack.c.l.b16 %v141
    %v190 = vunpack.c.l.b16 %v142
    %v191 = vunpack.c.l.b16 %v143
    %v192 = vunpack.c.l.b16 %v144
    %v193 = vpack.c.b16 %v186, %v185
    %v194 = vpack.c.b16 %v188, %v187
    %v195 = vpack.c.b16 %v190, %v189
    %v196 = vpack.c.b16 %v192, %v191
    %v233 = vunpack.c.l.b16 %v145
    %v234 = vunpack.c.h.b16 %v145
    %v235 = vunpack.c.l.b16 %v146
    %v236 = vunpack.c.h.b16 %v146
    %v237 = vunpack.c.l.b16 %v147
    %v238 = vunpack.c.h.b16 %v147
    %v239 = vunpack.c.l.b16 %v148
    %v240 = vunpack.c.h.b16 %v148
    %v241 = vunpack.c.l.b16 %v149
    %v242 = vunpack.c.h.b16 %v149
    %v243 = vunpack.c.l.b16 %v150
    %v244 = vunpack.c.h.b16 %v150
    %v245 = vunpack.c.l.b16 %v151
    %v246 = vunpack.c.h.b16 %v151
    %v247 = vunpack.c.l.b16 %v152
    %v248 = vunpack.c.h.b16 %v152
    %v249 = vunpack.c.l.b16 %v153
    %v250 = vunpack.c.h.b16 %v153
    %v251 = vunpack.c.l.b16 %v154
    %v252 = vunpack.c.h.b16 %v154
    %v253 = vunpack.c.l.b16 %v155
    %v254 = vunpack.c.h.b16 %v155
    %v255 = vunpack.c.l.b16 %v156
    %v256 = vunpack.c.h.b16 %v156
    %v257 = vunpack.c.l.b16 %v157
    %v258 = vunpack.c.h.b16 %v157
    %v259 = vunpack.c.l.b16 %v158
    %v260 = vunpack.c.h.b16 %v158
    %v261 = vunpack.c.l.b16 %v159
    %v262 = vunpack.c.h.b16 %v159
    %v263 = vunpack.c.l.b16 %v160
    %v264 = vunpack.c.h.b16 %v160
    %v265 = vunpack.c.l.b16 %v161
    %v266 = vunpack.c.h.b16 %v161
    %v267 = vunpack.c.l.b16 %v162
    %v268 = vunpack.c.h.b16 %v162
    %v269 = vunpack.c.l.b16 %v163
    %v270 = vunpack.c.h.b16 %v163
    %v271 = vunpack.c.l.b16 %v164
    %v272 = vunpack.c.h.b16 %v164
    %v273 = vunpack.c.l.b16 %v165
    %v274 = vunpack.c.h.b16 %v165
    %v275 = vunpack.c.l.b16 %v166
    %v276 = vunpack.c.h.b16 %v166
    %v277 = vunpack.c.l.b16 %v167
    %v278 = vunpack.c.h.b16 %v167
    %v279 = vunpack.c.l.b16 %v168
    %v280 = vunpack.c.h.b16 %v168
    %v281 = vunpack.c.l.b16 %v169
    %v282 = vunpack.c.h.b16 %v169
    %v283 = vunpack.c.l.b16 %v170
    %v284 = vunpack.c.h.b16 %v170
    %v285 = vunpack.c.l.b16 %v171
    %v286 = vunpack.c.h.b16 %v171
    %v287 = vunpack.c.l.b16 %v172
    %v288 = vunpack.c.h.b16 %v172
    %v289 = vunpack.c.l.b16 %v173
    %v290 = vunpack.c.h.b16 %v173
    %v291 = vunpack.c.l.b16 %v174
    %v292 = vunpack.c.h.b16 %v174
    %v293 = vunpack.c.l.b16 %v175
    %v294 = vunpack.c.h.b16 %v175
    %v295 = vunpack.c.l.b16 %v176
    %v296 = vunpack.c.h.b16 %v176
    %v297 = vpack.c.b16 %v237, %v233
    %v298 = vpack.c.b16 %v238, %v234
    %v299 = vpack.c.b16 %v239, %v235
    %v300 = vpack.c.b16 %v240, %v236
    %v301 = vpack.c.b16 %v245, %v241
    %v302 = vpack.c.b16 %v246, %v242
    %v303 = vpack.c.b16 %v247, %v243
    %v304 = vpack.c.b16 %v248, %v244
    %v305 = vpack.c.b16 %v253, %v249
    %v306 = vpack.c.b16 %v254, %v250
    %v307 = vpack.c.b16 %v255, %v251
    %v308 = vpack.c.b16 %v256, %v252
    %v309 = vpack.c.b16 %v261, %v257
    %v310 = vpack.c.b16 %v262, %v258
    %v311 = vpack.c.b16 %v263, %v259
    %v312 = vpack.c.b16 %v264, %v260
    %v313 = vpack.c.b16 %v269, %v265
    %v314 = vpack.c.b16 %v270, %v266
    %v315 = vpack.c.b16 %v271, %v267
    %v316 = vpack.c.b16 %v272, %v268
    %v317 = vpack.c.b16 %v277, %v273
    %v318 = vpack.c.b16 %v278, %v274
    %v319 = vpack.c.b16 %v279, %v275
    %v320 = vpack.c.b16 %v280, %v276
    %v321 = vpack.c.b16 %v285, %v281
    %v322 = vpack.c.b16 %v286, %v282
    %v323 = vpack.c.b16 %v287, %v283
    %v324 = vpack.c.b16 %v288, %v284
    %v325 = vpack.c.b16 %v293, %v289
    %v326 = vpack.c.b16 %v294, %v290
    %v327 = vpack.c.b16 %v295, %v291
    %v328 = vpack.c.b16 %v296, %v292
    %361 = vmatpush.bf16.msra.mxu0 %v325
    %362 = vmatpush.bf16.msra.mxu0 %v321
    %363 = vmatpush.bf16.msra.mxu0 %v317
    %364 = vmatpush.bf16.msra.mxu0 %v313
    %365 = vmatpush.bf16.msra.mxu0 %v309
    %366 = vmatpush.bf16.msra.mxu0 %v305
    %367 = vmatpush.bf16.msra.mxu0 %v301
    %368 = vmatpush.bf16.msra.mxu0 %v297
    %369 = vmatmul.bf16.gmra.mxu0 %v193
    %v370 = vpop.f32.mrf.mxu0
    %v371 = vadd.f32 0.0, %v370
    %v372 = vpop.f32.mrf.mxu0
    %v373 = vadd.f32 0.0, %v372
    %374 = vmatmul.bf16.gmra.mxu0 %v194
    %v375 = vpop.f32.mrf.mxu0
    %v376 = vadd.f32 0.0, %v375
    %v377 = vpop.f32.mrf.mxu0
    %v378 = vadd.f32 0.0, %v377
    %379 = vmatmul.bf16.gmra.mxu0 %v195
    %v380 = vpop.f32.mrf.mxu0
    %v381 = vadd.f32 0.0, %v380
    %v382 = vpop.f32.mrf.mxu0
    %v383 = vadd.f32 0.0, %v382
    %384 = vmatmul.bf16.gmra.mxu0 %v196
    %v385 = vpop.f32.mrf.mxu0
    %v386 = vadd.f32 0.0, %v385
    %v387 = vpop.f32.mrf.mxu0
    %v388 = vadd.f32 0.0, %v387
    %389 = vdwg.mxu0
    %390 = vmatpush.bf16.msra.mxu0 %v326
    %391 = vmatpush.bf16.msra.mxu0 %v322
    %392 = vmatpush.bf16.msra.mxu0 %v318
    %393 = vmatpush.bf16.msra.mxu0 %v314
    %394 = vmatpush.bf16.msra.mxu0 %v310
    %395 = vmatpush.bf16.msra.mxu0 %v306
    %396 = vmatpush.bf16.msra.mxu0 %v302
    %397 = vmatpush.bf16.msra.mxu0 %v298
    %398 = vmatmul.bf16.gmra.mxu0 %v193
    %v399 = vpop.f32.mrf.mxu0
    %v400 = vadd.f32 0.0, %v399
    %v401 = vpop.f32.mrf.mxu0
    %v402 = vadd.f32 0.0, %v401
    %403 = vmatmul.bf16.gmra.mxu0 %v194
    %v404 = vpop.f32.mrf.mxu0
    %v405 = vadd.f32 0.0, %v404
    %v406 = vpop.f32.mrf.mxu0
    %v407 = vadd.f32 0.0, %v406
    %408 = vmatmul.bf16.gmra.mxu0 %v195
    %v409 = vpop.f32.mrf.mxu0
    %v410 = vadd.f32 0.0, %v409
    %v411 = vpop.f32.mrf.mxu0
    %v412 = vadd.f32 0.0, %v411
    %413 = vmatmul.bf16.gmra.mxu0 %v196
    %v414 = vpop.f32.mrf.mxu0
    %v415 = vadd.f32 0.0, %v414
    %v416 = vpop.f32.mrf.mxu0
    %v417 = vadd.f32 0.0, %v416
    %418 = vdwg.mxu0
    %419 = vmatpush.bf16.msra.mxu0 %v327
    %420 = vmatpush.bf16.msra.mxu0 %v323
    %421 = vmatpush.bf16.msra.mxu0 %v319
    %422 = vmatpush.bf16.msra.mxu0 %v315
    %423 = vmatpush.bf16.msra.mxu0 %v311
    %424 = vmatpush.bf16.msra.mxu0 %v307
    %425 = vmatpush.bf16.msra.mxu0 %v303
    %426 = vmatpush.bf16.msra.mxu0 %v299
    %427 = vmatmul.bf16.gmra.mxu0 %v193
    %v428 = vpop.f32.mrf.mxu0
    %v429 = vadd.f32 0.0, %v428
    %v430 = vpop.f32.mrf.mxu0
    %v431 = vadd.f32 0.0, %v430
    %432 = vmatmul.bf16.gmra.mxu0 %v194
    %v433 = vpop.f32.mrf.mxu0
    %v434 = vadd.f32 0.0, %v433
    %v435 = vpop.f32.mrf.mxu0
    %v436 = vadd.f32 0.0, %v435
    %437 = vmatmul.bf16.gmra.mxu0 %v195
    %v438 = vpop.f32.mrf.mxu0
    %v439 = vadd.f32 0.0, %v438
    %v440 = vpop.f32.mrf.mxu0
    %v441 = vadd.f32 0.0, %v440
    %442 = vmatmul.bf16.gmra.mxu0 %v196
    %v443 = vpop.f32.mrf.mxu0
    %v444 = vadd.f32 0.0, %v443
    %v445 = vpop.f32.mrf.mxu0
    %v446 = vadd.f32 0.0, %v445
    %447 = vdwg.mxu0
    %448 = vmatpush.bf16.msra.mxu0 %v328
    %449 = vmatpush.bf16.msra.mxu0 %v324
    %450 = vmatpush.bf16.msra.mxu0 %v320
    %451 = vmatpush.bf16.msra.mxu0 %v316
    %452 = vmatpush.bf16.msra.mxu0 %v312
    %453 = vmatpush.bf16.msra.mxu0 %v308
    %454 = vmatpush.bf16.msra.mxu0 %v304
    %455 = vmatpush.bf16.msra.mxu0 %v300
    %456 = vmatmul.bf16.gmra.mxu0 %v193
    %v457 = vpop.f32.mrf.mxu0
    %v458 = vadd.f32 0.0, %v457
    %v459 = vpop.f32.mrf.mxu0
    %v460 = vadd.f32 0.0, %v459
    %461 = vmatmul.bf16.gmra.mxu0 %v194
    %v462 = vpop.f32.mrf.mxu0
    %v463 = vadd.f32 0.0, %v462
    %v464 = vpop.f32.mrf.mxu0
    %v465 = vadd.f32 0.0, %v464
    %466 = vmatmul.bf16.gmra.mxu0 %v195
    %v467 = vpop.f32.mrf.mxu0
    %v468 = vadd.f32 0.0, %v467
    %v469 = vpop.f32.mrf.mxu0
    %v470 = vadd.f32 0.0, %v469
    %471 = vmatmul.bf16.gmra.mxu0 %v196
    %v472 = vpop.f32.mrf.mxu0
    %v473 = vadd.f32 0.0, %v472
    %v474 = vpop.f32.mrf.mxu0
    %v475 = vadd.f32 0.0, %v474
    %476 = vdwg.mxu0
    %s477 = scalar_lea.vmem [#allocation9], 256
    %v478 = vld [vmem:[%s477] sm:$0xff]
    %v479 = vld [vmem:[%s477 + $0x8] sm:$0xff]
    %v480 = vld [vmem:[%s477 + $0x10] sm:$0xff]
    %v481 = vld [vmem:[%s477 + $0x18] sm:$0xff]
    %v482 = vld [vmem:[%s477 + $0x20] sm:$0xff]
    %v483 = vld [vmem:[%s477 + $0x28] sm:$0xff]
    %v484 = vld [vmem:[%s477 + $0x30] sm:$0xff]
    %v485 = vld [vmem:[%s477 + $0x38] sm:$0xff]
    %v486 = vld [vmem:[%s477 + $0x40] sm:$0xff]
    %v487 = vld [vmem:[%s477 + $0x48] sm:$0xff]
    %v488 = vld [vmem:[%s477 + $0x50] sm:$0xff]
    %v489 = vld [vmem:[%s477 + $0x58] sm:$0xff]
    %v490 = vld [vmem:[%s477 + $0x60] sm:$0xff]
    %v491 = vld [vmem:[%s477 + $0x68] sm:$0xff]
    %v492 = vld [vmem:[%s477 + $0x70] sm:$0xff]
    %v493 = vld [vmem:[%s477 + $0x78] sm:$0xff]
    %v494 = vld [vmem:[%s477 + $0x80] sm:$0xff]
    %v495 = vld [vmem:[%s477 + $0x88] sm:$0xff]
    %v496 = vld [vmem:[%s477 + $0x90] sm:$0xff]
    %v497 = vld [vmem:[%s477 + $0x98] sm:$0xff]
    %v498 = vld [vmem:[%s477 + $0xa0] sm:$0xff]
    %v499 = vld [vmem:[%s477 + $0xa8] sm:$0xff]
    %v500 = vld [vmem:[%s477 + $0xb0] sm:$0xff]
    %v501 = vld [vmem:[%s477 + $0xb8] sm:$0xff]
    %v502 = vld [vmem:[%s477 + $0xc0] sm:$0xff]
    %v503 = vld [vmem:[%s477 + $0xc8] sm:$0xff]
    %v504 = vld [vmem:[%s477 + $0xd0] sm:$0xff]
    %v505 = vld [vmem:[%s477 + $0xd8] sm:$0xff]
    %v506 = vld [vmem:[%s477 + $0xe0] sm:$0xff]
    %v507 = vld [vmem:[%s477 + $0xe8] sm:$0xff]
    %v508 = vld [vmem:[%s477 + $0xf0] sm:$0xff]
    %v509 = vld [vmem:[%s477 + $0xf8] sm:$0xff]
    %v542 = vunpack.c.l.b16 %v478
    %v543 = vunpack.c.h.b16 %v478
    %v544 = vunpack.c.l.b16 %v479
    %v545 = vunpack.c.h.b16 %v479
    %v546 = vunpack.c.l.b16 %v480
    %v547 = vunpack.c.h.b16 %v480
    %v548 = vunpack.c.l.b16 %v481
    %v549 = vunpack.c.h.b16 %v481
    %v550 = vunpack.c.l.b16 %v482
    %v551 = vunpack.c.h.b16 %v482
    %v552 = vunpack.c.l.b16 %v483
    %v553 = vunpack.c.h.b16 %v483
    %v554 = vunpack.c.l.b16 %v484
    %v555 = vunpack.c.h.b16 %v484
    %v556 = vunpack.c.l.b16 %v485
    %v557 = vunpack.c.h.b16 %v485
    %v558 = vunpack.c.l.b16 %v486
    %v559 = vunpack.c.h.b16 %v486
    %v560 = vunpack.c.l.b16 %v487
    %v561 = vunpack.c.h.b16 %v487
    %v562 = vunpack.c.l.b16 %v488
    %v563 = vunpack.c.h.b16 %v488
    %v564 = vunpack.c.l.b16 %v489
    %v565 = vunpack.c.h.b16 %v489
    %v566 = vunpack.c.l.b16 %v490
    %v567 = vunpack.c.h.b16 %v490
    %v568 = vunpack.c.l.b16 %v491
    %v569 = vunpack.c.h.b16 %v491
    %v570 = vunpack.c.l.b16 %v492
    %v571 = vunpack.c.h.b16 %v492
    %v572 = vunpack.c.l.b16 %v493
    %v573 = vunpack.c.h.b16 %v493
    %v574 = vunpack.c.l.b16 %v494
    %v575 = vunpack.c.h.b16 %v494
    %v576 = vunpack.c.l.b16 %v495
    %v577 = vunpack.c.h.b16 %v495
    %v578 = vunpack.c.l.b16 %v496
    %v579 = vunpack.c.h.b16 %v496
    %v580 = vunpack.c.l.b16 %v497
    %v581 = vunpack.c.h.b16 %v497
    %v582 = vunpack.c.l.b16 %v498
    %v583 = vunpack.c.h.b16 %v498
    %v584 = vunpack.c.l.b16 %v499
    %v585 = vunpack.c.h.b16 %v499
    %v586 = vunpack.c.l.b16 %v500
    %v587 = vunpack.c.h.b16 %v500
    %v588 = vunpack.c.l.b16 %v501
    %v589 = vunpack.c.h.b16 %v501
    %v590 = vunpack.c.l.b16 %v502
    %v591 = vunpack.c.h.b16 %v502
    %v592 = vunpack.c.l.b16 %v503
    %v593 = vunpack.c.h.b16 %v503
    %v594 = vunpack.c.l.b16 %v504
    %v595 = vunpack.c.h.b16 %v504
    %v596 = vunpack.c.l.b16 %v505
    %v597 = vunpack.c.h.b16 %v505
    %v598 = vunpack.c.l.b16 %v506
    %v599 = vunpack.c.h.b16 %v506
    %v600 = vunpack.c.l.b16 %v507
    %v601 = vunpack.c.h.b16 %v507
    %v602 = vunpack.c.l.b16 %v508
    %v603 = vunpack.c.h.b16 %v508
    %v604 = vunpack.c.l.b16 %v509
    %v605 = vunpack.c.h.b16 %v509
    %v606 = vpack.c.b16 %v546, %v542
    %v607 = vpack.c.b16 %v547, %v543
    %v608 = vpack.c.b16 %v548, %v544
    %v609 = vpack.c.b16 %v549, %v545
    %v610 = vpack.c.b16 %v554, %v550
    %v611 = vpack.c.b16 %v555, %v551
    %v612 = vpack.c.b16 %v556, %v552
    %v613 = vpack.c.b16 %v557, %v553
    %v614 = vpack.c.b16 %v562, %v558
    %v615 = vpack.c.b16 %v563, %v559
    %v616 = vpack.c.b16 %v564, %v560
    %v617 = vpack.c.b16 %v565, %v561
    %v618 = vpack.c.b16 %v570, %v566
    %v619 = vpack.c.b16 %v571, %v567
    %v620 = vpack.c.b16 %v572, %v568
    %v621 = vpack.c.b16 %v573, %v569
    %v622 = vpack.c.b16 %v578, %v574
    %v623 = vpack.c.b16 %v579, %v575
    %v624 = vpack.c.b16 %v580, %v576
    %v625 = vpack.c.b16 %v581, %v577
    %v626 = vpack.c.b16 %v586, %v582
    %v627 = vpack.c.b16 %v587, %v583
    %v628 = vpack.c.b16 %v588, %v584
    %v629 = vpack.c.b16 %v589, %v585
    %v630 = vpack.c.b16 %v594, %v590
    %v631 = vpack.c.b16 %v595, %v591
    %v632 = vpack.c.b16 %v596, %v592
    %v633 = vpack.c.b16 %v597, %v593
    %v634 = vpack.c.b16 %v602, %v598
    %v635 = vpack.c.b16 %v603, %v599
    %v636 = vpack.c.b16 %v604, %v600
    %v637 = vpack.c.b16 %v605, %v601
    %670 = vmatpush.bf16.msra.mxu0 %v634
    %671 = vmatpush.bf16.msra.mxu0 %v630
    %672 = vmatpush.bf16.msra.mxu0 %v626
    %673 = vmatpush.bf16.msra.mxu0 %v622
    %674 = vmatpush.bf16.msra.mxu0 %v618
    %675 = vmatpush.bf16.msra.mxu0 %v614
    %676 = vmatpush.bf16.msra.mxu0 %v610
    %677 = vmatpush.bf16.msra.mxu0 %v606
    %678 = vmatmul.bf16.gmra.mxu0 %v193
    %v679 = vpop.f32.mrf.mxu0
    %v680 = vadd.f32 0.0, %v679
    %v681 = vpop.f32.mrf.mxu0
    %v682 = vadd.f32 0.0, %v681
    %683 = vmatmul.bf16.gmra.mxu0 %v194
    %v684 = vpop.f32.mrf.mxu0
    %v685 = vadd.f32 0.0, %v684
    %v686 = vpop.f32.mrf.mxu0
    %v687 = vadd.f32 0.0, %v686
    %688 = vmatmul.bf16.gmra.mxu0 %v195
    %v689 = vpop.f32.mrf.mxu0
    %v690 = vadd.f32 0.0, %v689
    %v691 = vpop.f32.mrf.mxu0
    %v692 = vadd.f32 0.0, %v691
    %693 = vmatmul.bf16.gmra.mxu0 %v196
    %v694 = vpop.f32.mrf.mxu0
    %v695 = vadd.f32 0.0, %v694
    %v696 = vpop.f32.mrf.mxu0
    %v697 = vadd.f32 0.0, %v696
    %698 = vdwg.mxu0
    %699 = vmatpush.bf16.msra.mxu0 %v635
    %700 = vmatpush.bf16.msra.mxu0 %v631
    %701 = vmatpush.bf16.msra.mxu0 %v627
    %702 = vmatpush.bf16.msra.mxu0 %v623
    %703 = vmatpush.bf16.msra.mxu0 %v619
    %704 = vmatpush.bf16.msra.mxu0 %v615
    %705 = vmatpush.bf16.msra.mxu0 %v611
    %706 = vmatpush.bf16.msra.mxu0 %v607
    %707 = vmatmul.bf16.gmra.mxu0 %v193
    %v708 = vpop.f32.mrf.mxu0
    %v709 = vadd.f32 0.0, %v708
    %v710 = vpop.f32.mrf.mxu0
    %v711 = vadd.f32 0.0, %v710
    %712 = vmatmul.bf16.gmra.mxu0 %v194
    %v713 = vpop.f32.mrf.mxu0
    %v714 = vadd.f32 0.0, %v713
    %v715 = vpop.f32.mrf.mxu0
    %v716 = vadd.f32 0.0, %v715
    %717 = vmatmul.bf16.gmra.mxu0 %v195
    %v718 = vpop.f32.mrf.mxu0
    %v719 = vadd.f32 0.0, %v718
    %v720 = vpop.f32.mrf.mxu0
    %v721 = vadd.f32 0.0, %v720
    %722 = vmatmul.bf16.gmra.mxu0 %v196
    %v723 = vpop.f32.mrf.mxu0
    %v724 = vadd.f32 0.0, %v723
    %v725 = vpop.f32.mrf.mxu0
    %v726 = vadd.f32 0.0, %v725
    %727 = vdwg.mxu0
    %728 = vmatpush.bf16.msra.mxu0 %v636
    %729 = vmatpush.bf16.msra.mxu0 %v632
    %730 = vmatpush.bf16.msra.mxu0 %v628
    %731 = vmatpush.bf16.msra.mxu0 %v624
    %732 = vmatpush.bf16.msra.mxu0 %v620
    %733 = vmatpush.bf16.msra.mxu0 %v616
    %734 = vmatpush.bf16.msra.mxu0 %v612
    %735 = vmatpush.bf16.msra.mxu0 %v608
    %736 = vmatmul.bf16.gmra.mxu0 %v193
    %v737 = vpop.f32.mrf.mxu0
    %v738 = vadd.f32 0.0, %v737
    %v739 = vpop.f32.mrf.mxu0
    %v740 = vadd.f32 0.0, %v739
    %741 = vmatmul.bf16.gmra.mxu0 %v194
    %v742 = vpop.f32.mrf.mxu0
    %v743 = vadd.f32 0.0, %v742
    %v744 = vpop.f32.mrf.mxu0
    %v745 = vadd.f32 0.0, %v744
    %746 = vmatmul.bf16.gmra.mxu0 %v195
    %v747 = vpop.f32.mrf.mxu0
    %v748 = vadd.f32 0.0, %v747
    %v749 = vpop.f32.mrf.mxu0
    %v750 = vadd.f32 0.0, %v749
    %751 = vmatmul.bf16.gmra.mxu0 %v196
    %v752 = vpop.f32.mrf.mxu0
    %v753 = vadd.f32 0.0, %v752
    %v754 = vpop.f32.mrf.mxu0
    %v755 = vadd.f32 0.0, %v754
    %756 = vdwg.mxu0
    %757 = vmatpush.bf16.msra.mxu0 %v637
    %758 = vmatpush.bf16.msra.mxu0 %v633
    %759 = vmatpush.bf16.msra.mxu0 %v629
    %760 = vmatpush.bf16.msra.mxu0 %v625
    %761 = vmatpush.bf16.msra.mxu0 %v621
    %762 = vmatpush.bf16.msra.mxu0 %v617
    %763 = vmatpush.bf16.msra.mxu0 %v613
    %764 = vmatpush.bf16.msra.mxu0 %v609
    %765 = vmatmul.bf16.gmra.mxu0 %v193
    %v766 = vpop.f32.mrf.mxu0
    %v767 = vadd.f32 0.0, %v766
    %v768 = vpop.f32.mrf.mxu0
    %v769 = vadd.f32 0.0, %v768
    %770 = vmatmul.bf16.gmra.mxu0 %v194
    %v771 = vpop.f32.mrf.mxu0
    %v772 = vadd.f32 0.0, %v771
    %v773 = vpop.f32.mrf.mxu0
    %v774 = vadd.f32 0.0, %v773
    %775 = vmatmul.bf16.gmra.mxu0 %v195
    %v776 = vpop.f32.mrf.mxu0
    %v777 = vadd.f32 0.0, %v776
    %v778 = vpop.f32.mrf.mxu0
    %v779 = vadd.f32 0.0, %v778
    %780 = vmatmul.bf16.gmra.mxu0 %v196
    %v781 = vpop.f32.mrf.mxu0
    %v782 = vadd.f32 0.0, %v781
    %v783 = vpop.f32.mrf.mxu0
    %v784 = vadd.f32 0.0, %v783
    %785 = vdwg.mxu0
    %v786 = vpack.c.bf16 %v400, %v371
    %v787 = vpack.c.bf16 %v458, %v429
    %v788 = vpack.c.bf16 %v402, %v373
    %v789 = vpack.c.bf16 %v460, %v431
    %v790 = vpack.c.bf16 %v405, %v376
    %v791 = vpack.c.bf16 %v463, %v434
    %v792 = vpack.c.bf16 %v407, %v378
    %v793 = vpack.c.bf16 %v465, %v436
    %v794 = vpack.c.bf16 %v410, %v381
    %v795 = vpack.c.bf16 %v468, %v439
    %v796 = vpack.c.bf16 %v412, %v383
    %v797 = vpack.c.bf16 %v470, %v441
    %v798 = vpack.c.bf16 %v415, %v386
    %v799 = vpack.c.bf16 %v473, %v444
    %v800 = vpack.c.bf16 %v417, %v388
    %v801 = vpack.c.bf16 %v475, %v446
    %802 = vst [vmem:[#allocation2] sm:$0xff] %v786
    %803 = vst [vmem:[#allocation2 + $0x8] sm:$0xff] %v787
    %804 = vst [vmem:[#allocation2 + $0x10] sm:$0xff] %v788
    %805 = vst [vmem:[#allocation2 + $0x18] sm:$0xff] %v789
    %806 = vst [vmem:[#allocation2 + $0x20] sm:$0xff] %v790
    %807 = vst [vmem:[#allocation2 + $0x28] sm:$0xff] %v791
    %808 = vst [vmem:[#allocation2 + $0x30] sm:$0xff] %v792
    %809 = vst [vmem:[#allocation2 + $0x38] sm:$0xff] %v793
    %810 = vst [vmem:[#allocation2 + $0x40] sm:$0xff] %v794
    %811 = vst [vmem:[#allocation2 + $0x48] sm:$0xff] %v795
    %812 = vst [vmem:[#allocation2 + $0x50] sm:$0xff] %v796
    %813 = vst [vmem:[#allocation2 + $0x58] sm:$0xff] %v797
    %814 = vst [vmem:[#allocation2 + $0x60] sm:$0xff] %v798
    %815 = vst [vmem:[#allocation2 + $0x68] sm:$0xff] %v799
    %816 = vst [vmem:[#allocation2 + $0x70] sm:$0xff] %v800
    %817 = vst [vmem:[#allocation2 + $0x78] sm:$0xff] %v801
    %v818 = vpack.c.bf16 %v709, %v680
    %v819 = vpack.c.bf16 %v767, %v738
    %v820 = vpack.c.bf16 %v711, %v682
    %v821 = vpack.c.bf16 %v769, %v740
    %v822 = vpack.c.bf16 %v714, %v685
    %v823 = vpack.c.bf16 %v772, %v743
    %v824 = vpack.c.bf16 %v716, %v687
    %v825 = vpack.c.bf16 %v774, %v745
    %v826 = vpack.c.bf16 %v719, %v690
    %v827 = vpack.c.bf16 %v777, %v748
    %v828 = vpack.c.bf16 %v721, %v692
    %v829 = vpack.c.bf16 %v779, %v750
    %v830 = vpack.c.bf16 %v724, %v695
    %v831 = vpack.c.bf16 %v782, %v753
    %v832 = vpack.c.bf16 %v726, %v697
    %v833 = vpack.c.bf16 %v784, %v755
    %834 = vst [vmem:[#allocation3] sm:$0xff] %v818
    %835 = vst [vmem:[#allocation3 + $0x8] sm:$0xff] %v819
    %836 = vst [vmem:[#allocation3 + $0x10] sm:$0xff] %v820
    %837 = vst [vmem:[#allocation3 + $0x18] sm:$0xff] %v821
    %838 = vst [vmem:[#allocation3 + $0x20] sm:$0xff] %v822
    %839 = vst [vmem:[#allocation3 + $0x28] sm:$0xff] %v823
    %840 = vst [vmem:[#allocation3 + $0x30] sm:$0xff] %v824
    %841 = vst [vmem:[#allocation3 + $0x38] sm:$0xff] %v825
    %842 = vst [vmem:[#allocation3 + $0x40] sm:$0xff] %v826
    %843 = vst [vmem:[#allocation3 + $0x48] sm:$0xff] %v827
    %844 = vst [vmem:[#allocation3 + $0x50] sm:$0xff] %v828
    %845 = vst [vmem:[#allocation3 + $0x58] sm:$0xff] %v829
    %846 = vst [vmem:[#allocation3 + $0x60] sm:$0xff] %v830
    %847 = vst [vmem:[#allocation3 + $0x68] sm:$0xff] %v831
    %848 = vst [vmem:[#allocation3 + $0x70] sm:$0xff] %v832
    %849 = vst [vmem:[#allocation3 + $0x78] sm:$0xff] %v833
    %v850 = vld [vmem:[#allocation7] sm:$0xff]
    %v851 = vld [vmem:[#allocation10] sm:$0xff]
    %v852 = vld [vmem:[#allocation10 + $0x8] sm:$0xff]
    %v853 = vld [vmem:[#allocation10 + $0x10] sm:$0xff]
    %v854 = vld [vmem:[#allocation10 + $0x18] sm:$0xff]
    %v855 = vld [vmem:[#allocation10 + $0x20] sm:$0xff]
    %v856 = vld [vmem:[#allocation10 + $0x28] sm:$0xff]
    %v857 = vld [vmem:[#allocation10 + $0x30] sm:$0xff]
    %v858 = vld [vmem:[#allocation10 + $0x38] sm:$0xff]
    %v859 = vld [vmem:[#allocation10 + $0x40] sm:$0xff]
    %v860 = vld [vmem:[#allocation10 + $0x48] sm:$0xff]
    %v861 = vld [vmem:[#allocation10 + $0x50] sm:$0xff]
    %v862 = vld [vmem:[#allocation10 + $0x58] sm:$0xff]
    %v863 = vld [vmem:[#allocation10 + $0x60] sm:$0xff]
    %v864 = vld [vmem:[#allocation10 + $0x68] sm:$0xff]
    %v865 = vld [vmem:[#allocation10 + $0x70] sm:$0xff]
    %v866 = vld [vmem:[#allocation10 + $0x78] sm:$0xff]
    %v867 = vld [vmem:[#allocation10 + $0x80] sm:$0xff]
    %v868 = vld [vmem:[#allocation10 + $0x88] sm:$0xff]
    %v869 = vld [vmem:[#allocation10 + $0x90] sm:$0xff]
    %v870 = vld [vmem:[#allocation10 + $0x98] sm:$0xff]
    %v871 = vld [vmem:[#allocation10 + $0xa0] sm:$0xff]
    %v872 = vld [vmem:[#allocation10 + $0xa8] sm:$0xff]
    %v873 = vld [vmem:[#allocation10 + $0xb0] sm:$0xff]
    %v874 = vld [vmem:[#allocation10 + $0xb8] sm:$0xff]
    %v875 = vld [vmem:[#allocation10 + $0xc0] sm:$0xff]
    %v876 = vld [vmem:[#allocation10 + $0xc8] sm:$0xff]
    %v877 = vld [vmem:[#allocation10 + $0xd0] sm:$0xff]
    %v878 = vld [vmem:[#allocation10 + $0xd8] sm:$0xff]
    %v879 = vld [vmem:[#allocation10 + $0xe0] sm:$0xff]
    %v880 = vld [vmem:[#allocation10 + $0xe8] sm:$0xff]
    %v881 = vld [vmem:[#allocation10 + $0xf0] sm:$0xff]
    %v882 = vld [vmem:[#allocation10 + $0xf8] sm:$0xff]
    %s883 = scalar_lea.vmem [#allocation10], 256
    %v884 = vld [vmem:[%s883] sm:$0xff]
    %v885 = vld [vmem:[%s883 + $0x8] sm:$0xff]
    %v886 = vld [vmem:[%s883 + $0x10] sm:$0xff]
    %v887 = vld [vmem:[%s883 + $0x18] sm:$0xff]
    %v888 = vld [vmem:[%s883 + $0x20] sm:$0xff]
    %v889 = vld [vmem:[%s883 + $0x28] sm:$0xff]
    %v890 = vld [vmem:[%s883 + $0x30] sm:$0xff]
    %v891 = vld [vmem:[%s883 + $0x38] sm:$0xff]
    %v892 = vld [vmem:[%s883 + $0x40] sm:$0xff]
    %v893 = vld [vmem:[%s883 + $0x48] sm:$0xff]
    %v894 = vld [vmem:[%s883 + $0x50] sm:$0xff]
    %v895 = vld [vmem:[%s883 + $0x58] sm:$0xff]
    %v896 = vld [vmem:[%s883 + $0x60] sm:$0xff]
    %v897 = vld [vmem:[%s883 + $0x68] sm:$0xff]
    %v898 = vld [vmem:[%s883 + $0x70] sm:$0xff]
    %v899 = vld [vmem:[%s883 + $0x78] sm:$0xff]
    %v900 = vld [vmem:[%s883 + $0x80] sm:$0xff]
    %v901 = vld [vmem:[%s883 + $0x88] sm:$0xff]
    %v902 = vld [vmem:[%s883 + $0x90] sm:$0xff]
    %v903 = vld [vmem:[%s883 + $0x98] sm:$0xff]
    %v904 = vld [vmem:[%s883 + $0xa0] sm:$0xff]
    %v905 = vld [vmem:[%s883 + $0xa8] sm:$0xff]
    %v906 = vld [vmem:[%s883 + $0xb0] sm:$0xff]
    %v907 = vld [vmem:[%s883 + $0xb8] sm:$0xff]
    %v908 = vld [vmem:[%s883 + $0xc0] sm:$0xff]
    %v909 = vld [vmem:[%s883 + $0xc8] sm:$0xff]
    %v910 = vld [vmem:[%s883 + $0xd0] sm:$0xff]
    %v911 = vld [vmem:[%s883 + $0xd8] sm:$0xff]
    %v912 = vld [vmem:[%s883 + $0xe0] sm:$0xff]
    %v913 = vld [vmem:[%s883 + $0xe8] sm:$0xff]
    %v914 = vld [vmem:[%s883 + $0xf0] sm:$0xff]
    %v915 = vld [vmem:[%s883 + $0xf8] sm:$0xff]
    %v916 = vld [vmem:[#allocation12] sm:$0xf]
    %s917 = scalar_lea.vmem [#allocation12], 4
    %v918 = vld [vmem:[%s917] sm:$0xf]
    %v919 = vld [vmem:[#allocation13] sm:$0xff]
    %v920 = vld [vmem:[#allocation15] sm:$0xff]
    %s921 = scalar_lea.vmem [#allocation13], 8
    %v922 = vld [vmem:[%s921] sm:$0xff]
    %s923 = scalar_lea.vmem [#allocation15], 8
    %v924 = vld [vmem:[%s923] sm:$0xff]
    %v925 = vld [vmem:[#allocation2] sm:$0xff]
    %v926 = vld [vmem:[#allocation2 + $0x8] sm:$0xff]
    %v927 = vunpack.c.l.bf16 %v925
    %v928 = vunpack.c.h.bf16 %v925
    %v929 = vunpack.c.l.bf16 %v926
    %v930 = vunpack.c.h.bf16 %v926
    %v932 = vperm.slane %v916, 0
    %v933 = vperm.slane %v916, 1
    %v934 = vperm.slane %v916, 2
    %v935 = vperm.slane %v916, 3
    %v940 = vadd.f32 %v927, %v932
    %v941 = vadd.f32 %v928, %v933
    %v942 = vadd.f32 %v929, %v934
    %v943 = vadd.f32 %v930, %v935
    %v944 = vpack.c.bf16 %v919, %v919
    %v977 = vunpack.c.l.b16 %v851
    %v978 = vunpack.c.h.b16 %v851
    %v979 = vunpack.c.l.b16 %v852
    %v980 = vunpack.c.h.b16 %v852
    %v981 = vunpack.c.l.b16 %v853
    %v982 = vunpack.c.h.b16 %v853
    %v983 = vunpack.c.l.b16 %v854
    %v984 = vunpack.c.h.b16 %v854
    %v985 = vunpack.c.l.b16 %v855
    %v986 = vunpack.c.h.b16 %v855
    %v987 = vunpack.c.l.b16 %v856
    %v988 = vunpack.c.h.b16 %v856
    %v989 = vunpack.c.l.b16 %v857
    %v990 = vunpack.c.h.b16 %v857
    %v991 = vunpack.c.l.b16 %v858
    %v992 = vunpack.c.h.b16 %v858
    %v993 = vunpack.c.l.b16 %v859
    %v994 = vunpack.c.h.b16 %v859
    %v995 = vunpack.c.l.b16 %v860
    %v996 = vunpack.c.h.b16 %v860
    %v997 = vunpack.c.l.b16 %v861
    %v998 = vunpack.c.h.b16 %v861
    %v999 = vunpack.c.l.b16 %v862
    %v1000 = vunpack.c.h.b16 %v862
    %v1001 = vunpack.c.l.b16 %v863
    %v1002 = vunpack.c.h.b16 %v863
    %v1003 = vunpack.c.l.b16 %v864
    %v1004 = vunpack.c.h.b16 %v864
    %v1005 = vunpack.c.l.b16 %v865
    %v1006 = vunpack.c.h.b16 %v865
    %v1007 = vunpack.c.l.b16 %v866
    %v1008 = vunpack.c.h.b16 %v866
    %v1009 = vunpack.c.l.b16 %v867
    %v1010 = vunpack.c.h.b16 %v867
    %v1011 = vunpack.c.l.b16 %v868
    %v1012 = vunpack.c.h.b16 %v868
    %v1013 = vunpack.c.l.b16 %v869
    %v1014 = vunpack.c.h.b16 %v869
    %v1015 = vunpack.c.l.b16 %v870
    %v1016 = vunpack.c.h.b16 %v870
    %v1017 = vunpack.c.l.b16 %v871
    %v1018 = vunpack.c.h.b16 %v871
    %v1019 = vunpack.c.l.b16 %v872
    %v1020 = vunpack.c.h.b16 %v872
    %v1021 = vunpack.c.l.b16 %v873
    %v1022 = vunpack.c.h.b16 %v873
    %v1023 = vunpack.c.l.b16 %v874
    %v1024 = vunpack.c.h.b16 %v874
    %v1025 = vunpack.c.l.b16 %v875
    %v1026 = vunpack.c.h.b16 %v875
    %v1027 = vunpack.c.l.b16 %v876
    %v1028 = vunpack.c.h.b16 %v876
    %v1029 = vunpack.c.l.b16 %v877
    %v1030 = vunpack.c.h.b16 %v877
    %v1031 = vunpack.c.l.b16 %v878
    %v1032 = vunpack.c.h.b16 %v878
    %v1033 = vunpack.c.l.b16 %v879
    %v1034 = vunpack.c.h.b16 %v879
    %v1035 = vunpack.c.l.b16 %v880
    %v1036 = vunpack.c.h.b16 %v880
    %v1037 = vunpack.c.l.b16 %v881
    %v1038 = vunpack.c.h.b16 %v881
    %v1039 = vunpack.c.l.b16 %v882
    %v1040 = vunpack.c.h.b16 %v882
    %v1041 = vpack.c.b16 %v981, %v977
    %v1042 = vpack.c.b16 %v982, %v978
    %v1043 = vpack.c.b16 %v983, %v979
    %v1044 = vpack.c.b16 %v984, %v980
    %v1045 = vpack.c.b16 %v989, %v985
    %v1046 = vpack.c.b16 %v990, %v986
    %v1047 = vpack.c.b16 %v991, %v987
    %v1048 = vpack.c.b16 %v992, %v988
    %v1049 = vpack.c.b16 %v997, %v993
    %v1050 = vpack.c.b16 %v998, %v994
    %v1051 = vpack.c.b16 %v999, %v995
    %v1052 = vpack.c.b16 %v1000, %v996
    %v1053 = vpack.c.b16 %v1005, %v1001
    %v1054 = vpack.c.b16 %v1006, %v1002
    %v1055 = vpack.c.b16 %v1007, %v1003
    %v1056 = vpack.c.b16 %v1008, %v1004
    %v1057 = vpack.c.b16 %v1013, %v1009
    %v1058 = vpack.c.b16 %v1014, %v1010
    %v1059 = vpack.c.b16 %v1015, %v1011
    %v1060 = vpack.c.b16 %v1016, %v1012
    %v1061 = vpack.c.b16 %v1021, %v1017
    %v1062 = vpack.c.b16 %v1022, %v1018
    %v1063 = vpack.c.b16 %v1023, %v1019
    %v1064 = vpack.c.b16 %v1024, %v1020
    %v1065 = vpack.c.b16 %v1029, %v1025
    %v1066 = vpack.c.b16 %v1030, %v1026
    %v1067 = vpack.c.b16 %v1031, %v1027
    %v1068 = vpack.c.b16 %v1032, %v1028
    %v1069 = vpack.c.b16 %v1037, %v1033
    %v1070 = vpack.c.b16 %v1038, %v1034
    %v1071 = vpack.c.b16 %v1039, %v1035
    %v1072 = vpack.c.b16 %v1040, %v1036
    %1105 = vmatpush.bf16.msra.mxu0 %v1069
    %1106 = vmatpush.bf16.msra.mxu0 %v1065
    %1107 = vmatpush.bf16.msra.mxu0 %v1061
    %1108 = vmatpush.bf16.msra.mxu0 %v1057
    %1109 = vmatpush.bf16.msra.mxu0 %v1053
    %1110 = vmatpush.bf16.msra.mxu0 %v1049
    %1111 = vmatpush.bf16.msra.mxu0 %v1045
    %1112 = vmatpush.bf16.msra.mxu0 %v1041
    %1113 = vmatmul.bf16.gmra.mxu0 %v944
    %v1114 = vpop.f32.mrf.mxu0
    %v1115 = vadd.f32 0.0, %v1114
    %v1116 = vpop.f32.mrf.mxu0
    %1117 = vdwg.mxu0
    %1118 = vmatpush.bf16.msra.mxu0 %v1070
    %1119 = vmatpush.bf16.msra.mxu0 %v1066
    %1120 = vmatpush.bf16.msra.mxu0 %v1062
    %1121 = vmatpush.bf16.msra.mxu0 %v1058
    %1122 = vmatpush.bf16.msra.mxu0 %v1054
    %1123 = vmatpush.bf16.msra.mxu0 %v1050
    %1124 = vmatpush.bf16.msra.mxu0 %v1046
    %1125 = vmatpush.bf16.msra.mxu0 %v1042
    %1126 = vmatmul.bf16.gmra.mxu0 %v944
    %v1127 = vpop.f32.mrf.mxu0
    %v1128 = vadd.f32 0.0, %v1127
    %v1129 = vpop.f32.mrf.mxu0
    %1130 = vdwg.mxu0
    %1131 = vmatpush.bf16.msra.mxu0 %v1071
    %1132 = vmatpush.bf16.msra.mxu0 %v1067
    %1133 = vmatpush.bf16.msra.mxu0 %v1063
    %1134 = vmatpush.bf16.msra.mxu0 %v1059
    %1135 = vmatpush.bf16.msra.mxu0 %v1055
    %1136 = vmatpush.bf16.msra.mxu0 %v1051
    %1137 = vmatpush.bf16.msra.mxu0 %v1047
    %1138 = vmatpush.bf16.msra.mxu0 %v1043
    %1139 = vmatmul.bf16.gmra.mxu0 %v944
    %v1140 = vpop.f32.mrf.mxu0
    %v1141 = vadd.f32 0.0, %v1140
    %v1142 = vpop.f32.mrf.mxu0
    %1143 = vdwg.mxu0
    %1144 = vmatpush.bf16.msra.mxu0 %v1072
    %1145 = vmatpush.bf16.msra.mxu0 %v1068
    %1146 = vmatpush.bf16.msra.mxu0 %v1064
    %1147 = vmatpush.bf16.msra.mxu0 %v1060
    %1148 = vmatpush.bf16.msra.mxu0 %v1056
    %1149 = vmatpush.bf16.msra.mxu0 %v1052
    %1150 = vmatpush.bf16.msra.mxu0 %v1048
    %1151 = vmatpush.bf16.msra.mxu0 %v1044
    %1152 = vmatmul.bf16.gmra.mxu0 %v944
    %v1153 = vpop.f32.mrf.mxu0
    %v1154 = vadd.f32 0.0, %v1153
    %v1155 = vpop.f32.mrf.mxu0
    %1156 = vdwg.mxu0
    %v1157 = vadd.f32 %v940, %v1115
    %v1158 = vadd.f32 %v941, %v1128
    %v1159 = vadd.f32 %v942, %v1141
    %v1160 = vadd.f32 %v943, %v1154
    %s1161 = scalar_lea.vmem [#allocation3], 112
    %v1162 = vld [vmem:[%s1161] sm:$0xff]
    %v1163 = vld [vmem:[%s1161 + $0x8] sm:$0xff]
    %v1164 = vunpack.c.l.bf16 %v1162
    %v1165 = vunpack.c.h.bf16 %v1162
    %v1166 = vunpack.c.l.bf16 %v1163
    %v1167 = vunpack.c.h.bf16 %v1163
    %v1169 = vperm.slane %v918, 0
    %v1170 = vperm.slane %v918, 1
    %v1171 = vperm.slane %v918, 2
    %v1172 = vperm.slane %v918, 3
    %v1177 = vadd.f32 %v1164, %v1169
    %v1178 = vadd.f32 %v1165, %v1170
    %v1179 = vadd.f32 %v1166, %v1171
    %v1180 = vadd.f32 %v1167, %v1172
    %v1181 = vpack.c.bf16 %v922, %v922
    %v1214 = vunpack.c.l.b16 %v884
    %v1215 = vunpack.c.h.b16 %v884
    %v1216 = vunpack.c.l.b16 %v885
    %v1217 = vunpack.c.h.b16 %v885
    %v1218 = vunpack.c.l.b16 %v886
    %v1219 = vunpack.c.h.b16 %v886
    %v1220 = vunpack.c.l.b16 %v887
    %v1221 = vunpack.c.h.b16 %v887
    %v1222 = vunpack.c.l.b16 %v888
    %v1223 = vunpack.c.h.b16 %v888
    %v1224 = vunpack.c.l.b16 %v889
    %v1225 = vunpack.c.h.b16 %v889
    %v1226 = vunpack.c.l.b16 %v890
    %v1227 = vunpack.c.h.b16 %v890
    %v1228 = vunpack.c.l.b16 %v891
    %v1229 = vunpack.c.h.b16 %v891
    %v1230 = vunpack.c.l.b16 %v892
    %v1231 = vunpack.c.h.b16 %v892
    %v1232 = vunpack.c.l.b16 %v893
    %v1233 = vunpack.c.h.b16 %v893
    %v1234 = vunpack.c.l.b16 %v894
    %v1235 = vunpack.c.h.b16 %v894
    %v1236 = vunpack.c.l.b16 %v895
    %v1237 = vunpack.c.h.b16 %v895
    %v1238 = vunpack.c.l.b16 %v896
    %v1239 = vunpack.c.h.b16 %v896
    %v1240 = vunpack.c.l.b16 %v897
    %v1241 = vunpack.c.h.b16 %v897
    %v1242 = vunpack.c.l.b16 %v898
    %v1243 = vunpack.c.h.b16 %v898
    %v1244 = vunpack.c.l.b16 %v899
    %v1245 = vunpack.c.h.b16 %v899
    %v1246 = vunpack.c.l.b16 %v900
    %v1247 = vunpack.c.h.b16 %v900
    %v1248 = vunpack.c.l.b16 %v901
    %v1249 = vunpack.c.h.b16 %v901
    %v1250 = vunpack.c.l.b16 %v902
    %v1251 = vunpack.c.h.b16 %v902
    %v1252 = vunpack.c.l.b16 %v903
    %v1253 = vunpack.c.h.b16 %v903
    %v1254 = vunpack.c.l.b16 %v904
    %v1255 = vunpack.c.h.b16 %v904
    %v1256 = vunpack.c.l.b16 %v905
    %v1257 = vunpack.c.h.b16 %v905
    %v1258 = vunpack.c.l.b16 %v906
    %v1259 = vunpack.c.h.b16 %v906
    %v1260 = vunpack.c.l.b16 %v907
    %v1261 = vunpack.c.h.b16 %v907
    %v1262 = vunpack.c.l.b16 %v908
    %v1263 = vunpack.c.h.b16 %v908
    %v1264 = vunpack.c.l.b16 %v909
    %v1265 = vunpack.c.h.b16 %v909
    %v1266 = vunpack.c.l.b16 %v910
    %v1267 = vunpack.c.h.b16 %v910
    %v1268 = vunpack.c.l.b16 %v911
    %v1269 = vunpack.c.h.b16 %v911
    %v1270 = vunpack.c.l.b16 %v912
    %v1271 = vunpack.c.h.b16 %v912
    %v1272 = vunpack.c.l.b16 %v913
    %v1273 = vunpack.c.h.b16 %v913
    %v1274 = vunpack.c.l.b16 %v914
    %v1275 = vunpack.c.h.b16 %v914
    %v1276 = vunpack.c.l.b16 %v915
    %v1277 = vunpack.c.h.b16 %v915
    %v1278 = vpack.c.b16 %v1218, %v1214
    %v1279 = vpack.c.b16 %v1219, %v1215
    %v1280 = vpack.c.b16 %v1220, %v1216
    %v1281 = vpack.c.b16 %v1221, %v1217
    %v1282 = vpack.c.b16 %v1226, %v1222
    %v1283 = vpack.c.b16 %v1227, %v1223
    %v1284 = vpack.c.b16 %v1228, %v1224
    %v1285 = vpack.c.b16 %v1229, %v1225
    %v1286 = vpack.c.b16 %v1234, %v1230
    %v1287 = vpack.c.b16 %v1235, %v1231
    %v1288 = vpack.c.b16 %v1236, %v1232
    %v1289 = vpack.c.b16 %v1237, %v1233
    %v1290 = vpack.c.b16 %v1242, %v1238
    %v1291 = vpack.c.b16 %v1243, %v1239
    %v1292 = vpack.c.b16 %v1244, %v1240
    %v1293 = vpack.c.b16 %v1245, %v1241
    %v1294 = vpack.c.b16 %v1250, %v1246
    %v1295 = vpack.c.b16 %v1251, %v1247
    %v1296 = vpack.c.b16 %v1252, %v1248
    %v1297 = vpack.c.b16 %v1253, %v1249
    %v1298 = vpack.c.b16 %v1258, %v1254
    %v1299 = vpack.c.b16 %v1259, %v1255
    %v1300 = vpack.c.b16 %v1260, %v1256
    %v1301 = vpack.c.b16 %v1261, %v1257
    %v1302 = vpack.c.b16 %v1266, %v1262
    %v1303 = vpack.c.b16 %v1267, %v1263
    %v1304 = vpack.c.b16 %v1268, %v1264
    %v1305 = vpack.c.b16 %v1269, %v1265
    %v1306 = vpack.c.b16 %v1274, %v1270
    %v1307 = vpack.c.b16 %v1275, %v1271
    %v1308 = vpack.c.b16 %v1276, %v1272
    %v1309 = vpack.c.b16 %v1277, %v1273
    %1342 = vmatpush.bf16.msra.mxu0 %v1306
    %1343 = vmatpush.bf16.msra.mxu0 %v1302
    %1344 = vmatpush.bf16.msra.mxu0 %v1298
    %1345 = vmatpush.bf16.msra.mxu0 %v1294
    %1346 = vmatpush.bf16.msra.mxu0 %v1290
    %1347 = vmatpush.bf16.msra.mxu0 %v1286
    %1348 = vmatpush.bf16.msra.mxu0 %v1282
    %1349 = vmatpush.bf16.msra.mxu0 %v1278
    %1350 = vmatmul.bf16.gmra.mxu0 %v1181
    %v1351 = vpop.f32.mrf.mxu0
    %v1352 = vadd.f32 0.0, %v1351
    %v1353 = vpop.f32.mrf.mxu0
    %1354 = vdwg.mxu0
    %1355 = vmatpush.bf16.msra.mxu0 %v1307
    %1356 = vmatpush.bf16.msra.mxu0 %v1303
    %1357 = vmatpush.bf16.msra.mxu0 %v1299
    %1358 = vmatpush.bf16.msra.mxu0 %v1295
    %1359 = vmatpush.bf16.msra.mxu0 %v1291
    %1360 = vmatpush.bf16.msra.mxu0 %v1287
    %1361 = vmatpush.bf16.msra.mxu0 %v1283
    %1362 = vmatpush.bf16.msra.mxu0 %v1279
    %1363 = vmatmul.bf16.gmra.mxu0 %v1181
    %v1364 = vpop.f32.mrf.mxu0
    %v1365 = vadd.f32 0.0, %v1364
    %v1366 = vpop.f32.mrf.mxu0
    %1367 = vdwg.mxu0
    %1368 = vmatpush.bf16.msra.mxu0 %v1308
    %1369 = vmatpush.bf16.msra.mxu0 %v1304
    %1370 = vmatpush.bf16.msra.mxu0 %v1300
    %1371 = vmatpush.bf16.msra.mxu0 %v1296
    %1372 = vmatpush.bf16.msra.mxu0 %v1292
    %1373 = vmatpush.bf16.msra.mxu0 %v1288
    %1374 = vmatpush.bf16.msra.mxu0 %v1284
    %1375 = vmatpush.bf16.msra.mxu0 %v1280
    %1376 = vmatmul.bf16.gmra.mxu0 %v1181
    %v1377 = vpop.f32.mrf.mxu0
    %v1378 = vadd.f32 0.0, %v1377
    %v1379 = vpop.f32.mrf.mxu0
    %1380 = vdwg.mxu0
    %1381 = vmatpush.bf16.msra.mxu0 %v1309
    %1382 = vmatpush.bf16.msra.mxu0 %v1305
    %1383 = vmatpush.bf16.msra.mxu0 %v1301
    %1384 = vmatpush.bf16.msra.mxu0 %v1297
    %1385 = vmatpush.bf16.msra.mxu0 %v1293
    %1386 = vmatpush.bf16.msra.mxu0 %v1289
    %1387 = vmatpush.bf16.msra.mxu0 %v1285
    %1388 = vmatpush.bf16.msra.mxu0 %v1281
    %1389 = vmatmul.bf16.gmra.mxu0 %v1181
    %v1390 = vpop.f32.mrf.mxu0
    %v1391 = vadd.f32 0.0, %v1390
    %v1392 = vpop.f32.mrf.mxu0
    %1393 = vdwg.mxu0
    %v1394 = vadd.f32 %v1177, %v1352
    %v1395 = vadd.f32 %v1178, %v1365
    %v1396 = vadd.f32 %v1179, %v1378
    %v1397 = vadd.f32 %v1180, %v1391
    %v1398 = vxor.u32 %v1157, 2147483648
    %v1399 = vmul.f32 %v1398, 1.442695
    %v1400 = vpow.pop %v1399
    %v1401 = vadd.f32 %v1400, 1.0
    %v1402 = vrcp.pop %v1401
    %v1403 = vmul.f32 %v1401, %v1402
    %v1404 = vsub.f32 1.0, %v1403
    %v1405 = vmul.f32 %v1402, %v1404
    %v1406 = vadd.f32 %v1402, %v1405
    %vm1407 = vweird.f32 %v1401
    %vm1408 = vweird.f32 %v1402
    %vm1409 = vmor %vm1407, %vm1408
    %v1410 = vsel %vm1409, %v1402, %v1406
    %v1411 = vand.u32 2147483647, %v1401
    %vm1412 = vcmp.eq.f32.partialorder %v1411, 8.507059e+37
    %v1413 = vand.u32 %v1401, 2147483648
    %v1414 = vor.u32 1.1754944e-38, %v1413
    %v1415 = vsel %vm1412, %v1414, %v1410
    %v1416 = vmul.f32 1.0, %v1415
    %v1417 = vxor.u32 %v1158, 2147483648
    %v1418 = vmul.f32 %v1417, 1.442695
    %v1419 = vpow.pop %v1418
    %v1420 = vadd.f32 %v1419, 1.0
    %v1421 = vrcp.pop %v1420
    %v1422 = vmul.f32 %v1420, %v1421
    %v1423 = vsub.f32 1.0, %v1422
    %v1424 = vmul.f32 %v1421, %v1423
    %v1425 = vadd.f32 %v1421, %v1424
    %vm1426 = vweird.f32 %v1420
    %vm1427 = vweird.f32 %v1421
    %vm1428 = vmor %vm1426, %vm1427
    %v1429 = vsel %vm1428, %v1421, %v1425
    %v1430 = vand.u32 2147483647, %v1420
    %vm1431 = vcmp.eq.f32.partialorder %v1430, 8.507059e+37
    %v1432 = vand.u32 %v1420, 2147483648
    %v1433 = vor.u32 1.1754944e-38, %v1432
    %v1434 = vsel %vm1431, %v1433, %v1429
    %v1435 = vmul.f32 1.0, %v1434
    %v1436 = vtanh.pop %v1159
    %v1437 = vxor.u32 %v1160, 2147483648
    %v1438 = vmul.f32 %v1437, 1.442695
    %v1439 = vpow.pop %v1438
    %v1440 = vadd.f32 %v1439, 1.0
    %v1441 = vrcp.pop %v1440
    %v1442 = vmul.f32 %v1440, %v1441
    %v1443 = vsub.f32 1.0, %v1442
    %v1444 = vmul.f32 %v1441, %v1443
    %v1445 = vadd.f32 %v1441, %v1444
    %vm1446 = vweird.f32 %v1440
    %vm1447 = vweird.f32 %v1441
    %vm1448 = vmor %vm1446, %vm1447
    %v1449 = vsel %vm1448, %v1441, %v1445
    %v1450 = vand.u32 2147483647, %v1440
    %vm1451 = vcmp.eq.f32.partialorder %v1450, 8.507059e+37
    %v1452 = vand.u32 %v1440, 2147483648
    %v1453 = vor.u32 1.1754944e-38, %v1452
    %v1454 = vsel %vm1451, %v1453, %v1449
    %v1455 = vmul.f32 1.0, %v1454
    %v1456 = vmul.f32 %v1435, %v920
    %v1457 = vmul.f32 %v1416, %v1436
    %v1458 = vadd.f32 %v1456, %v1457
    %v1459 = vtanh.pop %v1458
    %v1460 = vmul.f32 %v1455, %v1459
    %v1461 = vxor.u32 %v1394, 2147483648
    %v1462 = vmul.f32 %v1461, 1.442695
    %v1463 = vpow.pop %v1462
    %v1464 = vadd.f32 %v1463, 1.0
    %v1465 = vrcp.pop %v1464
    %v1466 = vmul.f32 %v1464, %v1465
    %v1467 = vsub.f32 1.0, %v1466
    %v1468 = vmul.f32 %v1465, %v1467
    %v1469 = vadd.f32 %v1465, %v1468
    %vm1470 = vweird.f32 %v1464
    %vm1471 = vweird.f32 %v1465
    %vm1472 = vmor %vm1470, %vm1471
    %v1473 = vsel %vm1472, %v1465, %v1469
    %v1474 = vand.u32 2147483647, %v1464
    %vm1475 = vcmp.eq.f32.partialorder %v1474, 8.507059e+37
    %v1476 = vand.u32 %v1464, 2147483648
    %v1477 = vor.u32 1.1754944e-38, %v1476
    %v1478 = vsel %vm1475, %v1477, %v1473
    %v1479 = vmul.f32 1.0, %v1478
    %v1480 = vxor.u32 %v1395, 2147483648
    %v1481 = vmul.f32 %v1480, 1.442695
    %v1482 = vpow.pop %v1481
    %v1483 = vadd.f32 %v1482, 1.0
    %v1484 = vrcp.pop %v1483
    %v1485 = vmul.f32 %v1483, %v1484
    %v1486 = vsub.f32 1.0, %v1485
    %v1487 = vmul.f32 %v1484, %v1486
    %v1488 = vadd.f32 %v1484, %v1487
    %vm1489 = vweird.f32 %v1483
    %vm1490 = vweird.f32 %v1484
    %vm1491 = vmor %vm1489, %vm1490
    %v1492 = vsel %vm1491, %v1484, %v1488
    %v1493 = vand.u32 2147483647, %v1483
    %vm1494 = vcmp.eq.f32.partialorder %v1493, 8.507059e+37
    %v1495 = vand.u32 %v1483, 2147483648
    %v1496 = vor.u32 1.1754944e-38, %v1495
    %v1497 = vsel %vm1494, %v1496, %v1492
    %v1498 = vmul.f32 1.0, %v1497
    %v1499 = vtanh.pop %v1396
    %v1500 = vxor.u32 %v1397, 2147483648
    %v1501 = vmul.f32 %v1500, 1.442695
    %v1502 = vpow.pop %v1501
    %v1503 = vadd.f32 %v1502, 1.0
    %v1504 = vrcp.pop %v1503
    %v1505 = vmul.f32 %v1503, %v1504
    %v1506 = vsub.f32 1.0, %v1505
    %v1507 = vmul.f32 %v1504, %v1506
    %v1508 = vadd.f32 %v1504, %v1507
    %vm1509 = vweird.f32 %v1503
    %vm1510 = vweird.f32 %v1504
    %vm1511 = vmor %vm1509, %vm1510
    %v1512 = vsel %vm1511, %v1504, %v1508
    %v1513 = vand.u32 2147483647, %v1503
    %vm1514 = vcmp.eq.f32.partialorder %v1513, 8.507059e+37
    %v1515 = vand.u32 %v1503, 2147483648
    %v1516 = vor.u32 1.1754944e-38, %v1515
    %v1517 = vsel %vm1514, %v1516, %v1512
    %v1518 = vmul.f32 1.0, %v1517
    %v1519 = vmul.f32 %v1498, %v924
    %v1520 = vmul.f32 %v1479, %v1499
    %v1521 = vadd.f32 %v1519, %v1520
    %v1522 = vtanh.pop %v1521
    %v1523 = vmul.f32 %v1518, %v1522
    %vm1524 = vcmp.gt.s32.totalorder %v850, 0
    %vm1525 = vcmp.gt.s32.totalorder %v850, 7
    %v1526 = vsel %vm1524, %v1460, 0.0
    %v1527 = vpack.c.bf16 %v1526, %v1526
    %1528 = vst [vmem:[#allocation16] sm:$0xf] %v1527
    %v1529 = vsel %vm1525, %v1523, 0.0
    %v1530 = vpack.c.bf16 %v1529, %v1529
    %s1531 = scalar_lea.vmem [#allocation17], 28
    %1532 = vst [vmem:[%s1531] sm:$0xf] %v1530
    %v1533 = vsel %vm1524, %v1460, %v919
    %v1534 = vsel %vm1524, %v1458, %v920
    %v1535 = vsel %vm1525, %v1523, %v922
    %v1536 = vsel %vm1525, %v1521, %v924
    %s1537 = scalar_lea.vmem [#allocation2], 16
    %v1538 = vld [vmem:[%s1537] sm:$0xff]
    %v1539 = vld [vmem:[%s1537 + $0x8] sm:$0xff]
    %v1540 = vunpack.c.l.bf16 %v1538
    %v1541 = vunpack.c.h.bf16 %v1538
    %v1542 = vunpack.c.l.bf16 %v1539
    %v1543 = vunpack.c.h.bf16 %v1539
    %v1544 = vadd.f32 %v1540, %v932
    %v1545 = vadd.f32 %v1541, %v933
    %v1546 = vadd.f32 %v1542, %v934
    %v1547 = vadd.f32 %v1543, %v935
    %v1548 = vpack.c.bf16 %v1533, %v1533
    %1549 = vmatpush.bf16.msra.mxu0 %v1069
    %1550 = vmatpush.bf16.msra.mxu0 %v1065
    %1551 = vmatpush.bf16.msra.mxu0 %v1061
    %1552 = vmatpush.bf16.msra.mxu0 %v1057
    %1553 = vmatpush.bf16.msra.mxu0 %v1053
    %1554 = vmatpush.bf16.msra.mxu0 %v1049
    %1555 = vmatpush.bf16.msra.mxu0 %v1045
    %1556 = vmatpush.bf16.msra.mxu0 %v1041
    %1557 = vmatmul.bf16.gmra.mxu0 %v1548
    %v1558 = vpop.f32.mrf.mxu0
    %v1559 = vadd.f32 0.0, %v1558
    %v1560 = vpop.f32.mrf.mxu0
    %1561 = vdwg.mxu0
    %1562 = vmatpush.bf16.msra.mxu0 %v1070
    %1563 = vmatpush.bf16.msra.mxu0 %v1066
    %1564 = vmatpush.bf16.msra.mxu0 %v1062
    %1565 = vmatpush.bf16.msra.mxu0 %v1058
    %1566 = vmatpush.bf16.msra.mxu0 %v1054
    %1567 = vmatpush.bf16.msra.mxu0 %v1050
    %1568 = vmatpush.bf16.msra.mxu0 %v1046
    %1569 = vmatpush.bf16.msra.mxu0 %v1042
    %1570 = vmatmul.bf16.gmra.mxu0 %v1548
    %v1571 = vpop.f32.mrf.mxu0
    %v1572 = vadd.f32 0.0, %v1571
    %v1573 = vpop.f32.mrf.mxu0
    %1574 = vdwg.mxu0
    %1575 = vmatpush.bf16.msra.mxu0 %v1071
    %1576 = vmatpush.bf16.msra.mxu0 %v1067
    %1577 = vmatpush.bf16.msra.mxu0 %v1063
    %1578 = vmatpush.bf16.msra.mxu0 %v1059
    %1579 = vmatpush.bf16.msra.mxu0 %v1055
    %1580 = vmatpush.bf16.msra.mxu0 %v1051
    %1581 = vmatpush.bf16.msra.mxu0 %v1047
    %1582 = vmatpush.bf16.msra.mxu0 %v1043
    %1583 = vmatmul.bf16.gmra.mxu0 %v1548
    %v1584 = vpop.f32.mrf.mxu0
    %v1585 = vadd.f32 0.0, %v1584
    %v1586 = vpop.f32.mrf.mxu0
    %1587 = vdwg.mxu0
    %1588 = vmatpush.bf16.msra.mxu0 %v1072
    %1589 = vmatpush.bf16.msra.mxu0 %v1068
    %1590 = vmatpush.bf16.msra.mxu0 %v1064
    %1591 = vmatpush.bf16.msra.mxu0 %v1060
    %1592 = vmatpush.bf16.msra.mxu0 %v1056
    %1593 = vmatpush.bf16.msra.mxu0 %v1052
    %1594 = vmatpush.bf16.msra.mxu0 %v1048
    %1595 = vmatpush.bf16.msra.mxu0 %v1044
    %1596 = vmatmul.bf16.gmra.mxu0 %v1548
    %v1597 = vpop.f32.mrf.mxu0
    %v1598 = vadd.f32 0.0, %v1597
    %v1599 = vpop.f32.mrf.mxu0
    %1600 = vdwg.mxu0
    %v1601 = vadd.f32 %v1544, %v1559
    %v1602 = vadd.f32 %v1545, %v1572
    %v1603 = vadd.f32 %v1546, %v1585
    %v1604 = vadd.f32 %v1547, %v1598
    %s1605 = scalar_lea.vmem [#allocation3], 96
    %v1606 = vld [vmem:[%s1605] sm:$0xff]
    %v1607 = vld [vmem:[%s1605 + $0x8] sm:$0xff]
    %v1608 = vunpack.c.l.bf16 %v1606
    %v1609 = vunpack.c.h.bf16 %v1606
    %v1610 = vunpack.c.l.bf16 %v1607
    %v1611 = vunpack.c.h.bf16 %v1607
    %v1612 = vadd.f32 %v1608, %v1169
    %v1613 = vadd.f32 %v1609, %v1170
    %v1614 = vadd.f32 %v1610, %v1171
    %v1615 = vadd.f32 %v1611, %v1172
    %v1616 = vpack.c.bf16 %v1535, %v1535
    %1617 = vmatpush.bf16.msra.mxu0 %v1306
    %1618 = vmatpush.bf16.msra.mxu0 %v1302
    %1619 = vmatpush.bf16.msra.mxu0 %v1298
    %1620 = vmatpush.bf16.msra.mxu0 %v1294
    %1621 = vmatpush.bf16.msra.mxu0 %v1290
    %1622 = vmatpush.bf16.msra.mxu0 %v1286
    %1623 = vmatpush.bf16.msra.mxu0 %v1282
    %1624 = vmatpush.bf16.msra.mxu0 %v1278
    %1625 = vmatmul.bf16.gmra.mxu0 %v1616
    %v1626 = vpop.f32.mrf.mxu0
    %v1627 = vadd.f32 0.0, %v1626
    %v1628 = vpop.f32.mrf.mxu0
    %1629 = vdwg.mxu0
    %1630 = vmatpush.bf16.msra.mxu0 %v1307
    %1631 = vmatpush.bf16.msra.mxu0 %v1303
    %1632 = vmatpush.bf16.msra.mxu0 %v1299
    %1633 = vmatpush.bf16.msra.mxu0 %v1295
    %1634 = vmatpush.bf16.msra.mxu0 %v1291
    %1635 = vmatpush.bf16.msra.mxu0 %v1287
    %1636 = vmatpush.bf16.msra.mxu0 %v1283
    %1637 = vmatpush.bf16.msra.mxu0 %v1279
    %1638 = vmatmul.bf16.gmra.mxu0 %v1616
    %v1639 = vpop.f32.mrf.mxu0
    %v1640 = vadd.f32 0.0, %v1639
    %v1641 = vpop.f32.mrf.mxu0
    %1642 = vdwg.mxu0
    %1643 = vmatpush.bf16.msra.mxu0 %v1308
    %1644 = vmatpush.bf16.msra.mxu0 %v1304
    %1645 = vmatpush.bf16.msra.mxu0 %v1300
    %1646 = vmatpush.bf16.msra.mxu0 %v1296
    %1647 = vmatpush.bf16.msra.mxu0 %v1292
    %1648 = vmatpush.bf16.msra.mxu0 %v1288
    %1649 = vmatpush.bf16.msra.mxu0 %v1284
    %1650 = vmatpush.bf16.msra.mxu0 %v1280
    %1651 = vmatmul.bf16.gmra.mxu0 %v1616
    %v1652 = vpop.f32.mrf.mxu0
    %v1653 = vadd.f32 0.0, %v1652
    %v1654 = vpop.f32.mrf.mxu0
    %1655 = vdwg.mxu0
    %1656 = vmatpush.bf16.msra.mxu0 %v1309
    %1657 = vmatpush.bf16.msra.mxu0 %v1305
    %1658 = vmatpush.bf16.msra.mxu0 %v1301
    %1659 = vmatpush.bf16.msra.mxu0 %v1297
    %1660 = vmatpush.bf16.msra.mxu0 %v1293
    %1661 = vmatpush.bf16.msra.mxu0 %v1289
    %1662 = vmatpush.bf16.msra.mxu0 %v1285
    %1663 = vmatpush.bf16.msra.mxu0 %v1281
    %1664 = vmatmul.bf16.gmra.mxu0 %v1616
    %v1665 = vpop.f32.mrf.mxu0
    %v1666 = vadd.f32 0.0, %v1665
    %v1667 = vpop.f32.mrf.mxu0
    %1668 = vdwg.mxu0
    %v1669 = vadd.f32 %v1612, %v1627
    %v1670 = vadd.f32 %v1613, %v1640
    %v1671 = vadd.f32 %v1614, %v1653
    %v1672 = vadd.f32 %v1615, %v1666
    %v1673 = vxor.u32 %v1601, 2147483648
    %v1674 = vmul.f32 %v1673, 1.442695
    %v1675 = vpow.pop %v1674
    %v1676 = vadd.f32 %v1675, 1.0
    %v1677 = vrcp.pop %v1676
    %v1678 = vmul.f32 %v1676, %v1677
    %v1679 = vsub.f32 1.0, %v1678
    %v1680 = vmul.f32 %v1677, %v1679
    %v1681 = vadd.f32 %v1677, %v1680
    %vm1682 = vweird.f32 %v1676
    %vm1683 = vweird.f32 %v1677
    %vm1684 = vmor %vm1682, %vm1683
    %v1685 = vsel %vm1684, %v1677, %v1681
    %v1686 = vand.u32 2147483647, %v1676
    %vm1687 = vcmp.eq.f32.partialorder %v1686, 8.507059e+37
    %v1688 = vand.u32 %v1676, 2147483648
    %v1689 = vor.u32 1.1754944e-38, %v1688
    %v1690 = vsel %vm1687, %v1689, %v1685
    %v1691 = vmul.f32 1.0, %v1690
    %v1692 = vxor.u32 %v1602, 2147483648
    %v1693 = vmul.f32 %v1692, 1.442695
    %v1694 = vpow.pop %v1693
    %v1695 = vadd.f32 %v1694, 1.0
    %v1696 = vrcp.pop %v1695
    %v1697 = vmul.f32 %v1695, %v1696
    %v1698 = vsub.f32 1.0, %v1697
    %v1699 = vmul.f32 %v1696, %v1698
    %v1700 = vadd.f32 %v1696, %v1699
    %vm1701 = vweird.f32 %v1695
    %vm1702 = vweird.f32 %v1696
    %vm1703 = vmor %vm1701, %vm1702
    %v1704 = vsel %vm1703, %v1696, %v1700
    %v1705 = vand.u32 2147483647, %v1695
    %vm1706 = vcmp.eq.f32.partialorder %v1705, 8.507059e+37
    %v1707 = vand.u32 %v1695, 2147483648
    %v1708 = vor.u32 1.1754944e-38, %v1707
    %v1709 = vsel %vm1706, %v1708, %v1704
    %v1710 = vmul.f32 1.0, %v1709
    %v1711 = vtanh.pop %v1603
    %v1712 = vxor.u32 %v1604, 2147483648
    %v1713 = vmul.f32 %v1712, 1.442695
    %v1714 = vpow.pop %v1713
    %v1715 = vadd.f32 %v1714, 1.0
    %v1716 = vrcp.pop %v1715
    %v1717 = vmul.f32 %v1715, %v1716
    %v1718 = vsub.f32 1.0, %v1717
    %v1719 = vmul.f32 %v1716, %v1718
    %v1720 = vadd.f32 %v1716, %v1719
    %vm1721 = vweird.f32 %v1715
    %vm1722 = vweird.f32 %v1716
    %vm1723 = vmor %vm1721, %vm1722
    %v1724 = vsel %vm1723, %v1716, %v1720
    %v1725 = vand.u32 2147483647, %v1715
    %vm1726 = vcmp.eq.f32.partialorder %v1725, 8.507059e+37
    %v1727 = vand.u32 %v1715, 2147483648
    %v1728 = vor.u32 1.1754944e-38, %v1727
    %v1729 = vsel %vm1726, %v1728, %v1724
    %v1730 = vmul.f32 1.0, %v1729
    %v1731 = vmul.f32 %v1710, %v1534
    %v1732 = vmul.f32 %v1691, %v1711
    %v1733 = vadd.f32 %v1731, %v1732
    %v1734 = vtanh.pop %v1733
    %v1735 = vmul.f32 %v1730, %v1734
    %v1736 = vxor.u32 %v1669, 2147483648
    %v1737 = vmul.f32 %v1736, 1.442695
    %v1738 = vpow.pop %v1737
    %v1739 = vadd.f32 %v1738, 1.0
    %v1740 = vrcp.pop %v1739
    %v1741 = vmul.f32 %v1739, %v1740
    %v1742 = vsub.f32 1.0, %v1741
    %v1743 = vmul.f32 %v1740, %v1742
    %v1744 = vadd.f32 %v1740, %v1743
    %vm1745 = vweird.f32 %v1739
    %vm1746 = vweird.f32 %v1740
    %vm1747 = vmor %vm1745, %vm1746
    %v1748 = vsel %vm1747, %v1740, %v1744
    %v1749 = vand.u32 2147483647, %v1739
    %vm1750 = vcmp.eq.f32.partialorder %v1749, 8.507059e+37
    %v1751 = vand.u32 %v1739, 2147483648
    %v1752 = vor.u32 1.1754944e-38, %v1751
    %v1753 = vsel %vm1750, %v1752, %v1748
    %v1754 = vmul.f32 1.0, %v1753
    %v1755 = vxor.u32 %v1670, 2147483648
    %v1756 = vmul.f32 %v1755, 1.442695
    %v1757 = vpow.pop %v1756
    %v1758 = vadd.f32 %v1757, 1.0
    %v1759 = vrcp.pop %v1758
    %v1760 = vmul.f32 %v1758, %v1759
    %v1761 = vsub.f32 1.0, %v1760
    %v1762 = vmul.f32 %v1759, %v1761
    %v1763 = vadd.f32 %v1759, %v1762
    %vm1764 = vweird.f32 %v1758
    %vm1765 = vweird.f32 %v1759
    %vm1766 = vmor %vm1764, %vm1765
    %v1767 = vsel %vm1766, %v1759, %v1763
    %v1768 = vand.u32 2147483647, %v1758
    %vm1769 = vcmp.eq.f32.partialorder %v1768, 8.507059e+37
    %v1770 = vand.u32 %v1758, 2147483648
    %v1771 = vor.u32 1.1754944e-38, %v1770
    %v1772 = vsel %vm1769, %v1771, %v1767
    %v1773 = vmul.f32 1.0, %v1772
    %v1774 = vtanh.pop %v1671
    %v1775 = vxor.u32 %v1672, 2147483648
    %v1776 = vmul.f32 %v1775, 1.442695
    %v1777 = vpow.pop %v1776
    %v1778 = vadd.f32 %v1777, 1.0
    %v1779 = vrcp.pop %v1778
    %v1780 = vmul.f32 %v1778, %v1779
    %v1781 = vsub.f32 1.0, %v1780
    %v1782 = vmul.f32 %v1779, %v1781
    %v1783 = vadd.f32 %v1779, %v1782
    %vm1784 = vweird.f32 %v1778
    %vm1785 = vweird.f32 %v1779
    %vm1786 = vmor %vm1784, %vm1785
    %v1787 = vsel %vm1786, %v1779, %v1783
    %v1788 = vand.u32 2147483647, %v1778
    %vm1789 = vcmp.eq.f32.partialorder %v1788, 8.507059e+37
    %v1790 = vand.u32 %v1778, 2147483648
    %v1791 = vor.u32 1.1754944e-38, %v1790
    %v1792 = vsel %vm1789, %v1791, %v1787
    %v1793 = vmul.f32 1.0, %v1792
    %v1794 = vmul.f32 %v1773, %v1536
    %v1795 = vmul.f32 %v1754, %v1774
    %v1796 = vadd.f32 %v1794, %v1795
    %v1797 = vtanh.pop %v1796
    %v1798 = vmul.f32 %v1793, %v1797
    %vm1799 = vcmp.gt.s32.totalorder %v850, 1
    %vm1800 = vcmp.gt.s32.totalorder %v850, 6
    %v1801 = vsel %vm1799, %v1735, 0.0
    %v1802 = vpack.c.bf16 %v1801, %v1801
    %s1803 = scalar_lea.vmem [#allocation16], 4
    %1804 = vst [vmem:[%s1803] sm:$0xf] %v1802
    %v1805 = vsel %vm1800, %v1798, 0.0
    %v1806 = vpack.c.bf16 %v1805, %v1805
    %s1807 = scalar_lea.vmem [#allocation17], 24
    %1808 = vst [vmem:[%s1807] sm:$0xf] %v1806
    %v1809 = vsel %vm1799, %v1735, %v1533
    %v1810 = vsel %vm1799, %v1733, %v1534
    %v1811 = vsel %vm1800, %v1798, %v1535
    %v1812 = vsel %vm1800, %v1796, %v1536
    %s1813 = scalar_lea.vmem [#allocation2], 32
    %v1814 = vld [vmem:[%s1813] sm:$0xff]
    %v1815 = vld [vmem:[%s1813 + $0x8] sm:$0xff]
    %v1816 = vunpack.c.l.bf16 %v1814
    %v1817 = vunpack.c.h.bf16 %v1814
    %v1818 = vunpack.c.l.bf16 %v1815
    %v1819 = vunpack.c.h.bf16 %v1815
    %v1820 = vadd.f32 %v1816, %v932
    %v1821 = vadd.f32 %v1817, %v933
    %v1822 = vadd.f32 %v1818, %v934
    %v1823 = vadd.f32 %v1819, %v935
    %v1824 = vpack.c.bf16 %v1809, %v1809
    %1825 = vmatpush.bf16.msra.mxu0 %v1069
    %1826 = vmatpush.bf16.msra.mxu0 %v1065
    %1827 = vmatpush.bf16.msra.mxu0 %v1061
    %1828 = vmatpush.bf16.msra.mxu0 %v1057
    %1829 = vmatpush.bf16.msra.mxu0 %v1053
    %1830 = vmatpush.bf16.msra.mxu0 %v1049
    %1831 = vmatpush.bf16.msra.mxu0 %v1045
    %1832 = vmatpush.bf16.msra.mxu0 %v1041
    %1833 = vmatmul.bf16.gmra.mxu0 %v1824
    %v1834 = vpop.f32.mrf.mxu0
    %v1835 = vadd.f32 0.0, %v1834
    %v1836 = vpop.f32.mrf.mxu0
    %1837 = vdwg.mxu0
    %1838 = vmatpush.bf16.msra.mxu0 %v1070
    %1839 = vmatpush.bf16.msra.mxu0 %v1066
    %1840 = vmatpush.bf16.msra.mxu0 %v1062
    %1841 = vmatpush.bf16.msra.mxu0 %v1058
    %1842 = vmatpush.bf16.msra.mxu0 %v1054
    %1843 = vmatpush.bf16.msra.mxu0 %v1050
    %1844 = vmatpush.bf16.msra.mxu0 %v1046
    %1845 = vmatpush.bf16.msra.mxu0 %v1042
    %1846 = vmatmul.bf16.gmra.mxu0 %v1824
    %v1847 = vpop.f32.mrf.mxu0
    %v1848 = vadd.f32 0.0, %v1847
    %v1849 = vpop.f32.mrf.mxu0
    %1850 = vdwg.mxu0
    %1851 = vmatpush.bf16.msra.mxu0 %v1071
    %1852 = vmatpush.bf16.msra.mxu0 %v1067
    %1853 = vmatpush.bf16.msra.mxu0 %v1063
    %1854 = vmatpush.bf16.msra.mxu0 %v1059
    %1855 = vmatpush.bf16.msra.mxu0 %v1055
    %1856 = vmatpush.bf16.msra.mxu0 %v1051
    %1857 = vmatpush.bf16.msra.mxu0 %v1047
    %1858 = vmatpush.bf16.msra.mxu0 %v1043
    %1859 = vmatmul.bf16.gmra.mxu0 %v1824
    %v1860 = vpop.f32.mrf.mxu0
    %v1861 = vadd.f32 0.0, %v1860
    %v1862 = vpop.f32.mrf.mxu0
    %1863 = vdwg.mxu0
    %1864 = vmatpush.bf16.msra.mxu0 %v1072
    %1865 = vmatpush.bf16.msra.mxu0 %v1068
    %1866 = vmatpush.bf16.msra.mxu0 %v1064
    %1867 = vmatpush.bf16.msra.mxu0 %v1060
    %1868 = vmatpush.bf16.msra.mxu0 %v1056
    %1869 = vmatpush.bf16.msra.mxu0 %v1052
    %1870 = vmatpush.bf16.msra.mxu0 %v1048
    %1871 = vmatpush.bf16.msra.mxu0 %v1044
    %1872 = vmatmul.bf16.gmra.mxu0 %v1824
    %v1873 = vpop.f32.mrf.mxu0
    %v1874 = vadd.f32 0.0, %v1873
    %v1875 = vpop.f32.mrf.mxu0
    %1876 = vdwg.mxu0
    %v1877 = vadd.f32 %v1820, %v1835
    %v1878 = vadd.f32 %v1821, %v1848
    %v1879 = vadd.f32 %v1822, %v1861
    %v1880 = vadd.f32 %v1823, %v1874
    %s1881 = scalar_lea.vmem [#allocation3], 80
    %v1882 = vld [vmem:[%s1881] sm:$0xff]
    %v1883 = vld [vmem:[%s1881 + $0x8] sm:$0xff]
    %v1884 = vunpack.c.l.bf16 %v1882
    %v1885 = vunpack.c.h.bf16 %v1882
    %v1886 = vunpack.c.l.bf16 %v1883
    %v1887 = vunpack.c.h.bf16 %v1883
    %v1888 = vadd.f32 %v1884, %v1169
    %v1889 = vadd.f32 %v1885, %v1170
    %v1890 = vadd.f32 %v1886, %v1171
    %v1891 = vadd.f32 %v1887, %v1172
    %v1892 = vpack.c.bf16 %v1811, %v1811
    %1893 = vmatpush.bf16.msra.mxu0 %v1306
    %1894 = vmatpush.bf16.msra.mxu0 %v1302
    %1895 = vmatpush.bf16.msra.mxu0 %v1298
    %1896 = vmatpush.bf16.msra.mxu0 %v1294
    %1897 = vmatpush.bf16.msra.mxu0 %v1290
    %1898 = vmatpush.bf16.msra.mxu0 %v1286
    %1899 = vmatpush.bf16.msra.mxu0 %v1282
    %1900 = vmatpush.bf16.msra.mxu0 %v1278
    %1901 = vmatmul.bf16.gmra.mxu0 %v1892
    %v1902 = vpop.f32.mrf.mxu0
    %v1903 = vadd.f32 0.0, %v1902
    %v1904 = vpop.f32.mrf.mxu0
    %1905 = vdwg.mxu0
    %1906 = vmatpush.bf16.msra.mxu0 %v1307
    %1907 = vmatpush.bf16.msra.mxu0 %v1303
    %1908 = vmatpush.bf16.msra.mxu0 %v1299
    %1909 = vmatpush.bf16.msra.mxu0 %v1295
    %1910 = vmatpush.bf16.msra.mxu0 %v1291
    %1911 = vmatpush.bf16.msra.mxu0 %v1287
    %1912 = vmatpush.bf16.msra.mxu0 %v1283
    %1913 = vmatpush.bf16.msra.mxu0 %v1279
    %1914 = vmatmul.bf16.gmra.mxu0 %v1892
    %v1915 = vpop.f32.mrf.mxu0
    %v1916 = vadd.f32 0.0, %v1915
    %v1917 = vpop.f32.mrf.mxu0
    %1918 = vdwg.mxu0
    %1919 = vmatpush.bf16.msra.mxu0 %v1308
    %1920 = vmatpush.bf16.msra.mxu0 %v1304
    %1921 = vmatpush.bf16.msra.mxu0 %v1300
    %1922 = vmatpush.bf16.msra.mxu0 %v1296
    %1923 = vmatpush.bf16.msra.mxu0 %v1292
    %1924 = vmatpush.bf16.msra.mxu0 %v1288
    %1925 = vmatpush.bf16.msra.mxu0 %v1284
    %1926 = vmatpush.bf16.msra.mxu0 %v1280
    %1927 = vmatmul.bf16.gmra.mxu0 %v1892
    %v1928 = vpop.f32.mrf.mxu0
    %v1929 = vadd.f32 0.0, %v1928
    %v1930 = vpop.f32.mrf.mxu0
    %1931 = vdwg.mxu0
    %1932 = vmatpush.bf16.msra.mxu0 %v1309
    %1933 = vmatpush.bf16.msra.mxu0 %v1305
    %1934 = vmatpush.bf16.msra.mxu0 %v1301
    %1935 = vmatpush.bf16.msra.mxu0 %v1297
    %1936 = vmatpush.bf16.msra.mxu0 %v1293
    %1937 = vmatpush.bf16.msra.mxu0 %v1289
    %1938 = vmatpush.bf16.msra.mxu0 %v1285
    %1939 = vmatpush.bf16.msra.mxu0 %v1281
    %1940 = vmatmul.bf16.gmra.mxu0 %v1892
    %v1941 = vpop.f32.mrf.mxu0
    %v1942 = vadd.f32 0.0, %v1941
    %v1943 = vpop.f32.mrf.mxu0
    %1944 = vdwg.mxu0
    %v1945 = vadd.f32 %v1888, %v1903
    %v1946 = vadd.f32 %v1889, %v1916
    %v1947 = vadd.f32 %v1890, %v1929
    %v1948 = vadd.f32 %v1891, %v1942
    %v1949 = vxor.u32 %v1877, 2147483648
    %v1950 = vmul.f32 %v1949, 1.442695
    %v1951 = vpow.pop %v1950
    %v1952 = vadd.f32 %v1951, 1.0
    %v1953 = vrcp.pop %v1952
    %v1954 = vmul.f32 %v1952, %v1953
    %v1955 = vsub.f32 1.0, %v1954
    %v1956 = vmul.f32 %v1953, %v1955
    %v1957 = vadd.f32 %v1953, %v1956
    %vm1958 = vweird.f32 %v1952
    %vm1959 = vweird.f32 %v1953
    %vm1960 = vmor %vm1958, %vm1959
    %v1961 = vsel %vm1960, %v1953, %v1957
    %v1962 = vand.u32 2147483647, %v1952
    %vm1963 = vcmp.eq.f32.partialorder %v1962, 8.507059e+37
    %v1964 = vand.u32 %v1952, 2147483648
    %v1965 = vor.u32 1.1754944e-38, %v1964
    %v1966 = vsel %vm1963, %v1965, %v1961
    %v1967 = vmul.f32 1.0, %v1966
    %v1968 = vxor.u32 %v1878, 2147483648
    %v1969 = vmul.f32 %v1968, 1.442695
    %v1970 = vpow.pop %v1969
    %v1971 = vadd.f32 %v1970, 1.0
    %v1972 = vrcp.pop %v1971
    %v1973 = vmul.f32 %v1971, %v1972
    %v1974 = vsub.f32 1.0, %v1973
    %v1975 = vmul.f32 %v1972, %v1974
    %v1976 = vadd.f32 %v1972, %v1975
    %vm1977 = vweird.f32 %v1971
    %vm1978 = vweird.f32 %v1972
    %vm1979 = vmor %vm1977, %vm1978
    %v1980 = vsel %vm1979, %v1972, %v1976
    %v1981 = vand.u32 2147483647, %v1971
    %vm1982 = vcmp.eq.f32.partialorder %v1981, 8.507059e+37
    %v1983 = vand.u32 %v1971, 2147483648
    %v1984 = vor.u32 1.1754944e-38, %v1983
    %v1985 = vsel %vm1982, %v1984, %v1980
    %v1986 = vmul.f32 1.0, %v1985
    %v1987 = vtanh.pop %v1879
    %v1988 = vxor.u32 %v1880, 2147483648
    %v1989 = vmul.f32 %v1988, 1.442695
    %v1990 = vpow.pop %v1989
    %v1991 = vadd.f32 %v1990, 1.0
    %v1992 = vrcp.pop %v1991
    %v1993 = vmul.f32 %v1991, %v1992
    %v1994 = vsub.f32 1.0, %v1993
    %v1995 = vmul.f32 %v1992, %v1994
    %v1996 = vadd.f32 %v1992, %v1995
    %vm1997 = vweird.f32 %v1991
    %vm1998 = vweird.f32 %v1992
    %vm1999 = vmor %vm1997, %vm1998
    %v2000 = vsel %vm1999, %v1992, %v1996
    %v2001 = vand.u32 2147483647, %v1991
    %vm2002 = vcmp.eq.f32.partialorder %v2001, 8.507059e+37
    %v2003 = vand.u32 %v1991, 2147483648
    %v2004 = vor.u32 1.1754944e-38, %v2003
    %v2005 = vsel %vm2002, %v2004, %v2000
    %v2006 = vmul.f32 1.0, %v2005
    %v2007 = vmul.f32 %v1986, %v1810
    %v2008 = vmul.f32 %v1967, %v1987
    %v2009 = vadd.f32 %v2007, %v2008
    %v2010 = vtanh.pop %v2009
    %v2011 = vmul.f32 %v2006, %v2010
    %v2012 = vxor.u32 %v1945, 2147483648
    %v2013 = vmul.f32 %v2012, 1.442695
    %v2014 = vpow.pop %v2013
    %v2015 = vadd.f32 %v2014, 1.0
    %v2016 = vrcp.pop %v2015
    %v2017 = vmul.f32 %v2015, %v2016
    %v2018 = vsub.f32 1.0, %v2017
    %v2019 = vmul.f32 %v2016, %v2018
    %v2020 = vadd.f32 %v2016, %v2019
    %vm2021 = vweird.f32 %v2015
    %vm2022 = vweird.f32 %v2016
    %vm2023 = vmor %vm2021, %vm2022
    %v2024 = vsel %vm2023, %v2016, %v2020
    %v2025 = vand.u32 2147483647, %v2015
    %vm2026 = vcmp.eq.f32.partialorder %v2025, 8.507059e+37
    %v2027 = vand.u32 %v2015, 2147483648
    %v2028 = vor.u32 1.1754944e-38, %v2027
    %v2029 = vsel %vm2026, %v2028, %v2024
    %v2030 = vmul.f32 1.0, %v2029
    %v2031 = vxor.u32 %v1946, 2147483648
    %v2032 = vmul.f32 %v2031, 1.442695
    %v2033 = vpow.pop %v2032
    %v2034 = vadd.f32 %v2033, 1.0
    %v2035 = vrcp.pop %v2034
    %v2036 = vmul.f32 %v2034, %v2035
    %v2037 = vsub.f32 1.0, %v2036
    %v2038 = vmul.f32 %v2035, %v2037
    %v2039 = vadd.f32 %v2035, %v2038
    %vm2040 = vweird.f32 %v2034
    %vm2041 = vweird.f32 %v2035
    %vm2042 = vmor %vm2040, %vm2041
    %v2043 = vsel %vm2042, %v2035, %v2039
    %v2044 = vand.u32 2147483647, %v2034
    %vm2045 = vcmp.eq.f32.partialorder %v2044, 8.507059e+37
    %v2046 = vand.u32 %v2034, 2147483648
    %v2047 = vor.u32 1.1754944e-38, %v2046
    %v2048 = vsel %vm2045, %v2047, %v2043
    %v2049 = vmul.f32 1.0, %v2048
    %v2050 = vtanh.pop %v1947
    %v2051 = vxor.u32 %v1948, 2147483648
    %v2052 = vmul.f32 %v2051, 1.442695
    %v2053 = vpow.pop %v2052
    %v2054 = vadd.f32 %v2053, 1.0
    %v2055 = vrcp.pop %v2054
    %v2056 = vmul.f32 %v2054, %v2055
    %v2057 = vsub.f32 1.0, %v2056
    %v2058 = vmul.f32 %v2055, %v2057
    %v2059 = vadd.f32 %v2055, %v2058
    %vm2060 = vweird.f32 %v2054
    %vm2061 = vweird.f32 %v2055
    %vm2062 = vmor %vm2060, %vm2061
    %v2063 = vsel %vm2062, %v2055, %v2059
    %v2064 = vand.u32 2147483647, %v2054
    %vm2065 = vcmp.eq.f32.partialorder %v2064, 8.507059e+37
    %v2066 = vand.u32 %v2054, 2147483648
    %v2067 = vor.u32 1.1754944e-38, %v2066
    %v2068 = vsel %vm2065, %v2067, %v2063
    %v2069 = vmul.f32 1.0, %v2068
    %v2070 = vmul.f32 %v2049, %v1812
    %v2071 = vmul.f32 %v2030, %v2050
    %v2072 = vadd.f32 %v2070, %v2071
    %v2073 = vtanh.pop %v2072
    %v2074 = vmul.f32 %v2069, %v2073
    %vm2075 = vcmp.gt.s32.totalorder %v850, 2
    %vm2076 = vcmp.gt.s32.totalorder %v850, 5
    %v2077 = vsel %vm2075, %v2011, 0.0
    %v2078 = vpack.c.bf16 %v2077, %v2077
    %s2079 = scalar_lea.vmem [#allocation16], 8
    %2080 = vst [vmem:[%s2079] sm:$0xf] %v2078
    %v2081 = vsel %vm2076, %v2074, 0.0
    %v2082 = vpack.c.bf16 %v2081, %v2081
    %s2083 = scalar_lea.vmem [#allocation17], 20
    %2084 = vst [vmem:[%s2083] sm:$0xf] %v2082
    %v2085 = vsel %vm2075, %v2011, %v1809
    %v2086 = vsel %vm2075, %v2009, %v1810
    %v2087 = vsel %vm2076, %v2074, %v1811
    %v2088 = vsel %vm2076, %v2072, %v1812
    %s2089 = scalar_lea.vmem [#allocation2], 48
    %v2090 = vld [vmem:[%s2089] sm:$0xff]
    %v2091 = vld [vmem:[%s2089 + $0x8] sm:$0xff]
    %v2092 = vunpack.c.l.bf16 %v2090
    %v2093 = vunpack.c.h.bf16 %v2090
    %v2094 = vunpack.c.l.bf16 %v2091
    %v2095 = vunpack.c.h.bf16 %v2091
    %v2096 = vadd.f32 %v2092, %v932
    %v2097 = vadd.f32 %v2093, %v933
    %v2098 = vadd.f32 %v2094, %v934
    %v2099 = vadd.f32 %v2095, %v935
    %v2100 = vpack.c.bf16 %v2085, %v2085
    %2101 = vmatpush.bf16.msra.mxu0 %v1069
    %2102 = vmatpush.bf16.msra.mxu0 %v1065
    %2103 = vmatpush.bf16.msra.mxu0 %v1061
    %2104 = vmatpush.bf16.msra.mxu0 %v1057
    %2105 = vmatpush.bf16.msra.mxu0 %v1053
    %2106 = vmatpush.bf16.msra.mxu0 %v1049
    %2107 = vmatpush.bf16.msra.mxu0 %v1045
    %2108 = vmatpush.bf16.msra.mxu0 %v1041
    %2109 = vmatmul.bf16.gmra.mxu0 %v2100
    %v2110 = vpop.f32.mrf.mxu0
    %v2111 = vadd.f32 0.0, %v2110
    %v2112 = vpop.f32.mrf.mxu0
    %2113 = vdwg.mxu0
    %2114 = vmatpush.bf16.msra.mxu0 %v1070
    %2115 = vmatpush.bf16.msra.mxu0 %v1066
    %2116 = vmatpush.bf16.msra.mxu0 %v1062
    %2117 = vmatpush.bf16.msra.mxu0 %v1058
    %2118 = vmatpush.bf16.msra.mxu0 %v1054
    %2119 = vmatpush.bf16.msra.mxu0 %v1050
    %2120 = vmatpush.bf16.msra.mxu0 %v1046
    %2121 = vmatpush.bf16.msra.mxu0 %v1042
    %2122 = vmatmul.bf16.gmra.mxu0 %v2100
    %v2123 = vpop.f32.mrf.mxu0
    %v2124 = vadd.f32 0.0, %v2123
    %v2125 = vpop.f32.mrf.mxu0
    %2126 = vdwg.mxu0
    %2127 = vmatpush.bf16.msra.mxu0 %v1071
    %2128 = vmatpush.bf16.msra.mxu0 %v1067
    %2129 = vmatpush.bf16.msra.mxu0 %v1063
    %2130 = vmatpush.bf16.msra.mxu0 %v1059
    %2131 = vmatpush.bf16.msra.mxu0 %v1055
    %2132 = vmatpush.bf16.msra.mxu0 %v1051
    %2133 = vmatpush.bf16.msra.mxu0 %v1047
    %2134 = vmatpush.bf16.msra.mxu0 %v1043
    %2135 = vmatmul.bf16.gmra.mxu0 %v2100
    %v2136 = vpop.f32.mrf.mxu0
    %v2137 = vadd.f32 0.0, %v2136
    %v2138 = vpop.f32.mrf.mxu0
    %2139 = vdwg.mxu0
    %2140 = vmatpush.bf16.msra.mxu0 %v1072
    %2141 = vmatpush.bf16.msra.mxu0 %v1068
    %2142 = vmatpush.bf16.msra.mxu0 %v1064
    %2143 = vmatpush.bf16.msra.mxu0 %v1060
    %2144 = vmatpush.bf16.msra.mxu0 %v1056
    %2145 = vmatpush.bf16.msra.mxu0 %v1052
    %2146 = vmatpush.bf16.msra.mxu0 %v1048
    %2147 = vmatpush.bf16.msra.mxu0 %v1044
    %2148 = vmatmul.bf16.gmra.mxu0 %v2100
    %v2149 = vpop.f32.mrf.mxu0
    %v2150 = vadd.f32 0.0, %v2149
    %v2151 = vpop.f32.mrf.mxu0
    %2152 = vdwg.mxu0
    %v2153 = vadd.f32 %v2096, %v2111
    %v2154 = vadd.f32 %v2097, %v2124
    %v2155 = vadd.f32 %v2098, %v2137
    %v2156 = vadd.f32 %v2099, %v2150
    %s2157 = scalar_lea.vmem [#allocation3], 64
    %v2158 = vld [vmem:[%s2157] sm:$0xff]
    %v2159 = vld [vmem:[%s2157 + $0x8] sm:$0xff]
    %v2160 = vunpack.c.l.bf16 %v2158
    %v2161 = vunpack.c.h.bf16 %v2158
    %v2162 = vunpack.c.l.bf16 %v2159
    %v2163 = vunpack.c.h.bf16 %v2159
    %v2164 = vadd.f32 %v2160, %v1169
    %v2165 = vadd.f32 %v2161, %v1170
    %v2166 = vadd.f32 %v2162, %v1171
    %v2167 = vadd.f32 %v2163, %v1172
    %v2168 = vpack.c.bf16 %v2087, %v2087
    %2169 = vmatpush.bf16.msra.mxu0 %v1306
    %2170 = vmatpush.bf16.msra.mxu0 %v1302
    %2171 = vmatpush.bf16.msra.mxu0 %v1298
    %2172 = vmatpush.bf16.msra.mxu0 %v1294
    %2173 = vmatpush.bf16.msra.mxu0 %v1290
    %2174 = vmatpush.bf16.msra.mxu0 %v1286
    %2175 = vmatpush.bf16.msra.mxu0 %v1282
    %2176 = vmatpush.bf16.msra.mxu0 %v1278
    %2177 = vmatmul.bf16.gmra.mxu0 %v2168
    %v2178 = vpop.f32.mrf.mxu0
    %v2179 = vadd.f32 0.0, %v2178
    %v2180 = vpop.f32.mrf.mxu0
    %2181 = vdwg.mxu0
    %2182 = vmatpush.bf16.msra.mxu0 %v1307
    %2183 = vmatpush.bf16.msra.mxu0 %v1303
    %2184 = vmatpush.bf16.msra.mxu0 %v1299
    %2185 = vmatpush.bf16.msra.mxu0 %v1295
    %2186 = vmatpush.bf16.msra.mxu0 %v1291
    %2187 = vmatpush.bf16.msra.mxu0 %v1287
    %2188 = vmatpush.bf16.msra.mxu0 %v1283
    %2189 = vmatpush.bf16.msra.mxu0 %v1279
    %2190 = vmatmul.bf16.gmra.mxu0 %v2168
    %v2191 = vpop.f32.mrf.mxu0
    %v2192 = vadd.f32 0.0, %v2191
    %v2193 = vpop.f32.mrf.mxu0
    %2194 = vdwg.mxu0
    %2195 = vmatpush.bf16.msra.mxu0 %v1308
    %2196 = vmatpush.bf16.msra.mxu0 %v1304
    %2197 = vmatpush.bf16.msra.mxu0 %v1300
    %2198 = vmatpush.bf16.msra.mxu0 %v1296
    %2199 = vmatpush.bf16.msra.mxu0 %v1292
    %2200 = vmatpush.bf16.msra.mxu0 %v1288
    %2201 = vmatpush.bf16.msra.mxu0 %v1284
    %2202 = vmatpush.bf16.msra.mxu0 %v1280
    %2203 = vmatmul.bf16.gmra.mxu0 %v2168
    %v2204 = vpop.f32.mrf.mxu0
    %v2205 = vadd.f32 0.0, %v2204
    %v2206 = vpop.f32.mrf.mxu0
    %2207 = vdwg.mxu0
    %2208 = vmatpush.bf16.msra.mxu0 %v1309
    %2209 = vmatpush.bf16.msra.mxu0 %v1305
    %2210 = vmatpush.bf16.msra.mxu0 %v1301
    %2211 = vmatpush.bf16.msra.mxu0 %v1297
    %2212 = vmatpush.bf16.msra.mxu0 %v1293
    %2213 = vmatpush.bf16.msra.mxu0 %v1289
    %2214 = vmatpush.bf16.msra.mxu0 %v1285
    %2215 = vmatpush.bf16.msra.mxu0 %v1281
    %2216 = vmatmul.bf16.gmra.mxu0 %v2168
    %v2217 = vpop.f32.mrf.mxu0
    %v2218 = vadd.f32 0.0, %v2217
    %v2219 = vpop.f32.mrf.mxu0
    %2220 = vdwg.mxu0
    %v2221 = vadd.f32 %v2164, %v2179
    %v2222 = vadd.f32 %v2165, %v2192
    %v2223 = vadd.f32 %v2166, %v2205
    %v2224 = vadd.f32 %v2167, %v2218
    %v2225 = vxor.u32 %v2153, 2147483648
    %v2226 = vmul.f32 %v2225, 1.442695
    %v2227 = vpow.pop %v2226
    %v2228 = vadd.f32 %v2227, 1.0
    %v2229 = vrcp.pop %v2228
    %v2230 = vmul.f32 %v2228, %v2229
    %v2231 = vsub.f32 1.0, %v2230
    %v2232 = vmul.f32 %v2229, %v2231
    %v2233 = vadd.f32 %v2229, %v2232
    %vm2234 = vweird.f32 %v2228
    %vm2235 = vweird.f32 %v2229
    %vm2236 = vmor %vm2234, %vm2235
    %v2237 = vsel %vm2236, %v2229, %v2233
    %v2238 = vand.u32 2147483647, %v2228
    %vm2239 = vcmp.eq.f32.partialorder %v2238, 8.507059e+37
    %v2240 = vand.u32 %v2228, 2147483648
    %v2241 = vor.u32 1.1754944e-38, %v2240
    %v2242 = vsel %vm2239, %v2241, %v2237
    %v2243 = vmul.f32 1.0, %v2242
    %v2244 = vxor.u32 %v2154, 2147483648
    %v2245 = vmul.f32 %v2244, 1.442695
    %v2246 = vpow.pop %v2245
    %v2247 = vadd.f32 %v2246, 1.0
    %v2248 = vrcp.pop %v2247
    %v2249 = vmul.f32 %v2247, %v2248
    %v2250 = vsub.f32 1.0, %v2249
    %v2251 = vmul.f32 %v2248, %v2250
    %v2252 = vadd.f32 %v2248, %v2251
    %vm2253 = vweird.f32 %v2247
    %vm2254 = vweird.f32 %v2248
    %vm2255 = vmor %vm2253, %vm2254
    %v2256 = vsel %vm2255, %v2248, %v2252
    %v2257 = vand.u32 2147483647, %v2247
    %vm2258 = vcmp.eq.f32.partialorder %v2257, 8.507059e+37
    %v2259 = vand.u32 %v2247, 2147483648
    %v2260 = vor.u32 1.1754944e-38, %v2259
    %v2261 = vsel %vm2258, %v2260, %v2256
    %v2262 = vmul.f32 1.0, %v2261
    %v2263 = vtanh.pop %v2155
    %v2264 = vxor.u32 %v2156, 2147483648
    %v2265 = vmul.f32 %v2264, 1.442695
    %v2266 = vpow.pop %v2265
    %v2267 = vadd.f32 %v2266, 1.0
    %v2268 = vrcp.pop %v2267
    %v2269 = vmul.f32 %v2267, %v2268
    %v2270 = vsub.f32 1.0, %v2269
    %v2271 = vmul.f32 %v2268, %v2270
    %v2272 = vadd.f32 %v2268, %v2271
    %vm2273 = vweird.f32 %v2267
    %vm2274 = vweird.f32 %v2268
    %vm2275 = vmor %vm2273, %vm2274
    %v2276 = vsel %vm2275, %v2268, %v2272
    %v2277 = vand.u32 2147483647, %v2267
    %vm2278 = vcmp.eq.f32.partialorder %v2277, 8.507059e+37
    %v2279 = vand.u32 %v2267, 2147483648
    %v2280 = vor.u32 1.1754944e-38, %v2279
    %v2281 = vsel %vm2278, %v2280, %v2276
    %v2282 = vmul.f32 1.0, %v2281
    %v2283 = vmul.f32 %v2262, %v2086
    %v2284 = vmul.f32 %v2243, %v2263
    %v2285 = vadd.f32 %v2283, %v2284
    %v2286 = vtanh.pop %v2285
    %v2287 = vmul.f32 %v2282, %v2286
    %v2288 = vxor.u32 %v2221, 2147483648
    %v2289 = vmul.f32 %v2288, 1.442695
    %v2290 = vpow.pop %v2289
    %v2291 = vadd.f32 %v2290, 1.0
    %v2292 = vrcp.pop %v2291
    %v2293 = vmul.f32 %v2291, %v2292
    %v2294 = vsub.f32 1.0, %v2293
    %v2295 = vmul.f32 %v2292, %v2294
    %v2296 = vadd.f32 %v2292, %v2295
    %vm2297 = vweird.f32 %v2291
    %vm2298 = vweird.f32 %v2292
    %vm2299 = vmor %vm2297, %vm2298
    %v2300 = vsel %vm2299, %v2292, %v2296
    %v2301 = vand.u32 2147483647, %v2291
    %vm2302 = vcmp.eq.f32.partialorder %v2301, 8.507059e+37
    %v2303 = vand.u32 %v2291, 2147483648
    %v2304 = vor.u32 1.1754944e-38, %v2303
    %v2305 = vsel %vm2302, %v2304, %v2300
    %v2306 = vmul.f32 1.0, %v2305
    %v2307 = vxor.u32 %v2222, 2147483648
    %v2308 = vmul.f32 %v2307, 1.442695
    %v2309 = vpow.pop %v2308
    %v2310 = vadd.f32 %v2309, 1.0
    %v2311 = vrcp.pop %v2310
    %v2312 = vmul.f32 %v2310, %v2311
    %v2313 = vsub.f32 1.0, %v2312
    %v2314 = vmul.f32 %v2311, %v2313
    %v2315 = vadd.f32 %v2311, %v2314
    %vm2316 = vweird.f32 %v2310
    %vm2317 = vweird.f32 %v2311
    %vm2318 = vmor %vm2316, %vm2317
    %v2319 = vsel %vm2318, %v2311, %v2315
    %v2320 = vand.u32 2147483647, %v2310
    %vm2321 = vcmp.eq.f32.partialorder %v2320, 8.507059e+37
    %v2322 = vand.u32 %v2310, 2147483648
    %v2323 = vor.u32 1.1754944e-38, %v2322
    %v2324 = vsel %vm2321, %v2323, %v2319
    %v2325 = vmul.f32 1.0, %v2324
    %v2326 = vtanh.pop %v2223
    %v2327 = vxor.u32 %v2224, 2147483648
    %v2328 = vmul.f32 %v2327, 1.442695
    %v2329 = vpow.pop %v2328
    %v2330 = vadd.f32 %v2329, 1.0
    %v2331 = vrcp.pop %v2330
    %v2332 = vmul.f32 %v2330, %v2331
    %v2333 = vsub.f32 1.0, %v2332
    %v2334 = vmul.f32 %v2331, %v2333
    %v2335 = vadd.f32 %v2331, %v2334
    %vm2336 = vweird.f32 %v2330
    %vm2337 = vweird.f32 %v2331
    %vm2338 = vmor %vm2336, %vm2337
    %v2339 = vsel %vm2338, %v2331, %v2335
    %v2340 = vand.u32 2147483647, %v2330
    %vm2341 = vcmp.eq.f32.partialorder %v2340, 8.507059e+37
    %v2342 = vand.u32 %v2330, 2147483648
    %v2343 = vor.u32 1.1754944e-38, %v2342
    %v2344 = vsel %vm2341, %v2343, %v2339
    %v2345 = vmul.f32 1.0, %v2344
    %v2346 = vmul.f32 %v2325, %v2088
    %v2347 = vmul.f32 %v2306, %v2326
    %v2348 = vadd.f32 %v2346, %v2347
    %v2349 = vtanh.pop %v2348
    %v2350 = vmul.f32 %v2345, %v2349
    %vm2351 = vcmp.gt.s32.totalorder %v850, 3
    %vm2352 = vcmp.gt.s32.totalorder %v850, 4
    %v2353 = vsel %vm2351, %v2287, 0.0
    %v2354 = vpack.c.bf16 %v2353, %v2353
    %s2355 = scalar_lea.vmem [#allocation16], 12
    %2356 = vst [vmem:[%s2355] sm:$0xf] %v2354
    %v2357 = vsel %vm2352, %v2350, 0.0
    %v2358 = vpack.c.bf16 %v2357, %v2357
    %s2359 = scalar_lea.vmem [#allocation17], 16
    %2360 = vst [vmem:[%s2359] sm:$0xf] %v2358
    %v2361 = vsel %vm2351, %v2287, %v2085
    %v2362 = vsel %vm2351, %v2285, %v2086
    %v2363 = vsel %vm2352, %v2350, %v2087
    %v2364 = vsel %vm2352, %v2348, %v2088
    %s2365 = scalar_lea.vmem [#allocation2], 64
    %v2366 = vld [vmem:[%s2365] sm:$0xff]
    %v2367 = vld [vmem:[%s2365 + $0x8] sm:$0xff]
    %v2368 = vunpack.c.l.bf16 %v2366
    %v2369 = vunpack.c.h.bf16 %v2366
    %v2370 = vunpack.c.l.bf16 %v2367
    %v2371 = vunpack.c.h.bf16 %v2367
    %v2372 = vadd.f32 %v2368, %v932
    %v2373 = vadd.f32 %v2369, %v933
    %v2374 = vadd.f32 %v2370, %v934
    %v2375 = vadd.f32 %v2371, %v935
    %v2376 = vpack.c.bf16 %v2361, %v2361
    %2377 = vmatpush.bf16.msra.mxu0 %v1069
    %2378 = vmatpush.bf16.msra.mxu0 %v1065
    %2379 = vmatpush.bf16.msra.mxu0 %v1061
    %2380 = vmatpush.bf16.msra.mxu0 %v1057
    %2381 = vmatpush.bf16.msra.mxu0 %v1053
    %2382 = vmatpush.bf16.msra.mxu0 %v1049
    %2383 = vmatpush.bf16.msra.mxu0 %v1045
    %2384 = vmatpush.bf16.msra.mxu0 %v1041
    %2385 = vmatmul.bf16.gmra.mxu0 %v2376
    %v2386 = vpop.f32.mrf.mxu0
    %v2387 = vadd.f32 0.0, %v2386
    %v2388 = vpop.f32.mrf.mxu0
    %2389 = vdwg.mxu0
    %2390 = vmatpush.bf16.msra.mxu0 %v1070
    %2391 = vmatpush.bf16.msra.mxu0 %v1066
    %2392 = vmatpush.bf16.msra.mxu0 %v1062
    %2393 = vmatpush.bf16.msra.mxu0 %v1058
    %2394 = vmatpush.bf16.msra.mxu0 %v1054
    %2395 = vmatpush.bf16.msra.mxu0 %v1050
    %2396 = vmatpush.bf16.msra.mxu0 %v1046
    %2397 = vmatpush.bf16.msra.mxu0 %v1042
    %2398 = vmatmul.bf16.gmra.mxu0 %v2376
    %v2399 = vpop.f32.mrf.mxu0
    %v2400 = vadd.f32 0.0, %v2399
    %v2401 = vpop.f32.mrf.mxu0
    %2402 = vdwg.mxu0
    %2403 = vmatpush.bf16.msra.mxu0 %v1071
    %2404 = vmatpush.bf16.msra.mxu0 %v1067
    %2405 = vmatpush.bf16.msra.mxu0 %v1063
    %2406 = vmatpush.bf16.msra.mxu0 %v1059
    %2407 = vmatpush.bf16.msra.mxu0 %v1055
    %2408 = vmatpush.bf16.msra.mxu0 %v1051
    %2409 = vmatpush.bf16.msra.mxu0 %v1047
    %2410 = vmatpush.bf16.msra.mxu0 %v1043
    %2411 = vmatmul.bf16.gmra.mxu0 %v2376
    %v2412 = vpop.f32.mrf.mxu0
    %v2413 = vadd.f32 0.0, %v2412
    %v2414 = vpop.f32.mrf.mxu0
    %2415 = vdwg.mxu0
    %2416 = vmatpush.bf16.msra.mxu0 %v1072
    %2417 = vmatpush.bf16.msra.mxu0 %v1068
    %2418 = vmatpush.bf16.msra.mxu0 %v1064
    %2419 = vmatpush.bf16.msra.mxu0 %v1060
    %2420 = vmatpush.bf16.msra.mxu0 %v1056
    %2421 = vmatpush.bf16.msra.mxu0 %v1052
    %2422 = vmatpush.bf16.msra.mxu0 %v1048
    %2423 = vmatpush.bf16.msra.mxu0 %v1044
    %2424 = vmatmul.bf16.gmra.mxu0 %v2376
    %v2425 = vpop.f32.mrf.mxu0
    %v2426 = vadd.f32 0.0, %v2425
    %v2427 = vpop.f32.mrf.mxu0
    %2428 = vdwg.mxu0
    %v2429 = vadd.f32 %v2372, %v2387
    %v2430 = vadd.f32 %v2373, %v2400
    %v2431 = vadd.f32 %v2374, %v2413
    %v2432 = vadd.f32 %v2375, %v2426
    %s2433 = scalar_lea.vmem [#allocation3], 48
    %v2434 = vld [vmem:[%s2433] sm:$0xff]
    %v2435 = vld [vmem:[%s2433 + $0x8] sm:$0xff]
    %v2436 = vunpack.c.l.bf16 %v2434
    %v2437 = vunpack.c.h.bf16 %v2434
    %v2438 = vunpack.c.l.bf16 %v2435
    %v2439 = vunpack.c.h.bf16 %v2435
    %v2440 = vadd.f32 %v2436, %v1169
    %v2441 = vadd.f32 %v2437, %v1170
    %v2442 = vadd.f32 %v2438, %v1171
    %v2443 = vadd.f32 %v2439, %v1172
    %v2444 = vpack.c.bf16 %v2363, %v2363
    %2445 = vmatpush.bf16.msra.mxu0 %v1306
    %2446 = vmatpush.bf16.msra.mxu0 %v1302
    %2447 = vmatpush.bf16.msra.mxu0 %v1298
    %2448 = vmatpush.bf16.msra.mxu0 %v1294
    %2449 = vmatpush.bf16.msra.mxu0 %v1290
    %2450 = vmatpush.bf16.msra.mxu0 %v1286
    %2451 = vmatpush.bf16.msra.mxu0 %v1282
    %2452 = vmatpush.bf16.msra.mxu0 %v1278
    %2453 = vmatmul.bf16.gmra.mxu0 %v2444
    %v2454 = vpop.f32.mrf.mxu0
    %v2455 = vadd.f32 0.0, %v2454
    %v2456 = vpop.f32.mrf.mxu0
    %2457 = vdwg.mxu0
    %2458 = vmatpush.bf16.msra.mxu0 %v1307
    %2459 = vmatpush.bf16.msra.mxu0 %v1303
    %2460 = vmatpush.bf16.msra.mxu0 %v1299
    %2461 = vmatpush.bf16.msra.mxu0 %v1295
    %2462 = vmatpush.bf16.msra.mxu0 %v1291
    %2463 = vmatpush.bf16.msra.mxu0 %v1287
    %2464 = vmatpush.bf16.msra.mxu0 %v1283
    %2465 = vmatpush.bf16.msra.mxu0 %v1279
    %2466 = vmatmul.bf16.gmra.mxu0 %v2444
    %v2467 = vpop.f32.mrf.mxu0
    %v2468 = vadd.f32 0.0, %v2467
    %v2469 = vpop.f32.mrf.mxu0
    %2470 = vdwg.mxu0
    %2471 = vmatpush.bf16.msra.mxu0 %v1308
    %2472 = vmatpush.bf16.msra.mxu0 %v1304
    %2473 = vmatpush.bf16.msra.mxu0 %v1300
    %2474 = vmatpush.bf16.msra.mxu0 %v1296
    %2475 = vmatpush.bf16.msra.mxu0 %v1292
    %2476 = vmatpush.bf16.msra.mxu0 %v1288
    %2477 = vmatpush.bf16.msra.mxu0 %v1284
    %2478 = vmatpush.bf16.msra.mxu0 %v1280
    %2479 = vmatmul.bf16.gmra.mxu0 %v2444
    %v2480 = vpop.f32.mrf.mxu0
    %v2481 = vadd.f32 0.0, %v2480
    %v2482 = vpop.f32.mrf.mxu0
    %2483 = vdwg.mxu0
    %2484 = vmatpush.bf16.msra.mxu0 %v1309
    %2485 = vmatpush.bf16.msra.mxu0 %v1305
    %2486 = vmatpush.bf16.msra.mxu0 %v1301
    %2487 = vmatpush.bf16.msra.mxu0 %v1297
    %2488 = vmatpush.bf16.msra.mxu0 %v1293
    %2489 = vmatpush.bf16.msra.mxu0 %v1289
    %2490 = vmatpush.bf16.msra.mxu0 %v1285
    %2491 = vmatpush.bf16.msra.mxu0 %v1281
    %2492 = vmatmul.bf16.gmra.mxu0 %v2444
    %v2493 = vpop.f32.mrf.mxu0
    %v2494 = vadd.f32 0.0, %v2493
    %v2495 = vpop.f32.mrf.mxu0
    %2496 = vdwg.mxu0
    %v2497 = vadd.f32 %v2440, %v2455
    %v2498 = vadd.f32 %v2441, %v2468
    %v2499 = vadd.f32 %v2442, %v2481
    %v2500 = vadd.f32 %v2443, %v2494
    %v2501 = vxor.u32 %v2429, 2147483648
    %v2502 = vmul.f32 %v2501, 1.442695
    %v2503 = vpow.pop %v2502
    %v2504 = vadd.f32 %v2503, 1.0
    %v2505 = vrcp.pop %v2504
    %v2506 = vmul.f32 %v2504, %v2505
    %v2507 = vsub.f32 1.0, %v2506
    %v2508 = vmul.f32 %v2505, %v2507
    %v2509 = vadd.f32 %v2505, %v2508
    %vm2510 = vweird.f32 %v2504
    %vm2511 = vweird.f32 %v2505
    %vm2512 = vmor %vm2510, %vm2511
    %v2513 = vsel %vm2512, %v2505, %v2509
    %v2514 = vand.u32 2147483647, %v2504
    %vm2515 = vcmp.eq.f32.partialorder %v2514, 8.507059e+37
    %v2516 = vand.u32 %v2504, 2147483648
    %v2517 = vor.u32 1.1754944e-38, %v2516
    %v2518 = vsel %vm2515, %v2517, %v2513
    %v2519 = vmul.f32 1.0, %v2518
    %v2520 = vxor.u32 %v2430, 2147483648
    %v2521 = vmul.f32 %v2520, 1.442695
    %v2522 = vpow.pop %v2521
    %v2523 = vadd.f32 %v2522, 1.0
    %v2524 = vrcp.pop %v2523
    %v2525 = vmul.f32 %v2523, %v2524
    %v2526 = vsub.f32 1.0, %v2525
    %v2527 = vmul.f32 %v2524, %v2526
    %v2528 = vadd.f32 %v2524, %v2527
    %vm2529 = vweird.f32 %v2523
    %vm2530 = vweird.f32 %v2524
    %vm2531 = vmor %vm2529, %vm2530
    %v2532 = vsel %vm2531, %v2524, %v2528
    %v2533 = vand.u32 2147483647, %v2523
    %vm2534 = vcmp.eq.f32.partialorder %v2533, 8.507059e+37
    %v2535 = vand.u32 %v2523, 2147483648
    %v2536 = vor.u32 1.1754944e-38, %v2535
    %v2537 = vsel %vm2534, %v2536, %v2532
    %v2538 = vmul.f32 1.0, %v2537
    %v2539 = vtanh.pop %v2431
    %v2540 = vxor.u32 %v2432, 2147483648
    %v2541 = vmul.f32 %v2540, 1.442695
    %v2542 = vpow.pop %v2541
    %v2543 = vadd.f32 %v2542, 1.0
    %v2544 = vrcp.pop %v2543
    %v2545 = vmul.f32 %v2543, %v2544
    %v2546 = vsub.f32 1.0, %v2545
    %v2547 = vmul.f32 %v2544, %v2546
    %v2548 = vadd.f32 %v2544, %v2547
    %vm2549 = vweird.f32 %v2543
    %vm2550 = vweird.f32 %v2544
    %vm2551 = vmor %vm2549, %vm2550
    %v2552 = vsel %vm2551, %v2544, %v2548
    %v2553 = vand.u32 2147483647, %v2543
    %vm2554 = vcmp.eq.f32.partialorder %v2553, 8.507059e+37
    %v2555 = vand.u32 %v2543, 2147483648
    %v2556 = vor.u32 1.1754944e-38, %v2555
    %v2557 = vsel %vm2554, %v2556, %v2552
    %v2558 = vmul.f32 1.0, %v2557
    %v2559 = vmul.f32 %v2538, %v2362
    %v2560 = vmul.f32 %v2519, %v2539
    %v2561 = vadd.f32 %v2559, %v2560
    %v2562 = vtanh.pop %v2561
    %v2563 = vmul.f32 %v2558, %v2562
    %v2564 = vxor.u32 %v2497, 2147483648
    %v2565 = vmul.f32 %v2564, 1.442695
    %v2566 = vpow.pop %v2565
    %v2567 = vadd.f32 %v2566, 1.0
    %v2568 = vrcp.pop %v2567
    %v2569 = vmul.f32 %v2567, %v2568
    %v2570 = vsub.f32 1.0, %v2569
    %v2571 = vmul.f32 %v2568, %v2570
    %v2572 = vadd.f32 %v2568, %v2571
    %vm2573 = vweird.f32 %v2567
    %vm2574 = vweird.f32 %v2568
    %vm2575 = vmor %vm2573, %vm2574
    %v2576 = vsel %vm2575, %v2568, %v2572
    %v2577 = vand.u32 2147483647, %v2567
    %vm2578 = vcmp.eq.f32.partialorder %v2577, 8.507059e+37
    %v2579 = vand.u32 %v2567, 2147483648
    %v2580 = vor.u32 1.1754944e-38, %v2579
    %v2581 = vsel %vm2578, %v2580, %v2576
    %v2582 = vmul.f32 1.0, %v2581
    %v2583 = vxor.u32 %v2498, 2147483648
    %v2584 = vmul.f32 %v2583, 1.442695
    %v2585 = vpow.pop %v2584
    %v2586 = vadd.f32 %v2585, 1.0
    %v2587 = vrcp.pop %v2586
    %v2588 = vmul.f32 %v2586, %v2587
    %v2589 = vsub.f32 1.0, %v2588
    %v2590 = vmul.f32 %v2587, %v2589
    %v2591 = vadd.f32 %v2587, %v2590
    %vm2592 = vweird.f32 %v2586
    %vm2593 = vweird.f32 %v2587
    %vm2594 = vmor %vm2592, %vm2593
    %v2595 = vsel %vm2594, %v2587, %v2591
    %v2596 = vand.u32 2147483647, %v2586
    %vm2597 = vcmp.eq.f32.partialorder %v2596, 8.507059e+37
    %v2598 = vand.u32 %v2586, 2147483648
    %v2599 = vor.u32 1.1754944e-38, %v2598
    %v2600 = vsel %vm2597, %v2599, %v2595
    %v2601 = vmul.f32 1.0, %v2600
    %v2602 = vtanh.pop %v2499
    %v2603 = vxor.u32 %v2500, 2147483648
    %v2604 = vmul.f32 %v2603, 1.442695
    %v2605 = vpow.pop %v2604
    %v2606 = vadd.f32 %v2605, 1.0
    %v2607 = vrcp.pop %v2606
    %v2608 = vmul.f32 %v2606, %v2607
    %v2609 = vsub.f32 1.0, %v2608
    %v2610 = vmul.f32 %v2607, %v2609
    %v2611 = vadd.f32 %v2607, %v2610
    %vm2612 = vweird.f32 %v2606
    %vm2613 = vweird.f32 %v2607
    %vm2614 = vmor %vm2612, %vm2613
    %v2615 = vsel %vm2614, %v2607, %v2611
    %v2616 = vand.u32 2147483647, %v2606
    %vm2617 = vcmp.eq.f32.partialorder %v2616, 8.507059e+37
    %v2618 = vand.u32 %v2606, 2147483648
    %v2619 = vor.u32 1.1754944e-38, %v2618
    %v2620 = vsel %vm2617, %v2619, %v2615
    %v2621 = vmul.f32 1.0, %v2620
    %v2622 = vmul.f32 %v2601, %v2364
    %v2623 = vmul.f32 %v2582, %v2602
    %v2624 = vadd.f32 %v2622, %v2623
    %v2625 = vtanh.pop %v2624
    %v2626 = vmul.f32 %v2621, %v2625
    %v2627 = vsel %vm2352, %v2563, 0.0
    %v2628 = vpack.c.bf16 %v2627, %v2627
    %s2629 = scalar_lea.vmem [#allocation16], 16
    %2630 = vst [vmem:[%s2629] sm:$0xf] %v2628
    %v2631 = vsel %vm2351, %v2626, 0.0
    %v2632 = vpack.c.bf16 %v2631, %v2631
    %s2633 = scalar_lea.vmem [#allocation17], 12
    %2634 = vst [vmem:[%s2633] sm:$0xf] %v2632
    %v2635 = vsel %vm2352, %v2563, %v2361
    %v2636 = vsel %vm2352, %v2561, %v2362
    %v2637 = vsel %vm2351, %v2626, %v2363
    %v2638 = vsel %vm2351, %v2624, %v2364
    %s2639 = scalar_lea.vmem [#allocation2], 80
    %v2640 = vld [vmem:[%s2639] sm:$0xff]
    %v2641 = vld [vmem:[%s2639 + $0x8] sm:$0xff]
    %v2642 = vunpack.c.l.bf16 %v2640
    %v2643 = vunpack.c.h.bf16 %v2640
    %v2644 = vunpack.c.l.bf16 %v2641
    %v2645 = vunpack.c.h.bf16 %v2641
    %v2646 = vadd.f32 %v2642, %v932
    %v2647 = vadd.f32 %v2643, %v933
    %v2648 = vadd.f32 %v2644, %v934
    %v2649 = vadd.f32 %v2645, %v935
    %v2650 = vpack.c.bf16 %v2635, %v2635
    %2651 = vmatpush.bf16.msra.mxu0 %v1069
    %2652 = vmatpush.bf16.msra.mxu0 %v1065
    %2653 = vmatpush.bf16.msra.mxu0 %v1061
    %2654 = vmatpush.bf16.msra.mxu0 %v1057
    %2655 = vmatpush.bf16.msra.mxu0 %v1053
    %2656 = vmatpush.bf16.msra.mxu0 %v1049
    %2657 = vmatpush.bf16.msra.mxu0 %v1045
    %2658 = vmatpush.bf16.msra.mxu0 %v1041
    %2659 = vmatmul.bf16.gmra.mxu0 %v2650
    %v2660 = vpop.f32.mrf.mxu0
    %v2661 = vadd.f32 0.0, %v2660
    %v2662 = vpop.f32.mrf.mxu0
    %2663 = vdwg.mxu0
    %2664 = vmatpush.bf16.msra.mxu0 %v1070
    %2665 = vmatpush.bf16.msra.mxu0 %v1066
    %2666 = vmatpush.bf16.msra.mxu0 %v1062
    %2667 = vmatpush.bf16.msra.mxu0 %v1058
    %2668 = vmatpush.bf16.msra.mxu0 %v1054
    %2669 = vmatpush.bf16.msra.mxu0 %v1050
    %2670 = vmatpush.bf16.msra.mxu0 %v1046
    %2671 = vmatpush.bf16.msra.mxu0 %v1042
    %2672 = vmatmul.bf16.gmra.mxu0 %v2650
    %v2673 = vpop.f32.mrf.mxu0
    %v2674 = vadd.f32 0.0, %v2673
    %v2675 = vpop.f32.mrf.mxu0
    %2676 = vdwg.mxu0
    %2677 = vmatpush.bf16.msra.mxu0 %v1071
    %2678 = vmatpush.bf16.msra.mxu0 %v1067
    %2679 = vmatpush.bf16.msra.mxu0 %v1063
    %2680 = vmatpush.bf16.msra.mxu0 %v1059
    %2681 = vmatpush.bf16.msra.mxu0 %v1055
    %2682 = vmatpush.bf16.msra.mxu0 %v1051
    %2683 = vmatpush.bf16.msra.mxu0 %v1047
    %2684 = vmatpush.bf16.msra.mxu0 %v1043
    %2685 = vmatmul.bf16.gmra.mxu0 %v2650
    %v2686 = vpop.f32.mrf.mxu0
    %v2687 = vadd.f32 0.0, %v2686
    %v2688 = vpop.f32.mrf.mxu0
    %2689 = vdwg.mxu0
    %2690 = vmatpush.bf16.msra.mxu0 %v1072
    %2691 = vmatpush.bf16.msra.mxu0 %v1068
    %2692 = vmatpush.bf16.msra.mxu0 %v1064
    %2693 = vmatpush.bf16.msra.mxu0 %v1060
    %2694 = vmatpush.bf16.msra.mxu0 %v1056
    %2695 = vmatpush.bf16.msra.mxu0 %v1052
    %2696 = vmatpush.bf16.msra.mxu0 %v1048
    %2697 = vmatpush.bf16.msra.mxu0 %v1044
    %2698 = vmatmul.bf16.gmra.mxu0 %v2650
    %v2699 = vpop.f32.mrf.mxu0
    %v2700 = vadd.f32 0.0, %v2699
    %v2701 = vpop.f32.mrf.mxu0
    %2702 = vdwg.mxu0
    %v2703 = vadd.f32 %v2646, %v2661
    %v2704 = vadd.f32 %v2647, %v2674
    %v2705 = vadd.f32 %v2648, %v2687
    %v2706 = vadd.f32 %v2649, %v2700
    %s2707 = scalar_lea.vmem [#allocation3], 32
    %v2708 = vld [vmem:[%s2707] sm:$0xff]
    %v2709 = vld [vmem:[%s2707 + $0x8] sm:$0xff]
    %v2710 = vunpack.c.l.bf16 %v2708
    %v2711 = vunpack.c.h.bf16 %v2708
    %v2712 = vunpack.c.l.bf16 %v2709
    %v2713 = vunpack.c.h.bf16 %v2709
    %v2714 = vadd.f32 %v2710, %v1169
    %v2715 = vadd.f32 %v2711, %v1170
    %v2716 = vadd.f32 %v2712, %v1171
    %v2717 = vadd.f32 %v2713, %v1172
    %v2718 = vpack.c.bf16 %v2637, %v2637
    %2719 = vmatpush.bf16.msra.mxu0 %v1306
    %2720 = vmatpush.bf16.msra.mxu0 %v1302
    %2721 = vmatpush.bf16.msra.mxu0 %v1298
    %2722 = vmatpush.bf16.msra.mxu0 %v1294
    %2723 = vmatpush.bf16.msra.mxu0 %v1290
    %2724 = vmatpush.bf16.msra.mxu0 %v1286
    %2725 = vmatpush.bf16.msra.mxu0 %v1282
    %2726 = vmatpush.bf16.msra.mxu0 %v1278
    %2727 = vmatmul.bf16.gmra.mxu0 %v2718
    %v2728 = vpop.f32.mrf.mxu0
    %v2729 = vadd.f32 0.0, %v2728
    %v2730 = vpop.f32.mrf.mxu0
    %2731 = vdwg.mxu0
    %2732 = vmatpush.bf16.msra.mxu0 %v1307
    %2733 = vmatpush.bf16.msra.mxu0 %v1303
    %2734 = vmatpush.bf16.msra.mxu0 %v1299
    %2735 = vmatpush.bf16.msra.mxu0 %v1295
    %2736 = vmatpush.bf16.msra.mxu0 %v1291
    %2737 = vmatpush.bf16.msra.mxu0 %v1287
    %2738 = vmatpush.bf16.msra.mxu0 %v1283
    %2739 = vmatpush.bf16.msra.mxu0 %v1279
    %2740 = vmatmul.bf16.gmra.mxu0 %v2718
    %v2741 = vpop.f32.mrf.mxu0
    %v2742 = vadd.f32 0.0, %v2741
    %v2743 = vpop.f32.mrf.mxu0
    %2744 = vdwg.mxu0
    %2745 = vmatpush.bf16.msra.mxu0 %v1308
    %2746 = vmatpush.bf16.msra.mxu0 %v1304
    %2747 = vmatpush.bf16.msra.mxu0 %v1300
    %2748 = vmatpush.bf16.msra.mxu0 %v1296
    %2749 = vmatpush.bf16.msra.mxu0 %v1292
    %2750 = vmatpush.bf16.msra.mxu0 %v1288
    %2751 = vmatpush.bf16.msra.mxu0 %v1284
    %2752 = vmatpush.bf16.msra.mxu0 %v1280
    %2753 = vmatmul.bf16.gmra.mxu0 %v2718
    %v2754 = vpop.f32.mrf.mxu0
    %v2755 = vadd.f32 0.0, %v2754
    %v2756 = vpop.f32.mrf.mxu0
    %2757 = vdwg.mxu0
    %2758 = vmatpush.bf16.msra.mxu0 %v1309
    %2759 = vmatpush.bf16.msra.mxu0 %v1305
    %2760 = vmatpush.bf16.msra.mxu0 %v1301
    %2761 = vmatpush.bf16.msra.mxu0 %v1297
    %2762 = vmatpush.bf16.msra.mxu0 %v1293
    %2763 = vmatpush.bf16.msra.mxu0 %v1289
    %2764 = vmatpush.bf16.msra.mxu0 %v1285
    %2765 = vmatpush.bf16.msra.mxu0 %v1281
    %2766 = vmatmul.bf16.gmra.mxu0 %v2718
    %v2767 = vpop.f32.mrf.mxu0
    %v2768 = vadd.f32 0.0, %v2767
    %v2769 = vpop.f32.mrf.mxu0
    %2770 = vdwg.mxu0
    %v2771 = vadd.f32 %v2714, %v2729
    %v2772 = vadd.f32 %v2715, %v2742
    %v2773 = vadd.f32 %v2716, %v2755
    %v2774 = vadd.f32 %v2717, %v2768
    %v2775 = vxor.u32 %v2703, 2147483648
    %v2776 = vmul.f32 %v2775, 1.442695
    %v2777 = vpow.pop %v2776
    %v2778 = vadd.f32 %v2777, 1.0
    %v2779 = vrcp.pop %v2778
    %v2780 = vmul.f32 %v2778, %v2779
    %v2781 = vsub.f32 1.0, %v2780
    %v2782 = vmul.f32 %v2779, %v2781
    %v2783 = vadd.f32 %v2779, %v2782
    %vm2784 = vweird.f32 %v2778
    %vm2785 = vweird.f32 %v2779
    %vm2786 = vmor %vm2784, %vm2785
    %v2787 = vsel %vm2786, %v2779, %v2783
    %v2788 = vand.u32 2147483647, %v2778
    %vm2789 = vcmp.eq.f32.partialorder %v2788, 8.507059e+37
    %v2790 = vand.u32 %v2778, 2147483648
    %v2791 = vor.u32 1.1754944e-38, %v2790
    %v2792 = vsel %vm2789, %v2791, %v2787
    %v2793 = vmul.f32 1.0, %v2792
    %v2794 = vxor.u32 %v2704, 2147483648
    %v2795 = vmul.f32 %v2794, 1.442695
    %v2796 = vpow.pop %v2795
    %v2797 = vadd.f32 %v2796, 1.0
    %v2798 = vrcp.pop %v2797
    %v2799 = vmul.f32 %v2797, %v2798
    %v2800 = vsub.f32 1.0, %v2799
    %v2801 = vmul.f32 %v2798, %v2800
    %v2802 = vadd.f32 %v2798, %v2801
    %vm2803 = vweird.f32 %v2797
    %vm2804 = vweird.f32 %v2798
    %vm2805 = vmor %vm2803, %vm2804
    %v2806 = vsel %vm2805, %v2798, %v2802
    %v2807 = vand.u32 2147483647, %v2797
    %vm2808 = vcmp.eq.f32.partialorder %v2807, 8.507059e+37
    %v2809 = vand.u32 %v2797, 2147483648
    %v2810 = vor.u32 1.1754944e-38, %v2809
    %v2811 = vsel %vm2808, %v2810, %v2806
    %v2812 = vmul.f32 1.0, %v2811
    %v2813 = vtanh.pop %v2705
    %v2814 = vxor.u32 %v2706, 2147483648
    %v2815 = vmul.f32 %v2814, 1.442695
    %v2816 = vpow.pop %v2815
    %v2817 = vadd.f32 %v2816, 1.0
    %v2818 = vrcp.pop %v2817
    %v2819 = vmul.f32 %v2817, %v2818
    %v2820 = vsub.f32 1.0, %v2819
    %v2821 = vmul.f32 %v2818, %v2820
    %v2822 = vadd.f32 %v2818, %v2821
    %vm2823 = vweird.f32 %v2817
    %vm2824 = vweird.f32 %v2818
    %vm2825 = vmor %vm2823, %vm2824
    %v2826 = vsel %vm2825, %v2818, %v2822
    %v2827 = vand.u32 2147483647, %v2817
    %vm2828 = vcmp.eq.f32.partialorder %v2827, 8.507059e+37
    %v2829 = vand.u32 %v2817, 2147483648
    %v2830 = vor.u32 1.1754944e-38, %v2829
    %v2831 = vsel %vm2828, %v2830, %v2826
    %v2832 = vmul.f32 1.0, %v2831
    %v2833 = vmul.f32 %v2812, %v2636
    %v2834 = vmul.f32 %v2793, %v2813
    %v2835 = vadd.f32 %v2833, %v2834
    %v2836 = vtanh.pop %v2835
    %v2837 = vmul.f32 %v2832, %v2836
    %v2838 = vxor.u32 %v2771, 2147483648
    %v2839 = vmul.f32 %v2838, 1.442695
    %v2840 = vpow.pop %v2839
    %v2841 = vadd.f32 %v2840, 1.0
    %v2842 = vrcp.pop %v2841
    %v2843 = vmul.f32 %v2841, %v2842
    %v2844 = vsub.f32 1.0, %v2843
    %v2845 = vmul.f32 %v2842, %v2844
    %v2846 = vadd.f32 %v2842, %v2845
    %vm2847 = vweird.f32 %v2841
    %vm2848 = vweird.f32 %v2842
    %vm2849 = vmor %vm2847, %vm2848
    %v2850 = vsel %vm2849, %v2842, %v2846
    %v2851 = vand.u32 2147483647, %v2841
    %vm2852 = vcmp.eq.f32.partialorder %v2851, 8.507059e+37
    %v2853 = vand.u32 %v2841, 2147483648
    %v2854 = vor.u32 1.1754944e-38, %v2853
    %v2855 = vsel %vm2852, %v2854, %v2850
    %v2856 = vmul.f32 1.0, %v2855
    %v2857 = vxor.u32 %v2772, 2147483648
    %v2858 = vmul.f32 %v2857, 1.442695
    %v2859 = vpow.pop %v2858
    %v2860 = vadd.f32 %v2859, 1.0
    %v2861 = vrcp.pop %v2860
    %v2862 = vmul.f32 %v2860, %v2861
    %v2863 = vsub.f32 1.0, %v2862
    %v2864 = vmul.f32 %v2861, %v2863
    %v2865 = vadd.f32 %v2861, %v2864
    %vm2866 = vweird.f32 %v2860
    %vm2867 = vweird.f32 %v2861
    %vm2868 = vmor %vm2866, %vm2867
    %v2869 = vsel %vm2868, %v2861, %v2865
    %v2870 = vand.u32 2147483647, %v2860
    %vm2871 = vcmp.eq.f32.partialorder %v2870, 8.507059e+37
    %v2872 = vand.u32 %v2860, 2147483648
    %v2873 = vor.u32 1.1754944e-38, %v2872
    %v2874 = vsel %vm2871, %v2873, %v2869
    %v2875 = vmul.f32 1.0, %v2874
    %v2876 = vtanh.pop %v2773
    %v2877 = vxor.u32 %v2774, 2147483648
    %v2878 = vmul.f32 %v2877, 1.442695
    %v2879 = vpow.pop %v2878
    %v2880 = vadd.f32 %v2879, 1.0
    %v2881 = vrcp.pop %v2880
    %v2882 = vmul.f32 %v2880, %v2881
    %v2883 = vsub.f32 1.0, %v2882
    %v2884 = vmul.f32 %v2881, %v2883
    %v2885 = vadd.f32 %v2881, %v2884
    %vm2886 = vweird.f32 %v2880
    %vm2887 = vweird.f32 %v2881
    %vm2888 = vmor %vm2886, %vm2887
    %v2889 = vsel %vm2888, %v2881, %v2885
    %v2890 = vand.u32 2147483647, %v2880
    %vm2891 = vcmp.eq.f32.partialorder %v2890, 8.507059e+37
    %v2892 = vand.u32 %v2880, 2147483648
    %v2893 = vor.u32 1.1754944e-38, %v2892
    %v2894 = vsel %vm2891, %v2893, %v2889
    %v2895 = vmul.f32 1.0, %v2894
    %v2896 = vmul.f32 %v2875, %v2638
    %v2897 = vmul.f32 %v2856, %v2876
    %v2898 = vadd.f32 %v2896, %v2897
    %v2899 = vtanh.pop %v2898
    %v2900 = vmul.f32 %v2895, %v2899
    %v2901 = vsel %vm2076, %v2837, 0.0
    %v2902 = vpack.c.bf16 %v2901, %v2901
    %s2903 = scalar_lea.vmem [#allocation16], 20
    %2904 = vst [vmem:[%s2903] sm:$0xf] %v2902
    %v2905 = vsel %vm2075, %v2900, 0.0
    %v2906 = vpack.c.bf16 %v2905, %v2905
    %s2907 = scalar_lea.vmem [#allocation17], 8
    %2908 = vst [vmem:[%s2907] sm:$0xf] %v2906
    %v2909 = vsel %vm2076, %v2837, %v2635
    %v2910 = vsel %vm2076, %v2835, %v2636
    %v2911 = vsel %vm2075, %v2900, %v2637
    %v2912 = vsel %vm2075, %v2898, %v2638
    %s2913 = scalar_lea.vmem [#allocation2], 96
    %v2914 = vld [vmem:[%s2913] sm:$0xff]
    %v2915 = vld [vmem:[%s2913 + $0x8] sm:$0xff]
    %v2916 = vunpack.c.l.bf16 %v2914
    %v2917 = vunpack.c.h.bf16 %v2914
    %v2918 = vunpack.c.l.bf16 %v2915
    %v2919 = vunpack.c.h.bf16 %v2915
    %v2920 = vadd.f32 %v2916, %v932
    %v2921 = vadd.f32 %v2917, %v933
    %v2922 = vadd.f32 %v2918, %v934
    %v2923 = vadd.f32 %v2919, %v935
    %v2924 = vpack.c.bf16 %v2909, %v2909
    %2925 = vmatpush.bf16.msra.mxu0 %v1069
    %2926 = vmatpush.bf16.msra.mxu0 %v1065
    %2927 = vmatpush.bf16.msra.mxu0 %v1061
    %2928 = vmatpush.bf16.msra.mxu0 %v1057
    %2929 = vmatpush.bf16.msra.mxu0 %v1053
    %2930 = vmatpush.bf16.msra.mxu0 %v1049
    %2931 = vmatpush.bf16.msra.mxu0 %v1045
    %2932 = vmatpush.bf16.msra.mxu0 %v1041
    %2933 = vmatmul.bf16.gmra.mxu0 %v2924
    %v2934 = vpop.f32.mrf.mxu0
    %v2935 = vadd.f32 0.0, %v2934
    %v2936 = vpop.f32.mrf.mxu0
    %2937 = vdwg.mxu0
    %2938 = vmatpush.bf16.msra.mxu0 %v1070
    %2939 = vmatpush.bf16.msra.mxu0 %v1066
    %2940 = vmatpush.bf16.msra.mxu0 %v1062
    %2941 = vmatpush.bf16.msra.mxu0 %v1058
    %2942 = vmatpush.bf16.msra.mxu0 %v1054
    %2943 = vmatpush.bf16.msra.mxu0 %v1050
    %2944 = vmatpush.bf16.msra.mxu0 %v1046
    %2945 = vmatpush.bf16.msra.mxu0 %v1042
    %2946 = vmatmul.bf16.gmra.mxu0 %v2924
    %v2947 = vpop.f32.mrf.mxu0
    %v2948 = vadd.f32 0.0, %v2947
    %v2949 = vpop.f32.mrf.mxu0
    %2950 = vdwg.mxu0
    %2951 = vmatpush.bf16.msra.mxu0 %v1071
    %2952 = vmatpush.bf16.msra.mxu0 %v1067
    %2953 = vmatpush.bf16.msra.mxu0 %v1063
    %2954 = vmatpush.bf16.msra.mxu0 %v1059
    %2955 = vmatpush.bf16.msra.mxu0 %v1055
    %2956 = vmatpush.bf16.msra.mxu0 %v1051
    %2957 = vmatpush.bf16.msra.mxu0 %v1047
    %2958 = vmatpush.bf16.msra.mxu0 %v1043
    %2959 = vmatmul.bf16.gmra.mxu0 %v2924
    %v2960 = vpop.f32.mrf.mxu0
    %v2961 = vadd.f32 0.0, %v2960
    %v2962 = vpop.f32.mrf.mxu0
    %2963 = vdwg.mxu0
    %2964 = vmatpush.bf16.msra.mxu0 %v1072
    %2965 = vmatpush.bf16.msra.mxu0 %v1068
    %2966 = vmatpush.bf16.msra.mxu0 %v1064
    %2967 = vmatpush.bf16.msra.mxu0 %v1060
    %2968 = vmatpush.bf16.msra.mxu0 %v1056
    %2969 = vmatpush.bf16.msra.mxu0 %v1052
    %2970 = vmatpush.bf16.msra.mxu0 %v1048
    %2971 = vmatpush.bf16.msra.mxu0 %v1044
    %2972 = vmatmul.bf16.gmra.mxu0 %v2924
    %v2973 = vpop.f32.mrf.mxu0
    %v2974 = vadd.f32 0.0, %v2973
    %v2975 = vpop.f32.mrf.mxu0
    %2976 = vdwg.mxu0
    %v2977 = vadd.f32 %v2920, %v2935
    %v2978 = vadd.f32 %v2921, %v2948
    %v2979 = vadd.f32 %v2922, %v2961
    %v2980 = vadd.f32 %v2923, %v2974
    %s2981 = scalar_lea.vmem [#allocation3], 16
    %v2982 = vld [vmem:[%s2981] sm:$0xff]
    %v2983 = vld [vmem:[%s2981 + $0x8] sm:$0xff]
    %v2984 = vunpack.c.l.bf16 %v2982
    %v2985 = vunpack.c.h.bf16 %v2982
    %v2986 = vunpack.c.l.bf16 %v2983
    %v2987 = vunpack.c.h.bf16 %v2983
    %v2988 = vadd.f32 %v2984, %v1169
    %v2989 = vadd.f32 %v2985, %v1170
    %v2990 = vadd.f32 %v2986, %v1171
    %v2991 = vadd.f32 %v2987, %v1172
    %v2992 = vpack.c.bf16 %v2911, %v2911
    %2993 = vmatpush.bf16.msra.mxu0 %v1306
    %2994 = vmatpush.bf16.msra.mxu0 %v1302
    %2995 = vmatpush.bf16.msra.mxu0 %v1298
    %2996 = vmatpush.bf16.msra.mxu0 %v1294
    %2997 = vmatpush.bf16.msra.mxu0 %v1290
    %2998 = vmatpush.bf16.msra.mxu0 %v1286
    %2999 = vmatpush.bf16.msra.mxu0 %v1282
    %3000 = vmatpush.bf16.msra.mxu0 %v1278
    %3001 = vmatmul.bf16.gmra.mxu0 %v2992
    %v3002 = vpop.f32.mrf.mxu0
    %v3003 = vadd.f32 0.0, %v3002
    %v3004 = vpop.f32.mrf.mxu0
    %3005 = vdwg.mxu0
    %3006 = vmatpush.bf16.msra.mxu0 %v1307
    %3007 = vmatpush.bf16.msra.mxu0 %v1303
    %3008 = vmatpush.bf16.msra.mxu0 %v1299
    %3009 = vmatpush.bf16.msra.mxu0 %v1295
    %3010 = vmatpush.bf16.msra.mxu0 %v1291
    %3011 = vmatpush.bf16.msra.mxu0 %v1287
    %3012 = vmatpush.bf16.msra.mxu0 %v1283
    %3013 = vmatpush.bf16.msra.mxu0 %v1279
    %3014 = vmatmul.bf16.gmra.mxu0 %v2992
    %v3015 = vpop.f32.mrf.mxu0
    %v3016 = vadd.f32 0.0, %v3015
    %v3017 = vpop.f32.mrf.mxu0
    %3018 = vdwg.mxu0
    %3019 = vmatpush.bf16.msra.mxu0 %v1308
    %3020 = vmatpush.bf16.msra.mxu0 %v1304
    %3021 = vmatpush.bf16.msra.mxu0 %v1300
    %3022 = vmatpush.bf16.msra.mxu0 %v1296
    %3023 = vmatpush.bf16.msra.mxu0 %v1292
    %3024 = vmatpush.bf16.msra.mxu0 %v1288
    %3025 = vmatpush.bf16.msra.mxu0 %v1284
    %3026 = vmatpush.bf16.msra.mxu0 %v1280
    %3027 = vmatmul.bf16.gmra.mxu0 %v2992
    %v3028 = vpop.f32.mrf.mxu0
    %v3029 = vadd.f32 0.0, %v3028
    %v3030 = vpop.f32.mrf.mxu0
    %3031 = vdwg.mxu0
    %3032 = vmatpush.bf16.msra.mxu0 %v1309
    %3033 = vmatpush.bf16.msra.mxu0 %v1305
    %3034 = vmatpush.bf16.msra.mxu0 %v1301
    %3035 = vmatpush.bf16.msra.mxu0 %v1297
    %3036 = vmatpush.bf16.msra.mxu0 %v1293
    %3037 = vmatpush.bf16.msra.mxu0 %v1289
    %3038 = vmatpush.bf16.msra.mxu0 %v1285
    %3039 = vmatpush.bf16.msra.mxu0 %v1281
    %3040 = vmatmul.bf16.gmra.mxu0 %v2992
    %v3041 = vpop.f32.mrf.mxu0
    %v3042 = vadd.f32 0.0, %v3041
    %v3043 = vpop.f32.mrf.mxu0
    %3044 = vdwg.mxu0
    %v3045 = vadd.f32 %v2988, %v3003
    %v3046 = vadd.f32 %v2989, %v3016
    %v3047 = vadd.f32 %v2990, %v3029
    %v3048 = vadd.f32 %v2991, %v3042
    %v3049 = vxor.u32 %v2977, 2147483648
    %v3050 = vmul.f32 %v3049, 1.442695
    %v3051 = vpow.pop %v3050
    %v3052 = vadd.f32 %v3051, 1.0
    %v3053 = vrcp.pop %v3052
    %v3054 = vmul.f32 %v3052, %v3053
    %v3055 = vsub.f32 1.0, %v3054
    %v3056 = vmul.f32 %v3053, %v3055
    %v3057 = vadd.f32 %v3053, %v3056
    %vm3058 = vweird.f32 %v3052
    %vm3059 = vweird.f32 %v3053
    %vm3060 = vmor %vm3058, %vm3059
    %v3061 = vsel %vm3060, %v3053, %v3057
    %v3062 = vand.u32 2147483647, %v3052
    %vm3063 = vcmp.eq.f32.partialorder %v3062, 8.507059e+37
    %v3064 = vand.u32 %v3052, 2147483648
    %v3065 = vor.u32 1.1754944e-38, %v3064
    %v3066 = vsel %vm3063, %v3065, %v3061
    %v3067 = vmul.f32 1.0, %v3066
    %v3068 = vxor.u32 %v2978, 2147483648
    %v3069 = vmul.f32 %v3068, 1.442695
    %v3070 = vpow.pop %v3069
    %v3071 = vadd.f32 %v3070, 1.0
    %v3072 = vrcp.pop %v3071
    %v3073 = vmul.f32 %v3071, %v3072
    %v3074 = vsub.f32 1.0, %v3073
    %v3075 = vmul.f32 %v3072, %v3074
    %v3076 = vadd.f32 %v3072, %v3075
    %vm3077 = vweird.f32 %v3071
    %vm3078 = vweird.f32 %v3072
    %vm3079 = vmor %vm3077, %vm3078
    %v3080 = vsel %vm3079, %v3072, %v3076
    %v3081 = vand.u32 2147483647, %v3071
    %vm3082 = vcmp.eq.f32.partialorder %v3081, 8.507059e+37
    %v3083 = vand.u32 %v3071, 2147483648
    %v3084 = vor.u32 1.1754944e-38, %v3083
    %v3085 = vsel %vm3082, %v3084, %v3080
    %v3086 = vmul.f32 1.0, %v3085
    %v3087 = vtanh.pop %v2979
    %v3088 = vxor.u32 %v2980, 2147483648
    %v3089 = vmul.f32 %v3088, 1.442695
    %v3090 = vpow.pop %v3089
    %v3091 = vadd.f32 %v3090, 1.0
    %v3092 = vrcp.pop %v3091
    %v3093 = vmul.f32 %v3091, %v3092
    %v3094 = vsub.f32 1.0, %v3093
    %v3095 = vmul.f32 %v3092, %v3094
    %v3096 = vadd.f32 %v3092, %v3095
    %vm3097 = vweird.f32 %v3091
    %vm3098 = vweird.f32 %v3092
    %vm3099 = vmor %vm3097, %vm3098
    %v3100 = vsel %vm3099, %v3092, %v3096
    %v3101 = vand.u32 2147483647, %v3091
    %vm3102 = vcmp.eq.f32.partialorder %v3101, 8.507059e+37
    %v3103 = vand.u32 %v3091, 2147483648
    %v3104 = vor.u32 1.1754944e-38, %v3103
    %v3105 = vsel %vm3102, %v3104, %v3100
    %v3106 = vmul.f32 1.0, %v3105
    %v3107 = vmul.f32 %v3086, %v2910
    %v3108 = vmul.f32 %v3067, %v3087
    %v3109 = vadd.f32 %v3107, %v3108
    %v3110 = vtanh.pop %v3109
    %v3111 = vmul.f32 %v3106, %v3110
    %v3112 = vxor.u32 %v3045, 2147483648
    %v3113 = vmul.f32 %v3112, 1.442695
    %v3114 = vpow.pop %v3113
    %v3115 = vadd.f32 %v3114, 1.0
    %v3116 = vrcp.pop %v3115
    %v3117 = vmul.f32 %v3115, %v3116
    %v3118 = vsub.f32 1.0, %v3117
    %v3119 = vmul.f32 %v3116, %v3118
    %v3120 = vadd.f32 %v3116, %v3119
    %vm3121 = vweird.f32 %v3115
    %vm3122 = vweird.f32 %v3116
    %vm3123 = vmor %vm3121, %vm3122
    %v3124 = vsel %vm3123, %v3116, %v3120
    %v3125 = vand.u32 2147483647, %v3115
    %vm3126 = vcmp.eq.f32.partialorder %v3125, 8.507059e+37
    %v3127 = vand.u32 %v3115, 2147483648
    %v3128 = vor.u32 1.1754944e-38, %v3127
    %v3129 = vsel %vm3126, %v3128, %v3124
    %v3130 = vmul.f32 1.0, %v3129
    %v3131 = vxor.u32 %v3046, 2147483648
    %v3132 = vmul.f32 %v3131, 1.442695
    %v3133 = vpow.pop %v3132
    %v3134 = vadd.f32 %v3133, 1.0
    %v3135 = vrcp.pop %v3134
    %v3136 = vmul.f32 %v3134, %v3135
    %v3137 = vsub.f32 1.0, %v3136
    %v3138 = vmul.f32 %v3135, %v3137
    %v3139 = vadd.f32 %v3135, %v3138
    %vm3140 = vweird.f32 %v3134
    %vm3141 = vweird.f32 %v3135
    %vm3142 = vmor %vm3140, %vm3141
    %v3143 = vsel %vm3142, %v3135, %v3139
    %v3144 = vand.u32 2147483647, %v3134
    %vm3145 = vcmp.eq.f32.partialorder %v3144, 8.507059e+37
    %v3146 = vand.u32 %v3134, 2147483648
    %v3147 = vor.u32 1.1754944e-38, %v3146
    %v3148 = vsel %vm3145, %v3147, %v3143
    %v3149 = vmul.f32 1.0, %v3148
    %v3150 = vtanh.pop %v3047
    %v3151 = vxor.u32 %v3048, 2147483648
    %v3152 = vmul.f32 %v3151, 1.442695
    %v3153 = vpow.pop %v3152
    %v3154 = vadd.f32 %v3153, 1.0
    %v3155 = vrcp.pop %v3154
    %v3156 = vmul.f32 %v3154, %v3155
    %v3157 = vsub.f32 1.0, %v3156
    %v3158 = vmul.f32 %v3155, %v3157
    %v3159 = vadd.f32 %v3155, %v3158
    %vm3160 = vweird.f32 %v3154
    %vm3161 = vweird.f32 %v3155
    %vm3162 = vmor %vm3160, %vm3161
    %v3163 = vsel %vm3162, %v3155, %v3159
    %v3164 = vand.u32 2147483647, %v3154
    %vm3165 = vcmp.eq.f32.partialorder %v3164, 8.507059e+37
    %v3166 = vand.u32 %v3154, 2147483648
    %v3167 = vor.u32 1.1754944e-38, %v3166
    %v3168 = vsel %vm3165, %v3167, %v3163
    %v3169 = vmul.f32 1.0, %v3168
    %v3170 = vmul.f32 %v3149, %v2912
    %v3171 = vmul.f32 %v3130, %v3150
    %v3172 = vadd.f32 %v3170, %v3171
    %v3173 = vtanh.pop %v3172
    %v3174 = vmul.f32 %v3169, %v3173
    %v3175 = vsel %vm1800, %v3111, 0.0
    %v3176 = vpack.c.bf16 %v3175, %v3175
    %s3177 = scalar_lea.vmem [#allocation16], 24
    %3178 = vst [vmem:[%s3177] sm:$0xf] %v3176
    %v3179 = vsel %vm1799, %v3174, 0.0
    %v3180 = vpack.c.bf16 %v3179, %v3179
    %s3181 = scalar_lea.vmem [#allocation17], 4
    %3182 = vst [vmem:[%s3181] sm:$0xf] %v3180
    %v3183 = vsel %vm1800, %v3111, %v2909
    %v3184 = vsel %vm1800, %v3109, %v2910
    %v3185 = vsel %vm1799, %v3174, %v2911
    %v3186 = vsel %vm1799, %v3172, %v2912
    %s3187 = scalar_lea.vmem [#allocation2], 112
    %v3188 = vld [vmem:[%s3187] sm:$0xff]
    %v3189 = vld [vmem:[%s3187 + $0x8] sm:$0xff]
    %v3190 = vunpack.c.l.bf16 %v3188
    %v3191 = vunpack.c.h.bf16 %v3188
    %v3192 = vunpack.c.l.bf16 %v3189
    %v3193 = vunpack.c.h.bf16 %v3189
    %v3194 = vadd.f32 %v3190, %v932
    %v3195 = vadd.f32 %v3191, %v933
    %v3196 = vadd.f32 %v3192, %v934
    %v3197 = vadd.f32 %v3193, %v935
    %v3198 = vpack.c.bf16 %v3183, %v3183
    %3199 = vmatpush.bf16.msra.mxu0 %v1069
    %3200 = vmatpush.bf16.msra.mxu0 %v1065
    %3201 = vmatpush.bf16.msra.mxu0 %v1061
    %3202 = vmatpush.bf16.msra.mxu0 %v1057
    %3203 = vmatpush.bf16.msra.mxu0 %v1053
    %3204 = vmatpush.bf16.msra.mxu0 %v1049
    %3205 = vmatpush.bf16.msra.mxu0 %v1045
    %3206 = vmatpush.bf16.msra.mxu0 %v1041
    %3207 = vmatmul.bf16.gmra.mxu0 %v3198
    %v3208 = vpop.f32.mrf.mxu0
    %v3209 = vadd.f32 0.0, %v3208
    %v3210 = vpop.f32.mrf.mxu0
    %3211 = vdwg.mxu0
    %3212 = vmatpush.bf16.msra.mxu0 %v1070
    %3213 = vmatpush.bf16.msra.mxu0 %v1066
    %3214 = vmatpush.bf16.msra.mxu0 %v1062
    %3215 = vmatpush.bf16.msra.mxu0 %v1058
    %3216 = vmatpush.bf16.msra.mxu0 %v1054
    %3217 = vmatpush.bf16.msra.mxu0 %v1050
    %3218 = vmatpush.bf16.msra.mxu0 %v1046
    %3219 = vmatpush.bf16.msra.mxu0 %v1042
    %3220 = vmatmul.bf16.gmra.mxu0 %v3198
    %v3221 = vpop.f32.mrf.mxu0
    %v3222 = vadd.f32 0.0, %v3221
    %v3223 = vpop.f32.mrf.mxu0
    %3224 = vdwg.mxu0
    %3225 = vmatpush.bf16.msra.mxu0 %v1071
    %3226 = vmatpush.bf16.msra.mxu0 %v1067
    %3227 = vmatpush.bf16.msra.mxu0 %v1063
    %3228 = vmatpush.bf16.msra.mxu0 %v1059
    %3229 = vmatpush.bf16.msra.mxu0 %v1055
    %3230 = vmatpush.bf16.msra.mxu0 %v1051
    %3231 = vmatpush.bf16.msra.mxu0 %v1047
    %3232 = vmatpush.bf16.msra.mxu0 %v1043
    %3233 = vmatmul.bf16.gmra.mxu0 %v3198
    %v3234 = vpop.f32.mrf.mxu0
    %v3235 = vadd.f32 0.0, %v3234
    %v3236 = vpop.f32.mrf.mxu0
    %3237 = vdwg.mxu0
    %3238 = vmatpush.bf16.msra.mxu0 %v1072
    %3239 = vmatpush.bf16.msra.mxu0 %v1068
    %3240 = vmatpush.bf16.msra.mxu0 %v1064
    %3241 = vmatpush.bf16.msra.mxu0 %v1060
    %3242 = vmatpush.bf16.msra.mxu0 %v1056
    %3243 = vmatpush.bf16.msra.mxu0 %v1052
    %3244 = vmatpush.bf16.msra.mxu0 %v1048
    %3245 = vmatpush.bf16.msra.mxu0 %v1044
    %3246 = vmatmul.bf16.gmra.mxu0 %v3198
    %v3247 = vpop.f32.mrf.mxu0
    %v3248 = vadd.f32 0.0, %v3247
    %v3249 = vpop.f32.mrf.mxu0
    %3250 = vdwg.mxu0
    %v3251 = vadd.f32 %v3194, %v3209
    %v3252 = vadd.f32 %v3195, %v3222
    %v3253 = vadd.f32 %v3196, %v3235
    %v3254 = vadd.f32 %v3197, %v3248
    %v3255 = vld [vmem:[#allocation3] sm:$0xff]
    %v3256 = vld [vmem:[#allocation3 + $0x8] sm:$0xff]
    %v3257 = vunpack.c.l.bf16 %v3255
    %v3258 = vunpack.c.h.bf16 %v3255
    %v3259 = vunpack.c.l.bf16 %v3256
    %v3260 = vunpack.c.h.bf16 %v3256
    %v3261 = vadd.f32 %v3257, %v1169
    %v3262 = vadd.f32 %v3258, %v1170
    %v3263 = vadd.f32 %v3259, %v1171
    %v3264 = vadd.f32 %v3260, %v1172
    %v3265 = vpack.c.bf16 %v3185, %v3185
    %3266 = vmatpush.bf16.msra.mxu0 %v1306
    %3267 = vmatpush.bf16.msra.mxu0 %v1302
    %3268 = vmatpush.bf16.msra.mxu0 %v1298
    %3269 = vmatpush.bf16.msra.mxu0 %v1294
    %3270 = vmatpush.bf16.msra.mxu0 %v1290
    %3271 = vmatpush.bf16.msra.mxu0 %v1286
    %3272 = vmatpush.bf16.msra.mxu0 %v1282
    %3273 = vmatpush.bf16.msra.mxu0 %v1278
    %3274 = vmatmul.bf16.gmra.mxu0 %v3265
    %v3275 = vpop.f32.mrf.mxu0
    %v3276 = vadd.f32 0.0, %v3275
    %v3277 = vpop.f32.mrf.mxu0
    %3278 = vdwg.mxu0
    %3279 = vmatpush.bf16.msra.mxu0 %v1307
    %3280 = vmatpush.bf16.msra.mxu0 %v1303
    %3281 = vmatpush.bf16.msra.mxu0 %v1299
    %3282 = vmatpush.bf16.msra.mxu0 %v1295
    %3283 = vmatpush.bf16.msra.mxu0 %v1291
    %3284 = vmatpush.bf16.msra.mxu0 %v1287
    %3285 = vmatpush.bf16.msra.mxu0 %v1283
    %3286 = vmatpush.bf16.msra.mxu0 %v1279
    %3287 = vmatmul.bf16.gmra.mxu0 %v3265
    %v3288 = vpop.f32.mrf.mxu0
    %v3289 = vadd.f32 0.0, %v3288
    %v3290 = vpop.f32.mrf.mxu0
    %3291 = vdwg.mxu0
    %3292 = vmatpush.bf16.msra.mxu0 %v1308
    %3293 = vmatpush.bf16.msra.mxu0 %v1304
    %3294 = vmatpush.bf16.msra.mxu0 %v1300
    %3295 = vmatpush.bf16.msra.mxu0 %v1296
    %3296 = vmatpush.bf16.msra.mxu0 %v1292
    %3297 = vmatpush.bf16.msra.mxu0 %v1288
    %3298 = vmatpush.bf16.msra.mxu0 %v1284
    %3299 = vmatpush.bf16.msra.mxu0 %v1280
    %3300 = vmatmul.bf16.gmra.mxu0 %v3265
    %v3301 = vpop.f32.mrf.mxu0
    %v3302 = vadd.f32 0.0, %v3301
    %v3303 = vpop.f32.mrf.mxu0
    %3304 = vdwg.mxu0
    %3305 = vmatpush.bf16.msra.mxu0 %v1309
    %3306 = vmatpush.bf16.msra.mxu0 %v1305
    %3307 = vmatpush.bf16.msra.mxu0 %v1301
    %3308 = vmatpush.bf16.msra.mxu0 %v1297
    %3309 = vmatpush.bf16.msra.mxu0 %v1293
    %3310 = vmatpush.bf16.msra.mxu0 %v1289
    %3311 = vmatpush.bf16.msra.mxu0 %v1285
    %3312 = vmatpush.bf16.msra.mxu0 %v1281
    %3313 = vmatmul.bf16.gmra.mxu0 %v3265
    %v3314 = vpop.f32.mrf.mxu0
    %v3315 = vadd.f32 0.0, %v3314
    %v3316 = vpop.f32.mrf.mxu0
    %3317 = vdwg.mxu0
    %v3318 = vadd.f32 %v3261, %v3276
    %v3319 = vadd.f32 %v3262, %v3289
    %v3320 = vadd.f32 %v3263, %v3302
    %v3321 = vadd.f32 %v3264, %v3315
    %v3322 = vxor.u32 %v3251, 2147483648
    %v3323 = vmul.f32 %v3322, 1.442695
    %v3324 = vpow.pop %v3323
    %v3325 = vadd.f32 %v3324, 1.0
    %v3326 = vrcp.pop %v3325
    %v3327 = vmul.f32 %v3325, %v3326
    %v3328 = vsub.f32 1.0, %v3327
    %v3329 = vmul.f32 %v3326, %v3328
    %v3330 = vadd.f32 %v3326, %v3329
    %vm3331 = vweird.f32 %v3325
    %vm3332 = vweird.f32 %v3326
    %vm3333 = vmor %vm3331, %vm3332
    %v3334 = vsel %vm3333, %v3326, %v3330
    %v3335 = vand.u32 2147483647, %v3325
    %vm3336 = vcmp.eq.f32.partialorder %v3335, 8.507059e+37
    %v3337 = vand.u32 %v3325, 2147483648
    %v3338 = vor.u32 1.1754944e-38, %v3337
    %v3339 = vsel %vm3336, %v3338, %v3334
    %v3340 = vmul.f32 1.0, %v3339
    %v3341 = vxor.u32 %v3252, 2147483648
    %v3342 = vmul.f32 %v3341, 1.442695
    %v3343 = vpow.pop %v3342
    %v3344 = vadd.f32 %v3343, 1.0
    %v3345 = vrcp.pop %v3344
    %v3346 = vmul.f32 %v3344, %v3345
    %v3347 = vsub.f32 1.0, %v3346
    %v3348 = vmul.f32 %v3345, %v3347
    %v3349 = vadd.f32 %v3345, %v3348
    %vm3350 = vweird.f32 %v3344
    %vm3351 = vweird.f32 %v3345
    %vm3352 = vmor %vm3350, %vm3351
    %v3353 = vsel %vm3352, %v3345, %v3349
    %v3354 = vand.u32 2147483647, %v3344
    %vm3355 = vcmp.eq.f32.partialorder %v3354, 8.507059e+37
    %v3356 = vand.u32 %v3344, 2147483648
    %v3357 = vor.u32 1.1754944e-38, %v3356
    %v3358 = vsel %vm3355, %v3357, %v3353
    %v3359 = vmul.f32 1.0, %v3358
    %v3360 = vtanh.pop %v3253
    %v3361 = vxor.u32 %v3254, 2147483648
    %v3362 = vmul.f32 %v3361, 1.442695
    %v3363 = vpow.pop %v3362
    %v3364 = vadd.f32 %v3363, 1.0
    %v3365 = vrcp.pop %v3364
    %v3366 = vmul.f32 %v3364, %v3365
    %v3367 = vsub.f32 1.0, %v3366
    %v3368 = vmul.f32 %v3365, %v3367
    %v3369 = vadd.f32 %v3365, %v3368
    %vm3370 = vweird.f32 %v3364
    %vm3371 = vweird.f32 %v3365
    %vm3372 = vmor %vm3370, %vm3371
    %v3373 = vsel %vm3372, %v3365, %v3369
    %v3374 = vand.u32 2147483647, %v3364
    %vm3375 = vcmp.eq.f32.partialorder %v3374, 8.507059e+37
    %v3376 = vand.u32 %v3364, 2147483648
    %v3377 = vor.u32 1.1754944e-38, %v3376
    %v3378 = vsel %vm3375, %v3377, %v3373
    %v3379 = vmul.f32 1.0, %v3378
    %v3380 = vmul.f32 %v3359, %v3184
    %v3381 = vmul.f32 %v3340, %v3360
    %v3382 = vadd.f32 %v3380, %v3381
    %v3383 = vtanh.pop %v3382
    %v3384 = vmul.f32 %v3379, %v3383
    %v3385 = vxor.u32 %v3318, 2147483648
    %v3386 = vmul.f32 %v3385, 1.442695
    %v3387 = vpow.pop %v3386
    %v3388 = vadd.f32 %v3387, 1.0
    %v3389 = vrcp.pop %v3388
    %v3390 = vmul.f32 %v3388, %v3389
    %v3391 = vsub.f32 1.0, %v3390
    %v3392 = vmul.f32 %v3389, %v3391
    %v3393 = vadd.f32 %v3389, %v3392
    %vm3394 = vweird.f32 %v3388
    %vm3395 = vweird.f32 %v3389
    %vm3396 = vmor %vm3394, %vm3395
    %v3397 = vsel %vm3396, %v3389, %v3393
    %v3398 = vand.u32 2147483647, %v3388
    %vm3399 = vcmp.eq.f32.partialorder %v3398, 8.507059e+37
    %v3400 = vand.u32 %v3388, 2147483648
    %v3401 = vor.u32 1.1754944e-38, %v3400
    %v3402 = vsel %vm3399, %v3401, %v3397
    %v3403 = vmul.f32 1.0, %v3402
    %v3404 = vxor.u32 %v3319, 2147483648
    %v3405 = vmul.f32 %v3404, 1.442695
    %v3406 = vpow.pop %v3405
    %v3407 = vadd.f32 %v3406, 1.0
    %v3408 = vrcp.pop %v3407
    %v3409 = vmul.f32 %v3407, %v3408
    %v3410 = vsub.f32 1.0, %v3409
    %v3411 = vmul.f32 %v3408, %v3410
    %v3412 = vadd.f32 %v3408, %v3411
    %vm3413 = vweird.f32 %v3407
    %vm3414 = vweird.f32 %v3408
    %vm3415 = vmor %vm3413, %vm3414
    %v3416 = vsel %vm3415, %v3408, %v3412
    %v3417 = vand.u32 2147483647, %v3407
    %vm3418 = vcmp.eq.f32.partialorder %v3417, 8.507059e+37
    %v3419 = vand.u32 %v3407, 2147483648
    %v3420 = vor.u32 1.1754944e-38, %v3419
    %v3421 = vsel %vm3418, %v3420, %v3416
    %v3422 = vmul.f32 1.0, %v3421
    %v3423 = vtanh.pop %v3320
    %v3424 = vxor.u32 %v3321, 2147483648
    %v3425 = vmul.f32 %v3424, 1.442695
    %v3426 = vpow.pop %v3425
    %v3427 = vadd.f32 %v3426, 1.0
    %v3428 = vrcp.pop %v3427
    %v3429 = vmul.f32 %v3427, %v3428
    %v3430 = vsub.f32 1.0, %v3429
    %v3431 = vmul.f32 %v3428, %v3430
    %v3432 = vadd.f32 %v3428, %v3431
    %vm3433 = vweird.f32 %v3427
    %vm3434 = vweird.f32 %v3428
    %vm3435 = vmor %vm3433, %vm3434
    %v3436 = vsel %vm3435, %v3428, %v3432
    %v3437 = vand.u32 2147483647, %v3427
    %vm3438 = vcmp.eq.f32.partialorder %v3437, 8.507059e+37
    %v3439 = vand.u32 %v3427, 2147483648
    %v3440 = vor.u32 1.1754944e-38, %v3439
    %v3441 = vsel %vm3438, %v3440, %v3436
    %v3442 = vmul.f32 1.0, %v3441
    %v3443 = vmul.f32 %v3422, %v3186
    %v3444 = vmul.f32 %v3403, %v3423
    %v3445 = vadd.f32 %v3443, %v3444
    %v3446 = vtanh.pop %v3445
    %v3447 = vmul.f32 %v3442, %v3446
    %v3448 = vsel %vm1525, %v3384, 0.0
    %v3449 = vpack.c.bf16 %v3448, %v3448
    %s3450 = scalar_lea.vmem [#allocation16], 28
    %3451 = vst [vmem:[%s3450] sm:$0xf] %v3449
    %v3452 = vsel %vm1524, %v3447, 0.0
    %v3453 = vpack.c.bf16 %v3452, %v3452
    %3454 = vst [vmem:[#allocation17] sm:$0xf] %v3453
    // Predicated region
    $region58: #{tpu_custom_call.1} parent=1 // pred_check
      _
    $region59: #{tpu_custom_call.1} parent=1 // pred_check_branch
      %3456 = sbr.rel (0) target = $region61
    $region60: #{tpu_custom_call.1} parent=1 // pred_region
      %3458 = vsyncadd [#allocation6], 0
      %s3459 = sshll.u32 [#allocation16], 4
      %s3460 = int_to_ptr.vmem [resolvable:$true] %s3459
      %s3461 = sshll.u32 %s7, 4
      %s3462 = int_to_ptr.hbm [resolvable:$true] %s3461
      %3467 = dma.vmem_to_hbm [thread:$0]  %s3460, 512, %s3462, [#allocation6], 64, 64, 4
    $region61: #{tpu_custom_call.1} parent=1 // pred_fallthru
      _
    // Predicated region
    $region62: #{tpu_custom_call.1} parent=1 // pred_check
      _
    $region63: #{tpu_custom_call.1} parent=1 // pred_check_branch
      %3469 = sbr.rel (0) target = $region65
    $region64: #{tpu_custom_call.1} parent=1 // pred_region
      %3471 = vsyncadd [#allocation18], 0
      %s3472 = sshll.u32 [#allocation17], 4
      %s3473 = int_to_ptr.vmem [resolvable:$true] %s3472
      %s3474 = sshll.u32 %s8, 4
      %s3475 = int_to_ptr.hbm [resolvable:$true] %s3474
      %3480 = dma.vmem_to_hbm [thread:$0]  %s3473, 512, %s3475, [#allocation18], 64, 64, 4
    $region65: #{tpu_custom_call.1} parent=1 // pred_fallthru
      _
    // Predicated region
    $region66: #{tpu_custom_call.1} parent=1 // pred_check
      _
    $region67: #{tpu_custom_call.1} parent=1 // pred_check_branch
      %3482 = sbr.rel (0) target = $region69
    $region68: #{tpu_custom_call.1} parent=1 // pred_region
      %3484 = dma.done [#allocation6], 512
    $region69: #{tpu_custom_call.1} parent=1 // pred_fallthru
      _
    // Predicated region
    $region70: #{tpu_custom_call.1} parent=1 // pred_check
      _
    $region71: #{tpu_custom_call.1} parent=1 // pred_check_branch
      %3486 = sbr.rel (0) target = $region73
    $region72: #{tpu_custom_call.1} parent=1 // pred_region
      %3488 = dma.done [#allocation18], 512
    $region73: #{tpu_custom_call.1} parent=1 // pred_fallthru
      _
    %3489 = vsyncpa [#allocation5], 1
    %3490 = vsyncpa [#allocation8], 1
    %3491 = vsyncpa [#allocation11], 1
    %3492 = vsyncpa [#allocation14], 1
    %3493 = vsyncpa [#allocation6], 1
    %3494 = vsyncpa [#allocation18], 1

</llo_original>
